<compile_context>
chip_gen: v7x
topology: tpu7x:2x2x1
jax: 0.10.0
libtpu: 0.0.40
codegen_flags: <defaults>
</compile_context>

<pallas_src>
import functools

import jax
import jax.numpy as jnp
from jax import lax
from jax.experimental import pallas as pl
from jax.experimental.pallas import tpu as pltpu

EPS = 1e-5                      # nn.InstanceNorm2d default eps
INV_SQRT2 = 0.7071067811865476  # 1/sqrt(2) for exact (erf) GELU
LANE = 128


def _round_up(a, b):
    return (a + b - 1) // b * b


def conv_transpose_block_kernel(x_ref, mask_ref, w_ref, b_ref, o_ref, xg_ref,
                                *, K, Wp, m_out, hw):
    # x_ref:    (S_in, Cip) f32  zero-padded NHWC-flat activations of one image
    # mask_ref: (S_in, 1)   f32  1.0 on the original HxW positions, 0.0 elsewhere
    # w_ref:    (K*K, Cip, Cop)  flipped ConvTranspose weight (compute dtype)
    # b_ref:    (1, Cop)    f32
    # o_ref:    (m_out, Cop)     lane-dense output slab (row-major over Hout x Wp)
    # xg_ref:   (S_in, Cip) VMEM scratch (compute dtype)
    x = x_ref[...].astype(jnp.float32)
    mask = mask_ref[...]

    # --- InstanceNorm2d (affine=False, biased variance, eps=1e-5) ---
    # Pad positions are exactly zero, so plain sums over the padded buffer equal
    # sums over the valid HxW region.  Two-pass centered variance (no cancellation).
    inv_hw = 1.0 / hw
    mean = jnp.sum(x, axis=0, keepdims=True) * inv_hw            # (1, Cip)
    d = (x - mean) * mask                                         # centered, 0 in pad
    var = jnp.sum(d * d, axis=0, keepdims=True) * inv_hw          # (1, Cip)
    xn = d * lax.rsqrt(var + EPS)

    # --- exact GELU (erf-based, matches F.gelu default); GELU(0)=0 keeps pad zero ---
    xg = 0.5 * xn * (1.0 + lax.erf(xn * INV_SQRT2))

    # Single lane-dense store; cast to the matmul dtype (bf16 path) right here.
    xg_ref[...] = xg.astype(xg_ref.dtype)

    # --- ConvTranspose2d (stride=1, padding=0) as a direct convolution ---
    # out_wide[i*Wp + j, co] = b[co] + sum_{kh,kw} xpad[(i+kh)*Wp + (j+kw), :] @ w[kh,kw]
    # Each tap is a contiguous shifted sublane-slice read feeding one accumulating
    # MXU matmul (contraction = Cip); no im2col is ever materialized.
    acc = None
    for kh in range(K):
        for kw in range(K):
            off = kh * Wp + kw
            xs = xg_ref[pl.ds(off, m_out), :]                     # (m_out, Cip)
            part = jnp.dot(xs, w_ref[kh * K + kw],
                           preferred_element_type=jnp.float32)    # (m_out, Cop) f32
            acc = part if acc is None else acc + part
    o_ref[...] = (acc + b_ref[...]).astype(o_ref.dtype)


def conv_transpose_block(x, weight, bias, *, kernel_size=3, stride=1,
                         use_bf16_matmul=False):
    """Forward pass of ConvTransposeBlock.

    x:      (N, C_in, H, W)      float32, NCHW (PyTorch layout)
    weight: (C_in, C_out, K, K)  PyTorch ConvTranspose2d weight layout
    bias:   (C_out,)
    """
    # TODO(synk): stride > 1 (zero-insertion upsampling) not implemented; the
    # module default stride=1 is what is reproduced here.
    assert stride == 1, "only stride=1 is implemented"
    N, C_in, H, W = x.shape
    K = kernel_size
    C_out = weight.shape[1]
    Hout, Wout = H + K - 1, W + K - 1
    Hp, Wp = H + 2 * (K - 1), W + 2 * (K - 1)

    # Lane-dense channel padding; output rows padded to full sublanes.
    Cip = _round_up(C_in, LANE)
    Cop = _round_up(C_out, LANE)
    m_out = _round_up(Hout * Wp, 8)                     # output rows per image
    s_img = Hp * Wp
    s_in = _round_up((K - 1) * Wp + (K - 1) + m_out, 8)  # covers max shifted read

    compute_dtype = jnp.bfloat16 if use_bf16_matmul else jnp.float32

    # --- wrapper-side layout plumbing (all in HBM via XLA) ---
    # NHWC, spatial zero-pad by K-1 on every side, channel pad to Cip, flatten
    # spatial row-major, pad the flat tail with zeros up to s_in.
    x_nhwc = jnp.transpose(x, (0, 2, 3, 1)).astype(jnp.float32)
    x_pad = jnp.pad(x_nhwc, ((0, 0), (K - 1, K - 1), (K - 1, K - 1),
                             (0, Cip - C_in)))
    x_flat = x_pad.reshape(N, s_img, Cip)
    x_flat = jnp.pad(x_flat, ((0, 0), (0, s_in - s_img), (0, 0)))

    # Valid-region mask (1 inside the original HxW window of the padded grid).
    mask2d = jnp.zeros((Hp, Wp), jnp.float32)
    mask2d = mask2d.at[K - 1:K - 1 + H, K - 1:K - 1 + W].set(1.0)
    mask = jnp.pad(mask2d.reshape(s_img), (0, s_in - s_img)).reshape(s_in, 1)

    # Direct-conv weight repack: w_dc[kh, kw, ci, co] = weight[ci, co, K-1-kh, K-1-kw],
    # zero-padded to (Cip, Cop), pre-cast to the matmul dtype.
    w_dc = jnp.transpose(weight[:, :, ::-1, ::-1], (2, 3, 0, 1))   # (K,K,C_in,C_out)
    w_dc = jnp.pad(w_dc, ((0, 0), (0, 0), (0, Cip - C_in), (0, Cop - C_out)))
    w_dc = w_dc.reshape(K * K, Cip, Cop).astype(compute_dtype)
    b2 = jnp.pad(bias.astype(jnp.float32), (0, Cop - C_out)).reshape(1, Cop)

    kernel = functools.partial(conv_transpose_block_kernel,
                               K=K, Wp=Wp, m_out=m_out, hw=float(H * W))

    # TODO(synk): for very large images add a spatial (P) tile with a halo so the
    # per-step activation/output blocks stay small even on v7x's 64 MiB VMEM.
    out_flat = pl.pallas_call(
        kernel,
        out_shape=jax.ShapeDtypeStruct((N, m_out, Cop), x.dtype),
        grid=(N,),
        in_specs=[
            pl.BlockSpec((None, s_in, Cip), lambda n: (n, 0, 0)),
            pl.BlockSpec((s_in, 1), lambda n: (0, 0)),
            pl.BlockSpec((K * K, Cip, Cop), lambda n: (0, 0, 0)),
            pl.BlockSpec((1, Cop), lambda n: (0, 0)),
        ],
        out_specs=pl.BlockSpec((None, m_out, Cop), lambda n: (n, 0, 0)),
        scratch_shapes=[pltpu.VMEM((s_in, Cip), compute_dtype)],
        compiler_params=pltpu.CompilerParams(
            dimension_semantics=("parallel",),
            vmem_limit_bytes=48 * 1024 * 1024,
        ),
    )(x_flat, mask, w_dc, b2)

    # Drop padded rows/channels/columns and return NCHW.
    out = out_flat[:, :Hout * Wp, :C_out].reshape(N, Hout, Wp, C_out)
    out = out[:, :, :Wout, :]
    return jnp.transpose(out, (0, 3, 1, 2))


def _reference(x, weight, bias, K):
    # Pure-JAX reference: InstanceNorm2d -> exact GELU -> ConvTranspose2d (stride=1).
    N, C_in, H, W = x.shape
    C_out = weight.shape[1]
    mean = jnp.mean(x, axis=(2, 3), keepdims=True)
    var = jnp.mean(jnp.square(x - mean), axis=(2, 3), keepdims=True)
    xn = (x - mean) * lax.rsqrt(var + EPS)
    xg = 0.5 * xn * (1.0 + lax.erf(xn * INV_SQRT2))
    out = jnp.zeros((N, C_out, H + K - 1, W + K - 1), jnp.float32)
    for kh in range(K):
        for kw in range(K):
            contrib = jnp.einsum("ncij,co->noij", xg, weight[:, :, kh, kw])
            out = out.at[:, :, kh:kh + H, kw:kw + W].add(contrib)
    return out + bias.reshape(1, C_out, 1, 1)


if __name__ == "__main__":
    key = jax.random.PRNGKey(0)
    kx, kw_, kb = jax.random.split(key, 3)

    N, C_in, C_out, H, W, K = 2, 4, 8, 16, 16, 3

    x = jax.random.normal(kx, (N, C_in, H, W), dtype=jnp.float32)

    # Deterministic parameter init (shapes match nn.ConvTranspose2d(C_in, C_out, K)).
    fan = C_in * K * K
    bound = 1.0 / (fan ** 0.5)
    weight = jax.random.uniform(kw_, (C_in, C_out, K, K), jnp.float32, -bound, bound)
    bias = jax.random.uniform(kb, (C_out,), jnp.float32, -bound, bound)

    out = conv_transpose_block(x, weight, bias, kernel_size=K, stride=1)
    out = jax.block_until_ready(out)

    assert out.shape == (N, C_out, H + K - 1, W + K - 1), out.shape
    assert out.dtype == jnp.float32
    assert bool(jnp.all(jnp.isfinite(out)))

    ref = _reference(x, weight, bias, K)
    assert bool(jnp.allclose(out, ref, atol=1e-3, rtol=1e-3)), \
        float(jnp.max(jnp.abs(out - ref)))

    # bf16 MXU path (recommended for production on v5e/v6e/v7x); looser tolerance.
    out_bf16 = conv_transpose_block(x, weight, bias, kernel_size=K, stride=1,
                                    use_bf16_matmul=True)
    out_bf16 = jax.block_until_ready(out_bf16)
    assert bool(jnp.all(jnp.isfinite(out_bf16)))
    assert bool(jnp.allclose(out_bf16, ref, atol=1e-1, rtol=5e-2)), \
        float(jnp.max(jnp.abs(out_bf16 - ref)))

    print("KERNEL_OK")
</pallas_src>

<mosaic_0001>
module attributes {stable_mosaic.version = 11 : i64} {
  func.func @conv_transpose_block_kernel(%arg0: i32, %arg1: memref<1x408x128xf32, #tpu.memory_space<vmem>>, %arg2: memref<408x1xf32, #tpu.memory_space<vmem>>, %arg3: memref<9x128x128xf32, #tpu.memory_space<vmem>>, %arg4: memref<1x128xf32, #tpu.memory_space<vmem>>, %arg5: memref<1x360x128xf32, #tpu.memory_space<vmem>>, %arg6: memref<408x128xf32, #tpu.memory_space<vmem>>) attributes {dimension_semantics = [#tpu.dimension_semantics<parallel>], iteration_bounds = array<i64: 2>, scalar_prefetch = 0 : i64, scratch_operands = 1 : i64, tpu.core_type = #tpu.core_type<tc>, window_params = [{transform_indices = @transform_0, window_bounds = array<i64: 1, 408, 128>}, {pipeline_mode = #tpu.pipeline_mode<synchronous>, transform_indices = @transform_1, window_bounds = array<i64: 408, 1>}, {pipeline_mode = #tpu.pipeline_mode<synchronous>, transform_indices = @transform_2, window_bounds = array<i64: 9, 128, 128>}, {pipeline_mode = #tpu.pipeline_mode<synchronous>, transform_indices = @transform_3, window_bounds = array<i64: 1, 128>}, {transform_indices = @transform_4, window_bounds = array<i64: 1, 360, 128>}]} {
    %c0 = arith.constant 0 : index
    %c0_0 = arith.constant 0 : index
    %c0_1 = arith.constant 0 : index
    %0 = vector.load %arg1[%c0, %c0_0, %c0_1] : memref<1x408x128xf32, #tpu.memory_space<vmem>>, vector<1x408x128xf32>
    %1 = vector.shape_cast %0 : vector<1x408x128xf32> to vector<408x128xf32>
    %c0_2 = arith.constant 0 : index
    %c0_3 = arith.constant 0 : index
    %2 = vector.load %arg2[%c0_2, %c0_3] : memref<408x1xf32, #tpu.memory_space<vmem>>, vector<408x1xf32>
    %cst = arith.constant dense<0.000000e+00> : vector<128xf32>
    %3 = vector.multi_reduction <add>, %1, %cst [0] : vector<408x128xf32> to vector<128xf32>
    %4 = vector.shape_cast %3 : vector<128xf32> to vector<1x128xf32>
    %cst_4 = arith.constant 3.906250e-03 : f32
    %5 = vector.broadcast %cst_4 : f32 to vector<1x128xf32>
    %6 = arith.mulf %4, %5 : vector<1x128xf32>
    %7 = vector.broadcast %6 : vector<1x128xf32> to vector<408x128xf32>
    %8 = arith.subf %1, %7 : vector<408x128xf32>
    %9 = vector.broadcast %2 : vector<408x1xf32> to vector<408x128xf32>
    %10 = arith.mulf %8, %9 : vector<408x128xf32>
    %11 = arith.mulf %10, %10 : vector<408x128xf32>
    %cst_5 = arith.constant dense<0.000000e+00> : vector<128xf32>
    %12 = vector.multi_reduction <add>, %11, %cst_5 [0] : vector<408x128xf32> to vector<128xf32>
    %13 = vector.shape_cast %12 : vector<128xf32> to vector<1x128xf32>
    %cst_6 = arith.constant 3.906250e-03 : f32
    %14 = vector.broadcast %cst_6 : f32 to vector<1x128xf32>
    %15 = arith.mulf %13, %14 : vector<1x128xf32>
    %cst_7 = arith.constant 9.99999974E-6 : f32
    %16 = vector.broadcast %cst_7 : f32 to vector<1x128xf32>
    %17 = arith.addf %15, %16 : vector<1x128xf32>
    %18 = math.rsqrt %17 : vector<1x128xf32>
    %19 = vector.broadcast %18 : vector<1x128xf32> to vector<408x128xf32>
    %20 = arith.mulf %10, %19 : vector<408x128xf32>
    %cst_8 = arith.constant 5.000000e-01 : f32
    %21 = vector.broadcast %cst_8 : f32 to vector<408x128xf32>
    %22 = arith.mulf %21, %20 : vector<408x128xf32>
    %cst_9 = arith.constant 0.707106769 : f32
    %23 = vector.broadcast %cst_9 : f32 to vector<408x128xf32>
    %24 = arith.mulf %20, %23 : vector<408x128xf32>
    %25 = math.erf %24 : vector<408x128xf32>
    %cst_10 = arith.constant 1.000000e+00 : f32
    %26 = vector.broadcast %cst_10 : f32 to vector<408x128xf32>
    %27 = arith.addf %26, %25 : vector<408x128xf32>
    %28 = arith.mulf %22, %27 : vector<408x128xf32>
    %c0_11 = arith.constant 0 : index
    %c0_12 = arith.constant 0 : index
    %29 = vector.load %arg6[%c0_11, %c0_12] : memref<408x128xf32, #tpu.memory_space<vmem>>, vector<408x128xf32>
    tpu.vector_store %arg6[%c0_11, %c0_12], %28 {strides = array<i32>} : memref<408x128xf32, #tpu.memory_space<vmem>>, vector<408x128xf32>,
    %c0_13 = arith.constant 0 : index
    %c0_14 = arith.constant 0 : index
    %30 = vector.load %arg6[%c0_13, %c0_14] : memref<408x128xf32, #tpu.memory_space<vmem>>, vector<360x128xf32>
    %c0_15 = arith.constant 0 : index
    %c0_16 = arith.constant 0 : index
    %c0_17 = arith.constant 0 : index
    %31 = vector.load %arg3[%c0_15, %c0_16, %c0_17] : memref<9x128x128xf32, #tpu.memory_space<vmem>>, vector<1x128x128xf32>
    %32 = vector.shape_cast %31 : vector<1x128x128xf32> to vector<128x128xf32>
    %cst_18 = arith.constant dense<0.000000e+00> : vector<360x128xf32>
    %33 = tpu.matmul %30, %32, %cst_18 {dimension_numbers = #tpu.dot_dimension_numbers<[1], [0], [0], [1], [0, 0, 1, 1], [], []>} : vector<360x128xf32>, vector<128x128xf32>, vector<360x128xf32> -> vector<360x128xf32>
    %c1 = arith.constant 1 : index
    %c0_19 = arith.constant 0 : index
    %34 = vector.load %arg6[%c1, %c0_19] : memref<408x128xf32, #tpu.memory_space<vmem>>, vector<360x128xf32>
    %c1_20 = arith.constant 1 : index
    %c0_21 = arith.constant 0 : index
    %c0_22 = arith.constant 0 : index
    %35 = vector.load %arg3[%c1_20, %c0_21, %c0_22] : memref<9x128x128xf32, #tpu.memory_space<vmem>>, vector<1x128x128xf32>
    %36 = vector.shape_cast %35 : vector<1x128x128xf32> to vector<128x128xf32>
    %cst_23 = arith.constant dense<0.000000e+00> : vector<360x128xf32>
    %37 = tpu.matmul %34, %36, %cst_23 {dimension_numbers = #tpu.dot_dimension_numbers<[1], [0], [0], [1], [0, 0, 1, 1], [], []>} : vector<360x128xf32>, vector<128x128xf32>, vector<360x128xf32> -> vector<360x128xf32>
    %38 = arith.addf %33, %37 : vector<360x128xf32>
    %c2 = arith.constant 2 : index
    %c0_24 = arith.constant 0 : index
    %39 = vector.load %arg6[%c2, %c0_24] : memref<408x128xf32, #tpu.memory_space<vmem>>, vector<360x128xf32>
    %c2_25 = arith.constant 2 : index
    %c0_26 = arith.constant 0 : index
    %c0_27 = arith.constant 0 : index
    %40 = vector.load %arg3[%c2_25, %c0_26, %c0_27] : memref<9x128x128xf32, #tpu.memory_space<vmem>>, vector<1x128x128xf32>
    %41 = vector.shape_cast %40 : vector<1x128x128xf32> to vector<128x128xf32>
    %cst_28 = arith.constant dense<0.000000e+00> : vector<360x128xf32>
    %42 = tpu.matmul %39, %41, %cst_28 {dimension_numbers = #tpu.dot_dimension_numbers<[1], [0], [0], [1], [0, 0, 1, 1], [], []>} : vector<360x128xf32>, vector<128x128xf32>, vector<360x128xf32> -> vector<360x128xf32>
    %43 = arith.addf %38, %42 : vector<360x128xf32>
    %c20 = arith.constant 20 : index
    %c0_29 = arith.constant 0 : index
    %44 = vector.load %arg6[%c20, %c0_29] : memref<408x128xf32, #tpu.memory_space<vmem>>, vector<360x128xf32>
    %c3 = arith.constant 3 : index
    %c0_30 = arith.constant 0 : index
    %c0_31 = arith.constant 0 : index
    %45 = vector.load %arg3[%c3, %c0_30, %c0_31] : memref<9x128x128xf32, #tpu.memory_space<vmem>>, vector<1x128x128xf32>
    %46 = vector.shape_cast %45 : vector<1x128x128xf32> to vector<128x128xf32>
    %cst_32 = arith.constant dense<0.000000e+00> : vector<360x128xf32>
    %47 = tpu.matmul %44, %46, %cst_32 {dimension_numbers = #tpu.dot_dimension_numbers<[1], [0], [0], [1], [0, 0, 1, 1], [], []>} : vector<360x128xf32>, vector<128x128xf32>, vector<360x128xf32> -> vector<360x128xf32>
    %48 = arith.addf %43, %47 : vector<360x128xf32>
    %c21 = arith.constant 21 : index
    %c0_33 = arith.constant 0 : index
    %49 = vector.load %arg6[%c21, %c0_33] : memref<408x128xf32, #tpu.memory_space<vmem>>, vector<360x128xf32>
    %c4 = arith.constant 4 : index
    %c0_34 = arith.constant 0 : index
    %c0_35 = arith.constant 0 : index
    %50 = vector.load %arg3[%c4, %c0_34, %c0_35] : memref<9x128x128xf32, #tpu.memory_space<vmem>>, vector<1x128x128xf32>
    %51 = vector.shape_cast %50 : vector<1x128x128xf32> to vector<128x128xf32>
    %cst_36 = arith.constant dense<0.000000e+00> : vector<360x128xf32>
    %52 = tpu.matmul %49, %51, %cst_36 {dimension_numbers = #tpu.dot_dimension_numbers<[1], [0], [0], [1], [0, 0, 1, 1], [], []>} : vector<360x128xf32>, vector<128x128xf32>, vector<360x128xf32> -> vector<360x128xf32>
    %53 = arith.addf %48, %52 : vector<360x128xf32>
    %c22 = arith.constant 22 : index
    %c0_37 = arith.constant 0 : index
    %54 = vector.load %arg6[%c22, %c0_37] : memref<408x128xf32, #tpu.memory_space<vmem>>, vector<360x128xf32>
    %c5 = arith.constant 5 : index
    %c0_38 = arith.constant 0 : index
    %c0_39 = arith.constant 0 : index
    %55 = vector.load %arg3[%c5, %c0_38, %c0_39] : memref<9x128x128xf32, #tpu.memory_space<vmem>>, vector<1x128x128xf32>
    %56 = vector.shape_cast %55 : vector<1x128x128xf32> to vector<128x128xf32>
    %cst_40 = arith.constant dense<0.000000e+00> : vector<360x128xf32>
    %57 = tpu.matmul %54, %56, %cst_40 {dimension_numbers = #tpu.dot_dimension_numbers<[1], [0], [0], [1], [0, 0, 1, 1], [], []>} : vector<360x128xf32>, vector<128x128xf32>, vector<360x128xf32> -> vector<360x128xf32>
    %58 = arith.addf %53, %57 : vector<360x128xf32>
    %c40 = arith.constant 40 : index
    %c0_41 = arith.constant 0 : index
    %59 = vector.load %arg6[%c40, %c0_41] : memref<408x128xf32, #tpu.memory_space<vmem>>, vector<360x128xf32>
    %c6 = arith.constant 6 : index
    %c0_42 = arith.constant 0 : index
    %c0_43 = arith.constant 0 : index
    %60 = vector.load %arg3[%c6, %c0_42, %c0_43] : memref<9x128x128xf32, #tpu.memory_space<vmem>>, vector<1x128x128xf32>
    %61 = vector.shape_cast %60 : vector<1x128x128xf32> to vector<128x128xf32>
    %cst_44 = arith.constant dense<0.000000e+00> : vector<360x128xf32>
    %62 = tpu.matmul %59, %61, %cst_44 {dimension_numbers = #tpu.dot_dimension_numbers<[1], [0], [0], [1], [0, 0, 1, 1], [], []>} : vector<360x128xf32>, vector<128x128xf32>, vector<360x128xf32> -> vector<360x128xf32>
    %63 = arith.addf %58, %62 : vector<360x128xf32>
    %c41 = arith.constant 41 : index
    %c0_45 = arith.constant 0 : index
    %64 = vector.load %arg6[%c41, %c0_45] : memref<408x128xf32, #tpu.memory_space<vmem>>, vector<360x128xf32>
    %c7 = arith.constant 7 : index
    %c0_46 = arith.constant 0 : index
    %c0_47 = arith.constant 0 : index
    %65 = vector.load %arg3[%c7, %c0_46, %c0_47] : memref<9x128x128xf32, #tpu.memory_space<vmem>>, vector<1x128x128xf32>
    %66 = vector.shape_cast %65 : vector<1x128x128xf32> to vector<128x128xf32>
    %cst_48 = arith.constant dense<0.000000e+00> : vector<360x128xf32>
    %67 = tpu.matmul %64, %66, %cst_48 {dimension_numbers = #tpu.dot_dimension_numbers<[1], [0], [0], [1], [0, 0, 1, 1], [], []>} : vector<360x128xf32>, vector<128x128xf32>, vector<360x128xf32> -> vector<360x128xf32>
    %68 = arith.addf %63, %67 : vector<360x128xf32>
    %c42 = arith.constant 42 : index
    %c0_49 = arith.constant 0 : index
    %69 = vector.load %arg6[%c42, %c0_49] : memref<408x128xf32, #tpu.memory_space<vmem>>, vector<360x128xf32>
    %c8 = arith.constant 8 : index
    %c0_50 = arith.constant 0 : index
    %c0_51 = arith.constant 0 : index
    %70 = vector.load %arg3[%c8, %c0_50, %c0_51] : memref<9x128x128xf32, #tpu.memory_space<vmem>>, vector<1x128x128xf32>
    %71 = vector.shape_cast %70 : vector<1x128x128xf32> to vector<128x128xf32>
    %cst_52 = arith.constant dense<0.000000e+00> : vector<360x128xf32>
    %72 = tpu.matmul %69, %71, %cst_52 {dimension_numbers = #tpu.dot_dimension_numbers<[1], [0], [0], [1], [0, 0, 1, 1], [], []>} : vector<360x128xf32>, vector<128x128xf32>, vector<360x128xf32> -> vector<360x128xf32>
    %73 = arith.addf %68, %72 : vector<360x128xf32>
    %c0_53 = arith.constant 0 : index
    %c0_54 = arith.constant 0 : index
    %74 = vector.load %arg4[%c0_53, %c0_54] : memref<1x128xf32, #tpu.memory_space<vmem>>, vector<1x128xf32>
    %75 = vector.broadcast %74 : vector<1x128xf32> to vector<360x128xf32>
    %76 = arith.addf %73, %75 : vector<360x128xf32>
    %c0_55 = arith.constant 0 : index
    %c0_56 = arith.constant 0 : index
    %c0_57 = arith.constant 0 : index
    %77 = vector.load %arg5[%c0_55, %c0_56, %c0_57] : memref<1x360x128xf32, #tpu.memory_space<vmem>>, vector<1x360x128xf32>
    %78 = vector.shape_cast %77 : vector<1x360x128xf32> to vector<360x128xf32>
    %79 = vector.shape_cast %76 : vector<360x128xf32> to vector<1x360x128xf32>
    tpu.vector_store %arg5[%c0_55, %c0_56, %c0_57], %79 {strides = array<i32>} : memref<1x360x128xf32, #tpu.memory_space<vmem>>, vector<1x360x128xf32>,
    return
  }
  func.func @transform_0(%arg0: i32) -> (i32, i32, i32) {
    %c0_i32 = arith.constant 0 : i32
    %c0_i32_0 = arith.constant 0 : i32
    %c0_i32_1 = arith.constant 0 : i32
    return %arg0, %c0_i32, %c0_i32_0 : i32, i32, i32
  }
  func.func @transform_1(%arg0: i32) -> (i32, i32) {
    %c0_i32 = arith.constant 0 : i32
    %c0_i32_0 = arith.constant 0 : i32
    %c0_i32_1 = arith.constant 0 : i32
    return %c0_i32, %c0_i32_0 : i32, i32
  }
  func.func @transform_2(%arg0: i32) -> (i32, i32, i32) {
    %c0_i32 = arith.constant 0 : i32
    %c0_i32_0 = arith.constant 0 : i32
    %c0_i32_1 = arith.constant 0 : i32
    %c0_i32_2 = arith.constant 0 : i32
    return %c0_i32, %c0_i32_0, %c0_i32_1 : i32, i32, i32
  }
  func.func @transform_3(%arg0: i32) -> (i32, i32) {
    %c0_i32 = arith.constant 0 : i32
    %c0_i32_0 = arith.constant 0 : i32
    %c0_i32_1 = arith.constant 0 : i32
    return %c0_i32, %c0_i32_0 : i32, i32
  }
  func.func @transform_4(%arg0: i32) -> (i32, i32, i32) {
    %c0_i32 = arith.constant 0 : i32
    %c0_i32_0 = arith.constant 0 : i32
    %c0_i32_1 = arith.constant 0 : i32
    return %arg0, %c0_i32, %c0_i32_0 : i32, i32, i32
  }
}

</mosaic_0001>

<llo_original>
// kernel: tpu_custom_call.1
$region0: #{tpu_custom_call.1}
  #allocation0 [shape = 'u32[]', space=smem, size = 0x4, offset = 0x4, fixed_abs, tag = 'smem constant byte address 0x4 - core index']
  #allocation1 [shape = 'u32[144,128]{1,0:T(1,128)}', space=vmem, size = 0x12000, scoped, tag = 'internal scratch']
  #allocation2 [shape = 'f32[408,128]{1,0:T(8,128)}', space=vmem, size = 0x33000, scoped, tag = 'scratch operand']
  %s0 = inlined_call_operand.hbm [shape: f32[2,408,128], index: 0, kind: input, shape index: {}]
  %s1 = inlined_call_operand.vmem [shape: f32[408,1], index: 1, kind: input, shape index: {}]
  %s2 = inlined_call_operand.hbm [shape: f32[9,128,128], index: 2, kind: input, shape index: {}]
  %s3 = inlined_call_operand.vmem [shape: f32[1,128], index: 3, kind: input, shape index: {}]
  %s4 = inlined_call_operand.hbm [shape: f32[2,360,128], index: 4, kind: output, shape index: {}]
  %s5 = sld [smem:[#allocation0]]
  $region57: #{tpu_custom_call.1} parent=0
    _
  %s7 = ssub.s32 1, %s5
  %s8 = scalar_select 0, %s7, %s5
  $region1: #{tpu_custom_call.1} parent=0
    #allocation3 [shape = 'u8[417792]{0}', space=vmem, size = 0x66000, scoped, tag = 'input window, operand 0']
    #allocation4 [shape = 's32[2]{0}', space=sflag, size = 0x8, scoped, tag = 'scoped memory for tpu_custom_call.1']
    #allocation5 [shape = 's32[2]{0}', space=sflag, size = 0x8, scoped, tag = 'scoped memory for tpu_custom_call.1']
    #allocation6 [shape = 'u8[589824]{0}', space=vmem, size = 0x90000, scoped, tag = 'input window, operand 2, single buffered']
    #allocation7 [shape = 's32[1]{0}', space=sflag, size = 0x4, scoped, tag = 'scoped memory for tpu_custom_call.1']
    #allocation8 [shape = 'u8[368640]{0}', space=vmem, size = 0x5a000, scoped, tag = 'output window, operand 0']
    %9 = vsyncpa [#allocation4], 0
    %s10 = scalar_lea.sflag [#allocation4], 1
    %11 = vsyncpa %s10, 0
    %12 = vsyncpa [#allocation7], 0
    %13 = vsyncpa [#allocation5], 0
    %s14 = scalar_lea.sflag [#allocation5], 1
    %15 = vsyncpa %s14, 0
    loop: start=0, step=1, limit=4
    $region2: #{tpu_custom_call.1} parent=1 // loop_pre_header
      _
    $region3: #{tpu_custom_call.1} parent=1 // loop_header
      %s17 = sphi 0, %s21
      %p18 = scmp.ge.s32.totalorder %s17, 4
      %s27 = sphi 0, %s29
      %s30 = sphi 0, %s27
      %s31 = sphi 0, %s30
      %s47 = sphi 0, %s31
      %s51 = sphi 0, %s51
      %s53 = sphi 0, %s51
      %s54 = sphi 0, %s53
      %s68 = sphi 0, %s54
      %s72 = sphi 0, %s72
      %s74 = sphi 0, %s72
      %s75 = sphi 0, %s74
      %s89 = sphi 0, %s75
      %s93 = sphi 0, %s93
      %s95 = sphi 0, %s93
      %s96 = sphi 0, %s95
      %s110 = sphi 0, %s96
      %s116 = sphi 0, %s118
      %s119 = sphi 0, %s116
      %s120 = sphi 0, %s119
      %s136 = sphi 0, %s120
    $region4: #{tpu_custom_call.1} parent=1 // loop_header_branch
      %20 = sbr.rel (%p18) target = $region8
    $region5: #{tpu_custom_call.1} parent=1 // loop_body
      %s22 = ssub.s32 %s17, 1
      %s23 = ssub.s32 %s17, 2
      %s24 = sadd.s32 %s17, 1
      %s25 = ssub.s32 %s17, %s24
      %p26 = scmp.eq.s32.totalorder %s25, 0
      %s28 = sadd.s32 %s27, 1
      %s29 = scalar_select %p26, %s27, %s28
      %p32 = pneg %p26
      %p33 = scmp.eq.s32.totalorder %s17, 1
      %p34 = por %p32, %p33
      %p35 = scmp.ne.s32.totalorder %s27, %s30
      %p36 = scmp.eq.s32.totalorder %s17, 0
      %p37 = por %p35, %p36
      %p38 = scmp.ne.s32.totalorder %s27, %s30
      %p39 = scmp.eq.s32.totalorder %s22, 1
      %p40 = por %p38, %p39
      %p41 = scmp.ne.s32.totalorder %s30, %s31
      %p42 = scmp.eq.s32.totalorder %s22, 0
      %p43 = por %p41, %p42
      %p44 = scmp.ne.s32.totalorder %s30, %s31
      %p45 = scmp.eq.s32.totalorder %s23, 1
      %p46 = por %p44, %p45
      %p48 = scmp.ne.s32.totalorder %s31, %s47
      %p49 = scmp.eq.s32.totalorder %s23, 0
      %p50 = por %p48, %p49
      %s52 = sadd.s32 %s51, 1
      %p55 = scmp.eq.s32.totalorder %s17, 1
      %p56 = scmp.ne.s32.totalorder %s51, %s53
      %p57 = scmp.eq.s32.totalorder %s17, 0
      %p58 = por %p56, %p57
      %p59 = scmp.ne.s32.totalorder %s51, %s53
      %p60 = scmp.eq.s32.totalorder %s22, 1
      %p61 = por %p59, %p60
      %p62 = scmp.ne.s32.totalorder %s53, %s54
      %p63 = scmp.eq.s32.totalorder %s22, 0
      %p64 = por %p62, %p63
      %p65 = scmp.ne.s32.totalorder %s53, %s54
      %p66 = scmp.eq.s32.totalorder %s23, 1
      %p67 = por %p65, %p66
      %p69 = scmp.ne.s32.totalorder %s54, %s68
      %p70 = scmp.eq.s32.totalorder %s23, 0
      %p71 = por %p69, %p70
      %s73 = sadd.s32 %s72, 1
      %p76 = scmp.eq.s32.totalorder %s17, 1
      %p77 = scmp.ne.s32.totalorder %s72, %s74
      %p78 = scmp.eq.s32.totalorder %s17, 0
      %p79 = por %p77, %p78
      %p80 = scmp.ne.s32.totalorder %s72, %s74
      %p81 = scmp.eq.s32.totalorder %s22, 1
      %p82 = por %p80, %p81
      %p83 = scmp.ne.s32.totalorder %s74, %s75
      %p84 = scmp.eq.s32.totalorder %s22, 0
      %p85 = por %p83, %p84
      %p86 = scmp.ne.s32.totalorder %s74, %s75
      %p87 = scmp.eq.s32.totalorder %s23, 1
      %p88 = por %p86, %p87
      %p90 = scmp.ne.s32.totalorder %s75, %s89
      %p91 = scmp.eq.s32.totalorder %s23, 0
      %p92 = por %p90, %p91
      %s94 = sadd.s32 %s93, 1
      %p97 = scmp.eq.s32.totalorder %s17, 1
      %p98 = scmp.ne.s32.totalorder %s93, %s95
      %p99 = scmp.eq.s32.totalorder %s17, 0
      %p100 = por %p98, %p99
      %p101 = scmp.ne.s32.totalorder %s93, %s95
      %p102 = scmp.eq.s32.totalorder %s22, 1
      %p103 = por %p101, %p102
      %p104 = scmp.ne.s32.totalorder %s95, %s96
      %p105 = scmp.eq.s32.totalorder %s22, 0
      %p106 = por %p104, %p105
      %p107 = scmp.ne.s32.totalorder %s95, %s96
      %p108 = scmp.eq.s32.totalorder %s23, 1
      %p109 = por %p107, %p108
      %p111 = scmp.ne.s32.totalorder %s96, %s110
      %p112 = scmp.eq.s32.totalorder %s23, 0
      %p113 = por %p111, %p112
      %s114 = ssub.s32 %s17, %s24
      %p115 = scmp.eq.s32.totalorder %s114, 0
      %s117 = sadd.s32 %s116, 1
      %s118 = scalar_select %p115, %s116, %s117
      %p121 = pneg %p115
      %p122 = scmp.eq.s32.totalorder %s17, 1
      %p123 = por %p121, %p122
      %p124 = scmp.ne.s32.totalorder %s116, %s119
      %p125 = scmp.eq.s32.totalorder %s17, 0
      %p126 = por %p124, %p125
      %p127 = scmp.ne.s32.totalorder %s116, %s119
      %p128 = scmp.eq.s32.totalorder %s22, 1
      %p129 = por %p127, %p128
      %p130 = scmp.ne.s32.totalorder %s119, %s120
      %p131 = scmp.eq.s32.totalorder %s22, 0
      %p132 = por %p130, %p131
      %p133 = scmp.ne.s32.totalorder %s119, %s120
      %p134 = scmp.eq.s32.totalorder %s23, 1
      %p135 = por %p133, %p134
      %p137 = scmp.ne.s32.totalorder %s120, %s136
      %p138 = scmp.eq.s32.totalorder %s23, 0
      %p139 = por %p137, %p138
      %p140 = scmp.le.s32.totalorder 1, %s17
      %p141 = scmp.lt.s32.totalorder %s17, 3
      %p142 = pnand %p140, %p141
      %p143 = pneg %p142
      // Predicated region
      $region9: #{tpu_custom_call.1} parent=5 // pred_check
        _
      $region10: #{tpu_custom_call.1} parent=5 // pred_check_branch
        %145 = sbr.rel (%p142) target = $region12
      $region11: #{tpu_custom_call.1} parent=5 // pred_region
        %s146 = ssub.s32 %s17, 1
        // Predicated region
        $region13: #{tpu_custom_call.1} parent=11 // pred_check
          %p147 = pneg %p64
        $region14: #{tpu_custom_call.1} parent=11 // pred_check_branch
          %149 = sbr.rel (%p147) target = $region16
        $region15: #{tpu_custom_call.1} parent=11 // pred_region
          _
        $region16: #{tpu_custom_call.1} parent=11 // pred_fallthru
          _
        // Predicated region
        $region17: #{tpu_custom_call.1} parent=11 // pred_check
          %p150 = pneg %p85
        $region18: #{tpu_custom_call.1} parent=11 // pred_check_branch
          %152 = sbr.rel (%p150) target = $region20
        $region19: #{tpu_custom_call.1} parent=11 // pred_region
          %s154 = ssub.s32 18432, 18432
          %155 = vsyncadd [#allocation7], %s154
          %s156 = sshll.u32 [#allocation6], 4
          %s157 = int_to_ptr.vmem [resolvable:$true] %s156
          %162 = dma.hbm_to_vmem [thread:$0]  %s2, 18432, %s157, [#allocation7], 128, 128, 8
        $region20: #{tpu_custom_call.1} parent=11 // pred_fallthru
          _
        // Predicated region
        $region21: #{tpu_custom_call.1} parent=11 // pred_check
          %p163 = pneg %p106
        $region22: #{tpu_custom_call.1} parent=11 // pred_check_branch
          %165 = sbr.rel (%p163) target = $region24
        $region23: #{tpu_custom_call.1} parent=11 // pred_region
          _
        $region24: #{tpu_custom_call.1} parent=11 // pred_fallthru
          _
      $region12: #{tpu_custom_call.1} parent=5 // pred_fallthru
        _
      %p166 = scmp.lt.s32.totalorder %s17, 2
      // Predicated region
      $region25: #{tpu_custom_call.1} parent=5 // pred_check
        %p167 = pneg %p166
      $region26: #{tpu_custom_call.1} parent=5 // pred_check_branch
        %169 = sbr.rel (%p167) target = $region28
      $region27: #{tpu_custom_call.1} parent=5 // pred_region
        // Predicated region
        $region29: #{tpu_custom_call.1} parent=27 // pred_check
          %p170 = pneg %p37
        $region30: #{tpu_custom_call.1} parent=27 // pred_check_branch
          %172 = sbr.rel (%p170) target = $region32
        $region31: #{tpu_custom_call.1} parent=27 // pred_region
          %s173 = sand.u32 %s27, 1
          %s174 = scalar_lea.sflag [#allocation4], %s173
          %s175 = sand.u32 %s27, 1
          %s176 = smul.addr %s175, 408
          %s177 = scalar_lea.vmem [#allocation3], %s176
          %s179 = ssub.s32 6528, 6528
          %180 = vsyncadd %s174, %s179
          %s181 = smul.addr %s17, 51
          %s182 = smul.addr %s181, 128
          %s183 = scalar_lea.hbm %s0, %s182
          %s184 = sshll.u32 %s177, 4
          %s185 = int_to_ptr.vmem [resolvable:$true] %s184
          %190 = dma.hbm_to_vmem [thread:$0]  %s183, 6528, %s185, %s174, 128, 128, 8
        $region32: #{tpu_custom_call.1} parent=27 // pred_fallthru
          _
      $region28: #{tpu_custom_call.1} parent=5 // pred_fallthru
        _
      %p191 = scmp.le.s32.totalorder 1, %s17
      %p192 = scmp.lt.s32.totalorder %s17, 3
      %p193 = pnand %p191, %p192
      %p194 = pneg %p193
      // Predicated region
      $region33: #{tpu_custom_call.1} parent=5 // pred_check
        _
      $region34: #{tpu_custom_call.1} parent=5 // pred_check_branch
        %196 = sbr.rel (%p193) target = $region36
      $region35: #{tpu_custom_call.1} parent=5 // pred_region
        %s197 = ssub.s32 %s17, 1
        %s198 = sand.u32 %s30, 1
        %s199 = scalar_lea.sflag [#allocation4], %s198
        %s200 = sand.u32 %s30, 1
        %s201 = smul.addr %s200, 408
        %s202 = scalar_lea.vmem [#allocation3], %s201
        // Predicated region
        $region37: #{tpu_custom_call.1} parent=35 // pred_check
          %p203 = pneg %p43
        $region38: #{tpu_custom_call.1} parent=35 // pred_check_branch
          %205 = sbr.rel (%p203) target = $region40
        $region39: #{tpu_custom_call.1} parent=35 // pred_region
          %206 = dma.done %s199, 6528
        $region40: #{tpu_custom_call.1} parent=35 // pred_fallthru
          _
        // Predicated region
        $region41: #{tpu_custom_call.1} parent=35 // pred_check
          %p207 = pneg %p85
        $region42: #{tpu_custom_call.1} parent=35 // pred_check_branch
          %209 = sbr.rel (%p207) target = $region44
        $region43: #{tpu_custom_call.1} parent=35 // pred_region
          %210 = dma.done [#allocation7], 18432
        $region44: #{tpu_custom_call.1} parent=35 // pred_fallthru
          _
        %s211 = sand.u32 %s30, 1
        %s212 = scalar_lea.sflag [#allocation4], %s211
        %s213 = sand.u32 %s30, 1
        %s214 = smul.addr %s213, 408
        %s215 = scalar_lea.vmem [#allocation3], %s214
        %p216 = pneg %p43
        %p217 = pneg %p40
        %p218 = pneg %p64
        %p219 = pneg %p61
        %p220 = pneg %p85
        %p221 = pneg %p82
        %p222 = pneg %p106
        %p223 = pneg %p103
        %p224 = pneg %p132
        %p225 = pneg %p129
        %s226 = sand.u32 %s119, 1
        %s227 = scalar_lea.sflag [#allocation5], %s226
        %s228 = sand.u32 %s119, 1
        %s229 = smul.addr %s228, 360
        %s230 = scalar_lea.vmem [#allocation8], %s229
        %v231 = vld [vmem:[%s202] sm:$0xff]
        %v232 = vld [vmem:[%s202 + $0x8] sm:$0xff]
        %v233 = vld [vmem:[%s202 + $0x10] sm:$0xff]
        %v234 = vld [vmem:[%s202 + $0x18] sm:$0xff]
        %v235 = vld [vmem:[%s202 + $0x20] sm:$0xff]
        %v236 = vld [vmem:[%s202 + $0x28] sm:$0xff]
        %v237 = vld [vmem:[%s202 + $0x30] sm:$0xff]
        %v238 = vld [vmem:[%s202 + $0x38] sm:$0xff]
        %v239 = vld [vmem:[%s202 + $0x40] sm:$0xff]
        %v240 = vld [vmem:[%s202 + $0x48] sm:$0xff]
        %v241 = vld [vmem:[%s202 + $0x50] sm:$0xff]
        %v242 = vld [vmem:[%s202 + $0x58] sm:$0xff]
        %v243 = vld [vmem:[%s202 + $0x60] sm:$0xff]
        %v244 = vld [vmem:[%s202 + $0x68] sm:$0xff]
        %v245 = vld [vmem:[%s202 + $0x70] sm:$0xff]
        %v246 = vld [vmem:[%s202 + $0x78] sm:$0xff]
        %v247 = vld [vmem:[%s202 + $0x80] sm:$0xff]
        %v248 = vld [vmem:[%s202 + $0x88] sm:$0xff]
        %v249 = vld [vmem:[%s202 + $0x90] sm:$0xff]
        %v250 = vld [vmem:[%s202 + $0x98] sm:$0xff]
        %v251 = vld [vmem:[%s202 + $0xa0] sm:$0xff]
        %v252 = vld [vmem:[%s202 + $0xa8] sm:$0xff]
        %v253 = vld [vmem:[%s202 + $0xb0] sm:$0xff]
        %v254 = vld [vmem:[%s202 + $0xb8] sm:$0xff]
        %v255 = vld [vmem:[%s202 + $0xc0] sm:$0xff]
        %v256 = vld [vmem:[%s202 + $0xc8] sm:$0xff]
        %v257 = vld [vmem:[%s202 + $0xd0] sm:$0xff]
        %v258 = vld [vmem:[%s202 + $0xd8] sm:$0xff]
        %v259 = vld [vmem:[%s202 + $0xe0] sm:$0xff]
        %v260 = vld [vmem:[%s202 + $0xe8] sm:$0xff]
        %v261 = vld [vmem:[%s202 + $0xf0] sm:$0xff]
        %v262 = vld [vmem:[%s202 + $0xf8] sm:$0xff]
        %v263 = vld [vmem:[%s202 + $0x100] sm:$0xff]
        %v264 = vld [vmem:[%s202 + $0x108] sm:$0xff]
        %v265 = vld [vmem:[%s202 + $0x110] sm:$0xff]
        %v266 = vld [vmem:[%s202 + $0x118] sm:$0xff]
        %v267 = vld [vmem:[%s202 + $0x120] sm:$0xff]
        %v268 = vld [vmem:[%s202 + $0x128] sm:$0xff]
        %v269 = vld [vmem:[%s202 + $0x130] sm:$0xff]
        %v270 = vld [vmem:[%s202 + $0x138] sm:$0xff]
        %v271 = vld [vmem:[%s202 + $0x140] sm:$0xff]
        %v272 = vld [vmem:[%s202 + $0x148] sm:$0xff]
        %v273 = vld [vmem:[%s202 + $0x150] sm:$0xff]
        %v274 = vld [vmem:[%s202 + $0x158] sm:$0xff]
        %v275 = vld [vmem:[%s202 + $0x160] sm:$0xff]
        %v276 = vld [vmem:[%s202 + $0x168] sm:$0xff]
        %v277 = vld [vmem:[%s202 + $0x170] sm:$0xff]
        %v278 = vld [vmem:[%s202 + $0x178] sm:$0xff]
        %v279 = vld [vmem:[%s202 + $0x180] sm:$0xff]
        %v280 = vld [vmem:[%s202 + $0x188] sm:$0xff]
        %v281 = vld [vmem:[%s202 + $0x190] sm:$0xff]
        %v282 = vld [vmem:[%s1] sm:$0xff]
        %v283 = vld [vmem:[%s1 + $0x8] sm:$0xff]
        %v284 = vld [vmem:[%s1 + $0x10] sm:$0xff]
        %v285 = vld [vmem:[%s1 + $0x18] sm:$0xff]
        %v286 = vld [vmem:[%s1 + $0x20] sm:$0xff]
        %v287 = vld [vmem:[%s1 + $0x28] sm:$0xff]
        %v288 = vld [vmem:[%s1 + $0x30] sm:$0xff]
        %v289 = vld [vmem:[%s1 + $0x38] sm:$0xff]
        %v290 = vld [vmem:[%s1 + $0x40] sm:$0xff]
        %v291 = vld [vmem:[%s1 + $0x48] sm:$0xff]
        %v292 = vld [vmem:[%s1 + $0x50] sm:$0xff]
        %v293 = vld [vmem:[%s1 + $0x58] sm:$0xff]
        %v294 = vld [vmem:[%s1 + $0x60] sm:$0xff]
        %v295 = vld [vmem:[%s1 + $0x68] sm:$0xff]
        %v296 = vld [vmem:[%s1 + $0x70] sm:$0xff]
        %v297 = vld [vmem:[%s1 + $0x78] sm:$0xff]
        %v298 = vld [vmem:[%s1 + $0x80] sm:$0xff]
        %v299 = vld [vmem:[%s1 + $0x88] sm:$0xff]
        %v300 = vld [vmem:[%s1 + $0x90] sm:$0xff]
        %v301 = vld [vmem:[%s1 + $0x98] sm:$0xff]
        %v302 = vld [vmem:[%s1 + $0xa0] sm:$0xff]
        %v303 = vld [vmem:[%s1 + $0xa8] sm:$0xff]
        %v304 = vld [vmem:[%s1 + $0xb0] sm:$0xff]
        %v305 = vld [vmem:[%s1 + $0xb8] sm:$0xff]
        %v306 = vld [vmem:[%s1 + $0xc0] sm:$0xff]
        %v307 = vld [vmem:[%s1 + $0xc8] sm:$0xff]
        %v308 = vld [vmem:[%s1 + $0xd0] sm:$0xff]
        %v309 = vld [vmem:[%s1 + $0xd8] sm:$0xff]
        %v310 = vld [vmem:[%s1 + $0xe0] sm:$0xff]
        %v311 = vld [vmem:[%s1 + $0xe8] sm:$0xff]
        %v312 = vld [vmem:[%s1 + $0xf0] sm:$0xff]
        %v313 = vld [vmem:[%s1 + $0xf8] sm:$0xff]
        %v314 = vld [vmem:[%s1 + $0x100] sm:$0xff]
        %v315 = vld [vmem:[%s1 + $0x108] sm:$0xff]
        %v316 = vld [vmem:[%s1 + $0x110] sm:$0xff]
        %v317 = vld [vmem:[%s1 + $0x118] sm:$0xff]
        %v318 = vld [vmem:[%s1 + $0x120] sm:$0xff]
        %v319 = vld [vmem:[%s1 + $0x128] sm:$0xff]
        %v320 = vld [vmem:[%s1 + $0x130] sm:$0xff]
        %v321 = vld [vmem:[%s1 + $0x138] sm:$0xff]
        %v322 = vld [vmem:[%s1 + $0x140] sm:$0xff]
        %v323 = vld [vmem:[%s1 + $0x148] sm:$0xff]
        %v324 = vld [vmem:[%s1 + $0x150] sm:$0xff]
        %v325 = vld [vmem:[%s1 + $0x158] sm:$0xff]
        %v326 = vld [vmem:[%s1 + $0x160] sm:$0xff]
        %v327 = vld [vmem:[%s1 + $0x168] sm:$0xff]
        %v328 = vld [vmem:[%s1 + $0x170] sm:$0xff]
        %v329 = vld [vmem:[%s1 + $0x178] sm:$0xff]
        %v330 = vld [vmem:[%s1 + $0x180] sm:$0xff]
        %v331 = vld [vmem:[%s1 + $0x188] sm:$0xff]
        %v332 = vld [vmem:[%s1 + $0x190] sm:$0xff]
        %v333 = vadd.f32 %v231, %v232
        %v334 = vadd.f32 %v333, %v233
        %v335 = vadd.f32 %v334, %v234
        %v336 = vadd.f32 %v335, %v235
        %v337 = vadd.f32 %v336, %v236
        %v338 = vadd.f32 %v337, %v237
        %v339 = vadd.f32 %v338, %v238
        %v340 = vadd.f32 %v339, %v239
        %v341 = vadd.f32 %v340, %v240
        %v342 = vadd.f32 %v341, %v241
        %v343 = vadd.f32 %v342, %v242
        %v344 = vadd.f32 %v343, %v243
        %v345 = vadd.f32 %v344, %v244
        %v346 = vadd.f32 %v345, %v245
        %v347 = vadd.f32 %v346, %v246
        %v348 = vadd.f32 %v347, %v247
        %v349 = vadd.f32 %v348, %v248
        %v350 = vadd.f32 %v349, %v249
        %v351 = vadd.f32 %v350, %v250
        %v352 = vadd.f32 %v351, %v251
        %v353 = vadd.f32 %v352, %v252
        %v354 = vadd.f32 %v353, %v253
        %v355 = vadd.f32 %v354, %v254
        %v356 = vadd.f32 %v355, %v255
        %v357 = vadd.f32 %v356, %v256
        %v358 = vadd.f32 %v357, %v257
        %v359 = vadd.f32 %v358, %v258
        %v360 = vadd.f32 %v359, %v259
        %v361 = vadd.f32 %v360, %v260
        %v362 = vadd.f32 %v361, %v261
        %v363 = vadd.f32 %v362, %v262
        %v364 = vadd.f32 %v363, %v263
        %v365 = vadd.f32 %v364, %v264
        %v366 = vadd.f32 %v365, %v265
        %v367 = vadd.f32 %v366, %v266
        %v368 = vadd.f32 %v367, %v267
        %v369 = vadd.f32 %v368, %v268
        %v370 = vadd.f32 %v369, %v269
        %v371 = vadd.f32 %v370, %v270
        %v372 = vadd.f32 %v371, %v271
        %v373 = vadd.f32 %v372, %v272
        %v374 = vadd.f32 %v373, %v273
        %v375 = vadd.f32 %v374, %v274
        %v376 = vadd.f32 %v375, %v275
        %v377 = vadd.f32 %v376, %v276
        %v378 = vadd.f32 %v377, %v277
        %v379 = vadd.f32 %v378, %v278
        %v380 = vadd.f32 %v379, %v279
        %v381 = vadd.f32 %v380, %v280
        %v382 = vadd.f32 %v381, %v281
        %v383 = vrot.slane %v382, 4
        %v384 = vadd.f32 %v382, %v383
        %v385 = vrot.slane %v384, 2
        %v386 = vadd.f32 %v384, %v385
        %v387 = vrot.slane %v386, 1
        %v388 = vadd.f32 %v386, %v387
        %v389 = vmul.f32 %v388, 0.00390625
        %v390 = vsub.f32 %v231, %v389
        %v391 = vsub.f32 %v232, %v389
        %v392 = vsub.f32 %v233, %v389
        %v393 = vsub.f32 %v234, %v389
        %v394 = vsub.f32 %v235, %v389
        %v395 = vsub.f32 %v236, %v389
        %v396 = vsub.f32 %v237, %v389
        %v397 = vsub.f32 %v238, %v389
        %v398 = vsub.f32 %v239, %v389
        %v399 = vsub.f32 %v240, %v389
        %v400 = vsub.f32 %v241, %v389
        %v401 = vsub.f32 %v242, %v389
        %v402 = vsub.f32 %v243, %v389
        %v403 = vsub.f32 %v244, %v389
        %v404 = vsub.f32 %v245, %v389
        %v405 = vsub.f32 %v246, %v389
        %v406 = vsub.f32 %v247, %v389
        %v407 = vsub.f32 %v248, %v389
        %v408 = vsub.f32 %v249, %v389
        %v409 = vsub.f32 %v250, %v389
        %v410 = vsub.f32 %v251, %v389
        %v411 = vsub.f32 %v252, %v389
        %v412 = vsub.f32 %v253, %v389
        %v413 = vsub.f32 %v254, %v389
        %v414 = vsub.f32 %v255, %v389
        %v415 = vsub.f32 %v256, %v389
        %v416 = vsub.f32 %v257, %v389
        %v417 = vsub.f32 %v258, %v389
        %v418 = vsub.f32 %v259, %v389
        %v419 = vsub.f32 %v260, %v389
        %v420 = vsub.f32 %v261, %v389
        %v421 = vsub.f32 %v262, %v389
        %v422 = vsub.f32 %v263, %v389
        %v423 = vsub.f32 %v264, %v389
        %v424 = vsub.f32 %v265, %v389
        %v425 = vsub.f32 %v266, %v389
        %v426 = vsub.f32 %v267, %v389
        %v427 = vsub.f32 %v268, %v389
        %v428 = vsub.f32 %v269, %v389
        %v429 = vsub.f32 %v270, %v389
        %v430 = vsub.f32 %v271, %v389
        %v431 = vsub.f32 %v272, %v389
        %v432 = vsub.f32 %v273, %v389
        %v433 = vsub.f32 %v274, %v389
        %v434 = vsub.f32 %v275, %v389
        %v435 = vsub.f32 %v276, %v389
        %v436 = vsub.f32 %v277, %v389
        %v437 = vsub.f32 %v278, %v389
        %v438 = vsub.f32 %v279, %v389
        %v439 = vsub.f32 %v280, %v389
        %v440 = vsub.f32 %v281, %v389
        %442 = vset.pattern.permute.xlu0 0
        %443 = vperm.xlu0 %442, %v282
        %v444 = vpop.permute.xlu0 %443
        %447 = vset.pattern.permute.xlu0 0
        %448 = vperm.xlu0 %447, %v283
        %v449 = vpop.permute.xlu0 %448
        %452 = vset.pattern.permute.xlu0 0
        %453 = vperm.xlu0 %452, %v284
        %v454 = vpop.permute.xlu0 %453
        %457 = vset.pattern.permute.xlu0 0
        %458 = vperm.xlu0 %457, %v285
        %v459 = vpop.permute.xlu0 %458
        %462 = vset.pattern.permute.xlu0 0
        %463 = vperm.xlu0 %462, %v286
        %v464 = vpop.permute.xlu0 %463
        %467 = vset.pattern.permute.xlu0 0
        %468 = vperm.xlu0 %467, %v287
        %v469 = vpop.permute.xlu0 %468
        %472 = vset.pattern.permute.xlu0 0
        %473 = vperm.xlu0 %472, %v288
        %v474 = vpop.permute.xlu0 %473
        %477 = vset.pattern.permute.xlu0 0
        %478 = vperm.xlu0 %477, %v289
        %v479 = vpop.permute.xlu0 %478
        %482 = vset.pattern.permute.xlu0 0
        %483 = vperm.xlu0 %482, %v290
        %v484 = vpop.permute.xlu0 %483
        %487 = vset.pattern.permute.xlu0 0
        %488 = vperm.xlu0 %487, %v291
        %v489 = vpop.permute.xlu0 %488
        %492 = vset.pattern.permute.xlu0 0
        %493 = vperm.xlu0 %492, %v292
        %v494 = vpop.permute.xlu0 %493
        %497 = vset.pattern.permute.xlu0 0
        %498 = vperm.xlu0 %497, %v293
        %v499 = vpop.permute.xlu0 %498
        %502 = vset.pattern.permute.xlu0 0
        %503 = vperm.xlu0 %502, %v294
        %v504 = vpop.permute.xlu0 %503
        %507 = vset.pattern.permute.xlu0 0
        %508 = vperm.xlu0 %507, %v295
        %v509 = vpop.permute.xlu0 %508
        %512 = vset.pattern.permute.xlu0 0
        %513 = vperm.xlu0 %512, %v296
        %v514 = vpop.permute.xlu0 %513
        %517 = vset.pattern.permute.xlu0 0
        %518 = vperm.xlu0 %517, %v297
        %v519 = vpop.permute.xlu0 %518
        %522 = vset.pattern.permute.xlu0 0
        %523 = vperm.xlu0 %522, %v298
        %v524 = vpop.permute.xlu0 %523
        %527 = vset.pattern.permute.xlu0 0
        %528 = vperm.xlu0 %527, %v299
        %v529 = vpop.permute.xlu0 %528
        %532 = vset.pattern.permute.xlu0 0
        %533 = vperm.xlu0 %532, %v300
        %v534 = vpop.permute.xlu0 %533
        %537 = vset.pattern.permute.xlu0 0
        %538 = vperm.xlu0 %537, %v301
        %v539 = vpop.permute.xlu0 %538
        %542 = vset.pattern.permute.xlu0 0
        %543 = vperm.xlu0 %542, %v302
        %v544 = vpop.permute.xlu0 %543
        %547 = vset.pattern.permute.xlu0 0
        %548 = vperm.xlu0 %547, %v303
        %v549 = vpop.permute.xlu0 %548
        %552 = vset.pattern.permute.xlu0 0
        %553 = vperm.xlu0 %552, %v304
        %v554 = vpop.permute.xlu0 %553
        %557 = vset.pattern.permute.xlu0 0
        %558 = vperm.xlu0 %557, %v305
        %v559 = vpop.permute.xlu0 %558
        %562 = vset.pattern.permute.xlu0 0
        %563 = vperm.xlu0 %562, %v306
        %v564 = vpop.permute.xlu0 %563
        %567 = vset.pattern.permute.xlu0 0
        %568 = vperm.xlu0 %567, %v307
        %v569 = vpop.permute.xlu0 %568
        %572 = vset.pattern.permute.xlu0 0
        %573 = vperm.xlu0 %572, %v308
        %v574 = vpop.permute.xlu0 %573
        %577 = vset.pattern.permute.xlu0 0
        %578 = vperm.xlu0 %577, %v309
        %v579 = vpop.permute.xlu0 %578
        %582 = vset.pattern.permute.xlu0 0
        %583 = vperm.xlu0 %582, %v310
        %v584 = vpop.permute.xlu0 %583
        %587 = vset.pattern.permute.xlu0 0
        %588 = vperm.xlu0 %587, %v311
        %v589 = vpop.permute.xlu0 %588
        %592 = vset.pattern.permute.xlu0 0
        %593 = vperm.xlu0 %592, %v312
        %v594 = vpop.permute.xlu0 %593
        %597 = vset.pattern.permute.xlu0 0
        %598 = vperm.xlu0 %597, %v313
        %v599 = vpop.permute.xlu0 %598
        %602 = vset.pattern.permute.xlu0 0
        %603 = vperm.xlu0 %602, %v314
        %v604 = vpop.permute.xlu0 %603
        %607 = vset.pattern.permute.xlu0 0
        %608 = vperm.xlu0 %607, %v315
        %v609 = vpop.permute.xlu0 %608
        %612 = vset.pattern.permute.xlu0 0
        %613 = vperm.xlu0 %612, %v316
        %v614 = vpop.permute.xlu0 %613
        %617 = vset.pattern.permute.xlu0 0
        %618 = vperm.xlu0 %617, %v317
        %v619 = vpop.permute.xlu0 %618
        %622 = vset.pattern.permute.xlu0 0
        %623 = vperm.xlu0 %622, %v318
        %v624 = vpop.permute.xlu0 %623
        %627 = vset.pattern.permute.xlu0 0
        %628 = vperm.xlu0 %627, %v319
        %v629 = vpop.permute.xlu0 %628
        %632 = vset.pattern.permute.xlu0 0
        %633 = vperm.xlu0 %632, %v320
        %v634 = vpop.permute.xlu0 %633
        %637 = vset.pattern.permute.xlu0 0
        %638 = vperm.xlu0 %637, %v321
        %v639 = vpop.permute.xlu0 %638
        %642 = vset.pattern.permute.xlu0 0
        %643 = vperm.xlu0 %642, %v322
        %v644 = vpop.permute.xlu0 %643
        %647 = vset.pattern.permute.xlu0 0
        %648 = vperm.xlu0 %647, %v323
        %v649 = vpop.permute.xlu0 %648
        %652 = vset.pattern.permute.xlu0 0
        %653 = vperm.xlu0 %652, %v324
        %v654 = vpop.permute.xlu0 %653
        %657 = vset.pattern.permute.xlu0 0
        %658 = vperm.xlu0 %657, %v325
        %v659 = vpop.permute.xlu0 %658
        %662 = vset.pattern.permute.xlu0 0
        %663 = vperm.xlu0 %662, %v326
        %v664 = vpop.permute.xlu0 %663
        %667 = vset.pattern.permute.xlu0 0
        %668 = vperm.xlu0 %667, %v327
        %v669 = vpop.permute.xlu0 %668
        %672 = vset.pattern.permute.xlu0 0
        %673 = vperm.xlu0 %672, %v328
        %v674 = vpop.permute.xlu0 %673
        %677 = vset.pattern.permute.xlu0 0
        %678 = vperm.xlu0 %677, %v329
        %v679 = vpop.permute.xlu0 %678
        %682 = vset.pattern.permute.xlu0 0
        %683 = vperm.xlu0 %682, %v330
        %v684 = vpop.permute.xlu0 %683
        %687 = vset.pattern.permute.xlu0 0
        %688 = vperm.xlu0 %687, %v331
        %v689 = vpop.permute.xlu0 %688
        %692 = vset.pattern.permute.xlu0 0
        %693 = vperm.xlu0 %692, %v332
        %v694 = vpop.permute.xlu0 %693
        %v696 = vmul.f32 %v390, %v444
        %v697 = vmul.f32 %v391, %v449
        %v698 = vmul.f32 %v392, %v454
        %v699 = vmul.f32 %v393, %v459
        %v700 = vmul.f32 %v394, %v464
        %v701 = vmul.f32 %v395, %v469
        %v702 = vmul.f32 %v396, %v474
        %v703 = vmul.f32 %v397, %v479
        %v704 = vmul.f32 %v398, %v484
        %v705 = vmul.f32 %v399, %v489
        %v706 = vmul.f32 %v400, %v494
        %v707 = vmul.f32 %v401, %v499
        %v708 = vmul.f32 %v402, %v504
        %v709 = vmul.f32 %v403, %v509
        %v710 = vmul.f32 %v404, %v514
        %v711 = vmul.f32 %v405, %v519
        %v712 = vmul.f32 %v406, %v524
        %v713 = vmul.f32 %v407, %v529
        %v714 = vmul.f32 %v408, %v534
        %v715 = vmul.f32 %v409, %v539
        %v716 = vmul.f32 %v410, %v544
        %v717 = vmul.f32 %v411, %v549
        %v718 = vmul.f32 %v412, %v554
        %v719 = vmul.f32 %v413, %v559
        %v720 = vmul.f32 %v414, %v564
        %v721 = vmul.f32 %v415, %v569
        %v722 = vmul.f32 %v416, %v574
        %v723 = vmul.f32 %v417, %v579
        %v724 = vmul.f32 %v418, %v584
        %v725 = vmul.f32 %v419, %v589
        %v726 = vmul.f32 %v420, %v594
        %v727 = vmul.f32 %v421, %v599
        %v728 = vmul.f32 %v422, %v604
        %v729 = vmul.f32 %v423, %v609
        %v730 = vmul.f32 %v424, %v614
        %v731 = vmul.f32 %v425, %v619
        %v732 = vmul.f32 %v426, %v624
        %v733 = vmul.f32 %v427, %v629
        %v734 = vmul.f32 %v428, %v634
        %v735 = vmul.f32 %v429, %v639
        %v736 = vmul.f32 %v430, %v644
        %v737 = vmul.f32 %v431, %v649
        %v738 = vmul.f32 %v432, %v654
        %v739 = vmul.f32 %v433, %v659
        %v740 = vmul.f32 %v434, %v664
        %v741 = vmul.f32 %v435, %v669
        %v742 = vmul.f32 %v436, %v674
        %v743 = vmul.f32 %v437, %v679
        %v744 = vmul.f32 %v438, %v684
        %v745 = vmul.f32 %v439, %v689
        %v746 = vmul.f32 %v440, %v694
        %v747 = vmul.f32 %v696, %v696
        %v748 = vmul.f32 %v697, %v697
        %v749 = vmul.f32 %v698, %v698
        %v750 = vmul.f32 %v699, %v699
        %v751 = vmul.f32 %v700, %v700
        %v752 = vmul.f32 %v701, %v701
        %v753 = vmul.f32 %v702, %v702
        %v754 = vmul.f32 %v703, %v703
        %v755 = vmul.f32 %v704, %v704
        %v756 = vmul.f32 %v705, %v705
        %v757 = vmul.f32 %v706, %v706
        %v758 = vmul.f32 %v707, %v707
        %v759 = vmul.f32 %v708, %v708
        %v760 = vmul.f32 %v709, %v709
        %v761 = vmul.f32 %v710, %v710
        %v762 = vmul.f32 %v711, %v711
        %v763 = vmul.f32 %v712, %v712
        %v764 = vmul.f32 %v713, %v713
        %v765 = vmul.f32 %v714, %v714
        %v766 = vmul.f32 %v715, %v715
        %v767 = vmul.f32 %v716, %v716
        %v768 = vmul.f32 %v717, %v717
        %v769 = vmul.f32 %v718, %v718
        %v770 = vmul.f32 %v719, %v719
        %v771 = vmul.f32 %v720, %v720
        %v772 = vmul.f32 %v721, %v721
        %v773 = vmul.f32 %v722, %v722
        %v774 = vmul.f32 %v723, %v723
        %v775 = vmul.f32 %v724, %v724
        %v776 = vmul.f32 %v725, %v725
        %v777 = vmul.f32 %v726, %v726
        %v778 = vmul.f32 %v727, %v727
        %v779 = vmul.f32 %v728, %v728
        %v780 = vmul.f32 %v729, %v729
        %v781 = vmul.f32 %v730, %v730
        %v782 = vmul.f32 %v731, %v731
        %v783 = vmul.f32 %v732, %v732
        %v784 = vmul.f32 %v733, %v733
        %v785 = vmul.f32 %v734, %v734
        %v786 = vmul.f32 %v735, %v735
        %v787 = vmul.f32 %v736, %v736
        %v788 = vmul.f32 %v737, %v737
        %v789 = vmul.f32 %v738, %v738
        %v790 = vmul.f32 %v739, %v739
        %v791 = vmul.f32 %v740, %v740
        %v792 = vmul.f32 %v741, %v741
        %v793 = vmul.f32 %v742, %v742
        %v794 = vmul.f32 %v743, %v743
        %v795 = vmul.f32 %v744, %v744
        %v796 = vmul.f32 %v745, %v745
        %v797 = vmul.f32 %v746, %v746
        %v798 = vadd.f32 %v747, %v748
        %v799 = vadd.f32 %v798, %v749
        %v800 = vadd.f32 %v799, %v750
        %v801 = vadd.f32 %v800, %v751
        %v802 = vadd.f32 %v801, %v752
        %v803 = vadd.f32 %v802, %v753
        %v804 = vadd.f32 %v803, %v754
        %v805 = vadd.f32 %v804, %v755
        %v806 = vadd.f32 %v805, %v756
        %v807 = vadd.f32 %v806, %v757
        %v808 = vadd.f32 %v807, %v758
        %v809 = vadd.f32 %v808, %v759
        %v810 = vadd.f32 %v809, %v760
        %v811 = vadd.f32 %v810, %v761
        %v812 = vadd.f32 %v811, %v762
        %v813 = vadd.f32 %v812, %v763
        %v814 = vadd.f32 %v813, %v764
        %v815 = vadd.f32 %v814, %v765
        %v816 = vadd.f32 %v815, %v766
        %v817 = vadd.f32 %v816, %v767
        %v818 = vadd.f32 %v817, %v768
        %v819 = vadd.f32 %v818, %v769
        %v820 = vadd.f32 %v819, %v770
        %v821 = vadd.f32 %v820, %v771
        %v822 = vadd.f32 %v821, %v772
        %v823 = vadd.f32 %v822, %v773
        %v824 = vadd.f32 %v823, %v774
        %v825 = vadd.f32 %v824, %v775
        %v826 = vadd.f32 %v825, %v776
        %v827 = vadd.f32 %v826, %v777
        %v828 = vadd.f32 %v827, %v778
        %v829 = vadd.f32 %v828, %v779
        %v830 = vadd.f32 %v829, %v780
        %v831 = vadd.f32 %v830, %v781
        %v832 = vadd.f32 %v831, %v782
        %v833 = vadd.f32 %v832, %v783
        %v834 = vadd.f32 %v833, %v784
        %v835 = vadd.f32 %v834, %v785
        %v836 = vadd.f32 %v835, %v786
        %v837 = vadd.f32 %v836, %v787
        %v838 = vadd.f32 %v837, %v788
        %v839 = vadd.f32 %v838, %v789
        %v840 = vadd.f32 %v839, %v790
        %v841 = vadd.f32 %v840, %v791
        %v842 = vadd.f32 %v841, %v792
        %v843 = vadd.f32 %v842, %v793
        %v844 = vadd.f32 %v843, %v794
        %v845 = vadd.f32 %v844, %v795
        %v846 = vadd.f32 %v845, %v796
        %v847 = vadd.f32 %v846, %v797
        %v848 = vrot.slane %v847, 4
        %v849 = vadd.f32 %v847, %v848
        %v850 = vrot.slane %v849, 2
        %v851 = vadd.f32 %v849, %v850
        %v852 = vrot.slane %v851, 1
        %v853 = vadd.f32 %v851, %v852
        %v854 = vmul.f32 %v853, 0.00390625
        %v855 = vadd.f32 %v854, 1e-05
        %v856 = vrsqrt.pop %v855
        %v857 = vmul.f32 %v696, %v856
        %v858 = vmul.f32 %v697, %v856
        %v859 = vmul.f32 %v698, %v856
        %v860 = vmul.f32 %v699, %v856
        %v861 = vmul.f32 %v700, %v856
        %v862 = vmul.f32 %v701, %v856
        %v863 = vmul.f32 %v702, %v856
        %v864 = vmul.f32 %v703, %v856
        %v865 = vmul.f32 %v704, %v856
        %v866 = vmul.f32 %v705, %v856
        %v867 = vmul.f32 %v706, %v856
        %v868 = vmul.f32 %v707, %v856
        %v869 = vmul.f32 %v708, %v856
        %v870 = vmul.f32 %v709, %v856
        %v871 = vmul.f32 %v710, %v856
        %v872 = vmul.f32 %v711, %v856
        %v873 = vmul.f32 %v712, %v856
        %v874 = vmul.f32 %v713, %v856
        %v875 = vmul.f32 %v714, %v856
        %v876 = vmul.f32 %v715, %v856
        %v877 = vmul.f32 %v716, %v856
        %v878 = vmul.f32 %v717, %v856
        %v879 = vmul.f32 %v718, %v856
        %v880 = vmul.f32 %v719, %v856
        %v881 = vmul.f32 %v720, %v856
        %v882 = vmul.f32 %v721, %v856
        %v883 = vmul.f32 %v722, %v856
        %v884 = vmul.f32 %v723, %v856
        %v885 = vmul.f32 %v724, %v856
        %v886 = vmul.f32 %v725, %v856
        %v887 = vmul.f32 %v726, %v856
        %v888 = vmul.f32 %v727, %v856
        %v889 = vmul.f32 %v728, %v856
        %v890 = vmul.f32 %v729, %v856
        %v891 = vmul.f32 %v730, %v856
        %v892 = vmul.f32 %v731, %v856
        %v893 = vmul.f32 %v732, %v856
        %v894 = vmul.f32 %v733, %v856
        %v895 = vmul.f32 %v734, %v856
        %v896 = vmul.f32 %v735, %v856
        %v897 = vmul.f32 %v736, %v856
        %v898 = vmul.f32 %v737, %v856
        %v899 = vmul.f32 %v738, %v856
        %v900 = vmul.f32 %v739, %v856
        %v901 = vmul.f32 %v740, %v856
        %v902 = vmul.f32 %v741, %v856
        %v903 = vmul.f32 %v742, %v856
        %v904 = vmul.f32 %v743, %v856
        %v905 = vmul.f32 %v744, %v856
        %v906 = vmul.f32 %v745, %v856
        %v907 = vmul.f32 %v746, %v856
        %v908 = vmul.f32 %v857, 0.5
        %v909 = vmul.f32 %v858, 0.5
        %v910 = vmul.f32 %v859, 0.5
        %v911 = vmul.f32 %v860, 0.5
        %v912 = vmul.f32 %v861, 0.5
        %v913 = vmul.f32 %v862, 0.5
        %v914 = vmul.f32 %v863, 0.5
        %v915 = vmul.f32 %v864, 0.5
        %v916 = vmul.f32 %v865, 0.5
        %v917 = vmul.f32 %v866, 0.5
        %v918 = vmul.f32 %v867, 0.5
        %v919 = vmul.f32 %v868, 0.5
        %v920 = vmul.f32 %v869, 0.5
        %v921 = vmul.f32 %v870, 0.5
        %v922 = vmul.f32 %v871, 0.5
        %v923 = vmul.f32 %v872, 0.5
        %v924 = vmul.f32 %v873, 0.5
        %v925 = vmul.f32 %v874, 0.5
        %v926 = vmul.f32 %v875, 0.5
        %v927 = vmul.f32 %v876, 0.5
        %v928 = vmul.f32 %v877, 0.5
        %v929 = vmul.f32 %v878, 0.5
        %v930 = vmul.f32 %v879, 0.5
        %v931 = vmul.f32 %v880, 0.5
        %v932 = vmul.f32 %v881, 0.5
        %v933 = vmul.f32 %v882, 0.5
        %v934 = vmul.f32 %v883, 0.5
        %v935 = vmul.f32 %v884, 0.5
        %v936 = vmul.f32 %v885, 0.5
        %v937 = vmul.f32 %v886, 0.5
        %v938 = vmul.f32 %v887, 0.5
        %v939 = vmul.f32 %v888, 0.5
        %v940 = vmul.f32 %v889, 0.5
        %v941 = vmul.f32 %v890, 0.5
        %v942 = vmul.f32 %v891, 0.5
        %v943 = vmul.f32 %v892, 0.5
        %v944 = vmul.f32 %v893, 0.5
        %v945 = vmul.f32 %v894, 0.5
        %v946 = vmul.f32 %v895, 0.5
        %v947 = vmul.f32 %v896, 0.5
        %v948 = vmul.f32 %v897, 0.5
        %v949 = vmul.f32 %v898, 0.5
        %v950 = vmul.f32 %v899, 0.5
        %v951 = vmul.f32 %v900, 0.5
        %v952 = vmul.f32 %v901, 0.5
        %v953 = vmul.f32 %v902, 0.5
        %v954 = vmul.f32 %v903, 0.5
        %v955 = vmul.f32 %v904, 0.5
        %v956 = vmul.f32 %v905, 0.5
        %v957 = vmul.f32 %v906, 0.5
        %v958 = vmul.f32 %v907, 0.5
        %v959 = vmul.f32 %v857, 0.70710677
        %v960 = vmul.f32 %v858, 0.70710677
        %v961 = vmul.f32 %v859, 0.70710677
        %v962 = vmul.f32 %v860, 0.70710677
        %v963 = vmul.f32 %v861, 0.70710677
        %v964 = vmul.f32 %v862, 0.70710677
        %v965 = vmul.f32 %v863, 0.70710677
        %v966 = vmul.f32 %v864, 0.70710677
        %v967 = vmul.f32 %v865, 0.70710677
        %v968 = vmul.f32 %v866, 0.70710677
        %v969 = vmul.f32 %v867, 0.70710677
        %v970 = vmul.f32 %v868, 0.70710677
        %v971 = vmul.f32 %v869, 0.70710677
        %v972 = vmul.f32 %v870, 0.70710677
        %v973 = vmul.f32 %v871, 0.70710677
        %v974 = vmul.f32 %v872, 0.70710677
        %v975 = vmul.f32 %v873, 0.70710677
        %v976 = vmul.f32 %v874, 0.70710677
        %v977 = vmul.f32 %v875, 0.70710677
        %v978 = vmul.f32 %v876, 0.70710677
        %v979 = vmul.f32 %v877, 0.70710677
        %v980 = vmul.f32 %v878, 0.70710677
        %v981 = vmul.f32 %v879, 0.70710677
        %v982 = vmul.f32 %v880, 0.70710677
        %v983 = vmul.f32 %v881, 0.70710677
        %v984 = vmul.f32 %v882, 0.70710677
        %v985 = vmul.f32 %v883, 0.70710677
        %v986 = vmul.f32 %v884, 0.70710677
        %v987 = vmul.f32 %v885, 0.70710677
        %v988 = vmul.f32 %v886, 0.70710677
        %v989 = vmul.f32 %v887, 0.70710677
        %v990 = vmul.f32 %v888, 0.70710677
        %v991 = vmul.f32 %v889, 0.70710677
        %v992 = vmul.f32 %v890, 0.70710677
        %v993 = vmul.f32 %v891, 0.70710677
        %v994 = vmul.f32 %v892, 0.70710677
        %v995 = vmul.f32 %v893, 0.70710677
        %v996 = vmul.f32 %v894, 0.70710677
        %v997 = vmul.f32 %v895, 0.70710677
        %v998 = vmul.f32 %v896, 0.70710677
        %v999 = vmul.f32 %v897, 0.70710677
        %v1000 = vmul.f32 %v898, 0.70710677
        %v1001 = vmul.f32 %v899, 0.70710677
        %v1002 = vmul.f32 %v900, 0.70710677
        %v1003 = vmul.f32 %v901, 0.70710677
        %v1004 = vmul.f32 %v902, 0.70710677
        %v1005 = vmul.f32 %v903, 0.70710677
        %v1006 = vmul.f32 %v904, 0.70710677
        %v1007 = vmul.f32 %v905, 0.70710677
        %v1008 = vmul.f32 %v906, 0.70710677
        %v1009 = vmul.f32 %v907, 0.70710677
        %v1010 = verf.f32.pop %v959
        %v1011 = verf.f32.pop %v960
        %v1012 = verf.f32.pop %v961
        %v1013 = verf.f32.pop %v962
        %v1014 = verf.f32.pop %v963
        %v1015 = verf.f32.pop %v964
        %v1016 = verf.f32.pop %v965
        %v1017 = verf.f32.pop %v966
        %v1018 = verf.f32.pop %v967
        %v1019 = verf.f32.pop %v968
        %v1020 = verf.f32.pop %v969
        %v1021 = verf.f32.pop %v970
        %v1022 = verf.f32.pop %v971
        %v1023 = verf.f32.pop %v972
        %v1024 = verf.f32.pop %v973
        %v1025 = verf.f32.pop %v974
        %v1026 = verf.f32.pop %v975
        %v1027 = verf.f32.pop %v976
        %v1028 = verf.f32.pop %v977
        %v1029 = verf.f32.pop %v978
        %v1030 = verf.f32.pop %v979
        %v1031 = verf.f32.pop %v980
        %v1032 = verf.f32.pop %v981
        %v1033 = verf.f32.pop %v982
        %v1034 = verf.f32.pop %v983
        %v1035 = verf.f32.pop %v984
        %v1036 = verf.f32.pop %v985
        %v1037 = verf.f32.pop %v986
        %v1038 = verf.f32.pop %v987
        %v1039 = verf.f32.pop %v988
        %v1040 = verf.f32.pop %v989
        %v1041 = verf.f32.pop %v990
        %v1042 = verf.f32.pop %v991
        %v1043 = verf.f32.pop %v992
        %v1044 = verf.f32.pop %v993
        %v1045 = verf.f32.pop %v994
        %v1046 = verf.f32.pop %v995
        %v1047 = verf.f32.pop %v996
        %v1048 = verf.f32.pop %v997
        %v1049 = verf.f32.pop %v998
        %v1050 = verf.f32.pop %v999
        %v1051 = verf.f32.pop %v1000
        %v1052 = verf.f32.pop %v1001
        %v1053 = verf.f32.pop %v1002
        %v1054 = verf.f32.pop %v1003
        %v1055 = verf.f32.pop %v1004
        %v1056 = verf.f32.pop %v1005
        %v1057 = verf.f32.pop %v1006
        %v1058 = verf.f32.pop %v1007
        %v1059 = verf.f32.pop %v1008
        %v1060 = verf.f32.pop %v1009
        %v1061 = vadd.f32 %v1010, 1.0
        %v1062 = vadd.f32 %v1011, 1.0
        %v1063 = vadd.f32 %v1012, 1.0
        %v1064 = vadd.f32 %v1013, 1.0
        %v1065 = vadd.f32 %v1014, 1.0
        %v1066 = vadd.f32 %v1015, 1.0
        %v1067 = vadd.f32 %v1016, 1.0
        %v1068 = vadd.f32 %v1017, 1.0
        %v1069 = vadd.f32 %v1018, 1.0
        %v1070 = vadd.f32 %v1019, 1.0
        %v1071 = vadd.f32 %v1020, 1.0
        %v1072 = vadd.f32 %v1021, 1.0
        %v1073 = vadd.f32 %v1022, 1.0
        %v1074 = vadd.f32 %v1023, 1.0
        %v1075 = vadd.f32 %v1024, 1.0
        %v1076 = vadd.f32 %v1025, 1.0
        %v1077 = vadd.f32 %v1026, 1.0
        %v1078 = vadd.f32 %v1027, 1.0
        %v1079 = vadd.f32 %v1028, 1.0
        %v1080 = vadd.f32 %v1029, 1.0
        %v1081 = vadd.f32 %v1030, 1.0
        %v1082 = vadd.f32 %v1031, 1.0
        %v1083 = vadd.f32 %v1032, 1.0
        %v1084 = vadd.f32 %v1033, 1.0
        %v1085 = vadd.f32 %v1034, 1.0
        %v1086 = vadd.f32 %v1035, 1.0
        %v1087 = vadd.f32 %v1036, 1.0
        %v1088 = vadd.f32 %v1037, 1.0
        %v1089 = vadd.f32 %v1038, 1.0
        %v1090 = vadd.f32 %v1039, 1.0
        %v1091 = vadd.f32 %v1040, 1.0
        %v1092 = vadd.f32 %v1041, 1.0
        %v1093 = vadd.f32 %v1042, 1.0
        %v1094 = vadd.f32 %v1043, 1.0
        %v1095 = vadd.f32 %v1044, 1.0
        %v1096 = vadd.f32 %v1045, 1.0
        %v1097 = vadd.f32 %v1046, 1.0
        %v1098 = vadd.f32 %v1047, 1.0
        %v1099 = vadd.f32 %v1048, 1.0
        %v1100 = vadd.f32 %v1049, 1.0
        %v1101 = vadd.f32 %v1050, 1.0
        %v1102 = vadd.f32 %v1051, 1.0
        %v1103 = vadd.f32 %v1052, 1.0
        %v1104 = vadd.f32 %v1053, 1.0
        %v1105 = vadd.f32 %v1054, 1.0
        %v1106 = vadd.f32 %v1055, 1.0
        %v1107 = vadd.f32 %v1056, 1.0
        %v1108 = vadd.f32 %v1057, 1.0
        %v1109 = vadd.f32 %v1058, 1.0
        %v1110 = vadd.f32 %v1059, 1.0
        %v1111 = vadd.f32 %v1060, 1.0
        %v1112 = vmul.f32 %v908, %v1061
        %v1113 = vmul.f32 %v909, %v1062
        %v1114 = vmul.f32 %v910, %v1063
        %v1115 = vmul.f32 %v911, %v1064
        %v1116 = vmul.f32 %v912, %v1065
        %v1117 = vmul.f32 %v913, %v1066
        %v1118 = vmul.f32 %v914, %v1067
        %v1119 = vmul.f32 %v915, %v1068
        %v1120 = vmul.f32 %v916, %v1069
        %v1121 = vmul.f32 %v917, %v1070
        %v1122 = vmul.f32 %v918, %v1071
        %v1123 = vmul.f32 %v919, %v1072
        %v1124 = vmul.f32 %v920, %v1073
        %v1125 = vmul.f32 %v921, %v1074
        %v1126 = vmul.f32 %v922, %v1075
        %v1127 = vmul.f32 %v923, %v1076
        %v1128 = vmul.f32 %v924, %v1077
        %v1129 = vmul.f32 %v925, %v1078
        %v1130 = vmul.f32 %v926, %v1079
        %v1131 = vmul.f32 %v927, %v1080
        %v1132 = vmul.f32 %v928, %v1081
        %v1133 = vmul.f32 %v929, %v1082
        %v1134 = vmul.f32 %v930, %v1083
        %v1135 = vmul.f32 %v931, %v1084
        %v1136 = vmul.f32 %v932, %v1085
        %v1137 = vmul.f32 %v933, %v1086
        %v1138 = vmul.f32 %v934, %v1087
        %v1139 = vmul.f32 %v935, %v1088
        %v1140 = vmul.f32 %v936, %v1089
        %v1141 = vmul.f32 %v937, %v1090
        %v1142 = vmul.f32 %v938, %v1091
        %v1143 = vmul.f32 %v939, %v1092
        %v1144 = vmul.f32 %v940, %v1093
        %v1145 = vmul.f32 %v941, %v1094
        %v1146 = vmul.f32 %v942, %v1095
        %v1147 = vmul.f32 %v943, %v1096
        %v1148 = vmul.f32 %v944, %v1097
        %v1149 = vmul.f32 %v945, %v1098
        %v1150 = vmul.f32 %v946, %v1099
        %v1151 = vmul.f32 %v947, %v1100
        %v1152 = vmul.f32 %v948, %v1101
        %v1153 = vmul.f32 %v949, %v1102
        %v1154 = vmul.f32 %v950, %v1103
        %v1155 = vmul.f32 %v951, %v1104
        %v1156 = vmul.f32 %v952, %v1105
        %v1157 = vmul.f32 %v953, %v1106
        %v1158 = vmul.f32 %v954, %v1107
        %v1159 = vmul.f32 %v955, %v1108
        %v1160 = vmul.f32 %v956, %v1109
        %v1161 = vmul.f32 %v957, %v1110
        %v1162 = vmul.f32 %v958, %v1111
        %1163 = vst [vmem:[#allocation2] sm:$0xff] %v1112
        %1164 = vst [vmem:[#allocation2 + $0x8] sm:$0xff] %v1113
        %1165 = vst [vmem:[#allocation2 + $0x10] sm:$0xff] %v1114
        %1166 = vst [vmem:[#allocation2 + $0x18] sm:$0xff] %v1115
        %1167 = vst [vmem:[#allocation2 + $0x20] sm:$0xff] %v1116
        %1168 = vst [vmem:[#allocation2 + $0x28] sm:$0xff] %v1117
        %1169 = vst [vmem:[#allocation2 + $0x30] sm:$0xff] %v1118
        %1170 = vst [vmem:[#allocation2 + $0x38] sm:$0xff] %v1119
        %1171 = vst [vmem:[#allocation2 + $0x40] sm:$0xff] %v1120
        %1172 = vst [vmem:[#allocation2 + $0x48] sm:$0xff] %v1121
        %1173 = vst [vmem:[#allocation2 + $0x50] sm:$0xff] %v1122
        %1174 = vst [vmem:[#allocation2 + $0x58] sm:$0xff] %v1123
        %1175 = vst [vmem:[#allocation2 + $0x60] sm:$0xff] %v1124
        %1176 = vst [vmem:[#allocation2 + $0x68] sm:$0xff] %v1125
        %1177 = vst [vmem:[#allocation2 + $0x70] sm:$0xff] %v1126
        %1178 = vst [vmem:[#allocation2 + $0x78] sm:$0xff] %v1127
        %1179 = vst [vmem:[#allocation2 + $0x80] sm:$0xff] %v1128
        %1180 = vst [vmem:[#allocation2 + $0x88] sm:$0xff] %v1129
        %1181 = vst [vmem:[#allocation2 + $0x90] sm:$0xff] %v1130
        %1182 = vst [vmem:[#allocation2 + $0x98] sm:$0xff] %v1131
        %1183 = vst [vmem:[#allocation2 + $0xa0] sm:$0xff] %v1132
        %1184 = vst [vmem:[#allocation2 + $0xa8] sm:$0xff] %v1133
        %1185 = vst [vmem:[#allocation2 + $0xb0] sm:$0xff] %v1134
        %1186 = vst [vmem:[#allocation2 + $0xb8] sm:$0xff] %v1135
        %1187 = vst [vmem:[#allocation2 + $0xc0] sm:$0xff] %v1136
        %1188 = vst [vmem:[#allocation2 + $0xc8] sm:$0xff] %v1137
        %1189 = vst [vmem:[#allocation2 + $0xd0] sm:$0xff] %v1138
        %1190 = vst [vmem:[#allocation2 + $0xd8] sm:$0xff] %v1139
        %1191 = vst [vmem:[#allocation2 + $0xe0] sm:$0xff] %v1140
        %1192 = vst [vmem:[#allocation2 + $0xe8] sm:$0xff] %v1141
        %1193 = vst [vmem:[#allocation2 + $0xf0] sm:$0xff] %v1142
        %1194 = vst [vmem:[#allocation2 + $0xf8] sm:$0xff] %v1143
        %1195 = vst [vmem:[#allocation2 + $0x100] sm:$0xff] %v1144
        %1196 = vst [vmem:[#allocation2 + $0x108] sm:$0xff] %v1145
        %1197 = vst [vmem:[#allocation2 + $0x110] sm:$0xff] %v1146
        %1198 = vst [vmem:[#allocation2 + $0x118] sm:$0xff] %v1147
        %1199 = vst [vmem:[#allocation2 + $0x120] sm:$0xff] %v1148
        %1200 = vst [vmem:[#allocation2 + $0x128] sm:$0xff] %v1149
        %1201 = vst [vmem:[#allocation2 + $0x130] sm:$0xff] %v1150
        %1202 = vst [vmem:[#allocation2 + $0x138] sm:$0xff] %v1151
        %1203 = vst [vmem:[#allocation2 + $0x140] sm:$0xff] %v1152
        %1204 = vst [vmem:[#allocation2 + $0x148] sm:$0xff] %v1153
        %1205 = vst [vmem:[#allocation2 + $0x150] sm:$0xff] %v1154
        %1206 = vst [vmem:[#allocation2 + $0x158] sm:$0xff] %v1155
        %1207 = vst [vmem:[#allocation2 + $0x160] sm:$0xff] %v1156
        %1208 = vst [vmem:[#allocation2 + $0x168] sm:$0xff] %v1157
        %1209 = vst [vmem:[#allocation2 + $0x170] sm:$0xff] %v1158
        %1210 = vst [vmem:[#allocation2 + $0x178] sm:$0xff] %v1159
        %1211 = vst [vmem:[#allocation2 + $0x180] sm:$0xff] %v1160
        %1212 = vst [vmem:[#allocation2 + $0x188] sm:$0xff] %v1161
        %1213 = vst [vmem:[#allocation2 + $0x190] sm:$0xff] %v1162
        %v1214 = vld [vmem:[#allocation2] sm:$0xff]
        %v1215 = vld [vmem:[#allocation2 + $0x8] sm:$0xff]
        %v1216 = vld [vmem:[#allocation2 + $0x10] sm:$0xff]
        %v1217 = vld [vmem:[#allocation2 + $0x18] sm:$0xff]
        %v1218 = vld [vmem:[#allocation2 + $0x20] sm:$0xff]
        %v1219 = vld [vmem:[#allocation2 + $0x28] sm:$0xff]
        %v1220 = vld [vmem:[#allocation2 + $0x30] sm:$0xff]
        %v1221 = vld [vmem:[#allocation2 + $0x38] sm:$0xff]
        %v1222 = vld [vmem:[#allocation2 + $0x40] sm:$0xff]
        %v1223 = vld [vmem:[#allocation2 + $0x48] sm:$0xff]
        %v1224 = vld [vmem:[#allocation2 + $0x50] sm:$0xff]
        %v1225 = vld [vmem:[#allocation2 + $0x58] sm:$0xff]
        %v1226 = vld [vmem:[#allocation2 + $0x60] sm:$0xff]
        %v1227 = vld [vmem:[#allocation2 + $0x68] sm:$0xff]
        %v1228 = vld [vmem:[#allocation2 + $0x70] sm:$0xff]
        %v1229 = vld [vmem:[#allocation2 + $0x78] sm:$0xff]
        %v1230 = vld [vmem:[#allocation2 + $0x80] sm:$0xff]
        %v1231 = vld [vmem:[#allocation2 + $0x88] sm:$0xff]
        %v1232 = vld [vmem:[#allocation2 + $0x90] sm:$0xff]
        %v1233 = vld [vmem:[#allocation2 + $0x98] sm:$0xff]
        %v1234 = vld [vmem:[#allocation2 + $0xa0] sm:$0xff]
        %v1235 = vld [vmem:[#allocation2 + $0xa8] sm:$0xff]
        %v1236 = vld [vmem:[#allocation2 + $0xb0] sm:$0xff]
        %v1237 = vld [vmem:[#allocation2 + $0xb8] sm:$0xff]
        %v1238 = vld [vmem:[#allocation2 + $0xc0] sm:$0xff]
        %v1239 = vld [vmem:[#allocation2 + $0xc8] sm:$0xff]
        %v1240 = vld [vmem:[#allocation2 + $0xd0] sm:$0xff]
        %v1241 = vld [vmem:[#allocation2 + $0xd8] sm:$0xff]
        %v1242 = vld [vmem:[#allocation2 + $0xe0] sm:$0xff]
        %v1243 = vld [vmem:[#allocation2 + $0xe8] sm:$0xff]
        %v1244 = vld [vmem:[#allocation2 + $0xf0] sm:$0xff]
        %v1245 = vld [vmem:[#allocation2 + $0xf8] sm:$0xff]
        %v1246 = vld [vmem:[#allocation2 + $0x100] sm:$0xff]
        %v1247 = vld [vmem:[#allocation2 + $0x108] sm:$0xff]
        %v1248 = vld [vmem:[#allocation2 + $0x110] sm:$0xff]
        %v1249 = vld [vmem:[#allocation2 + $0x118] sm:$0xff]
        %v1250 = vld [vmem:[#allocation2 + $0x120] sm:$0xff]
        %v1251 = vld [vmem:[#allocation2 + $0x128] sm:$0xff]
        %v1252 = vld [vmem:[#allocation2 + $0x130] sm:$0xff]
        %v1253 = vld [vmem:[#allocation2 + $0x138] sm:$0xff]
        %v1254 = vld [vmem:[#allocation2 + $0x140] sm:$0xff]
        %v1255 = vld [vmem:[#allocation2 + $0x148] sm:$0xff]
        %v1256 = vld [vmem:[#allocation2 + $0x150] sm:$0xff]
        %v1257 = vld [vmem:[#allocation2 + $0x158] sm:$0xff]
        %v1258 = vld [vmem:[#allocation2 + $0x160] sm:$0xff]
        %v1259 = vld [vmem:[#allocation6] sm:$0xff]
        %v1260 = vld [vmem:[#allocation6 + $0x8] sm:$0xff]
        %v1261 = vld [vmem:[#allocation6 + $0x10] sm:$0xff]
        %v1262 = vld [vmem:[#allocation6 + $0x18] sm:$0xff]
        %v1263 = vld [vmem:[#allocation6 + $0x20] sm:$0xff]
        %v1264 = vld [vmem:[#allocation6 + $0x28] sm:$0xff]
        %v1265 = vld [vmem:[#allocation6 + $0x30] sm:$0xff]
        %v1266 = vld [vmem:[#allocation6 + $0x38] sm:$0xff]
        %v1267 = vld [vmem:[#allocation6 + $0x40] sm:$0xff]
        %v1268 = vld [vmem:[#allocation6 + $0x48] sm:$0xff]
        %v1269 = vld [vmem:[#allocation6 + $0x50] sm:$0xff]
        %v1270 = vld [vmem:[#allocation6 + $0x58] sm:$0xff]
        %v1271 = vld [vmem:[#allocation6 + $0x60] sm:$0xff]
        %v1272 = vld [vmem:[#allocation6 + $0x68] sm:$0xff]
        %v1273 = vld [vmem:[#allocation6 + $0x70] sm:$0xff]
        %v1274 = vld [vmem:[#allocation6 + $0x78] sm:$0xff]
        %v1275 = vld [vmem:[#allocation2 + $0x1] sm:$0xff]
        %v1276 = vld [vmem:[#allocation2 + $0x9] sm:$0xff]
        %v1277 = vld [vmem:[#allocation2 + $0x11] sm:$0xff]
        %v1278 = vld [vmem:[#allocation2 + $0x19] sm:$0xff]
        %v1279 = vld [vmem:[#allocation2 + $0x21] sm:$0xff]
        %v1280 = vld [vmem:[#allocation2 + $0x29] sm:$0xff]
        %v1281 = vld [vmem:[#allocation2 + $0x31] sm:$0xff]
        %v1282 = vld [vmem:[#allocation2 + $0x39] sm:$0xff]
        %v1283 = vld [vmem:[#allocation2 + $0x41] sm:$0xff]
        %v1284 = vld [vmem:[#allocation2 + $0x49] sm:$0xff]
        %v1285 = vld [vmem:[#allocation2 + $0x51] sm:$0xff]
        %v1286 = vld [vmem:[#allocation2 + $0x59] sm:$0xff]
        %v1287 = vld [vmem:[#allocation2 + $0x61] sm:$0xff]
        %v1288 = vld [vmem:[#allocation2 + $0x69] sm:$0xff]
        %v1289 = vld [vmem:[#allocation2 + $0x71] sm:$0xff]
        %v1290 = vld [vmem:[#allocation2 + $0x79] sm:$0xff]
        %v1291 = vld [vmem:[#allocation2 + $0x81] sm:$0xff]
        %v1292 = vld [vmem:[#allocation2 + $0x89] sm:$0xff]
        %v1293 = vld [vmem:[#allocation2 + $0x91] sm:$0xff]
        %v1294 = vld [vmem:[#allocation2 + $0x99] sm:$0xff]
        %v1295 = vld [vmem:[#allocation2 + $0xa1] sm:$0xff]
        %v1296 = vld [vmem:[#allocation2 + $0xa9] sm:$0xff]
        %v1297 = vld [vmem:[#allocation2 + $0xb1] sm:$0xff]
        %v1298 = vld [vmem:[#allocation2 + $0xb9] sm:$0xff]
        %v1299 = vld [vmem:[#allocation2 + $0xc1] sm:$0xff]
        %v1300 = vld [vmem:[#allocation2 + $0xc9] sm:$0xff]
        %v1301 = vld [vmem:[#allocation2 + $0xd1] sm:$0xff]
        %v1302 = vld [vmem:[#allocation2 + $0xd9] sm:$0xff]
        %v1303 = vld [vmem:[#allocation2 + $0xe1] sm:$0xff]
        %v1304 = vld [vmem:[#allocation2 + $0xe9] sm:$0xff]
        %v1305 = vld [vmem:[#allocation2 + $0xf1] sm:$0xff]
        %v1306 = vld [vmem:[#allocation2 + $0xf9] sm:$0xff]
        %v1307 = vld [vmem:[#allocation2 + $0x101] sm:$0xff]
        %v1308 = vld [vmem:[#allocation2 + $0x109] sm:$0xff]
        %v1309 = vld [vmem:[#allocation2 + $0x111] sm:$0xff]
        %v1310 = vld [vmem:[#allocation2 + $0x119] sm:$0xff]
        %v1311 = vld [vmem:[#allocation2 + $0x121] sm:$0xff]
        %v1312 = vld [vmem:[#allocation2 + $0x129] sm:$0xff]
        %v1313 = vld [vmem:[#allocation2 + $0x131] sm:$0xff]
        %v1314 = vld [vmem:[#allocation2 + $0x139] sm:$0xff]
        %v1315 = vld [vmem:[#allocation2 + $0x141] sm:$0xff]
        %v1316 = vld [vmem:[#allocation2 + $0x149] sm:$0xff]
        %v1317 = vld [vmem:[#allocation2 + $0x151] sm:$0xff]
        %v1318 = vld [vmem:[#allocation2 + $0x159] sm:$0xff]
        %v1319 = vld [vmem:[#allocation2 + $0x161] sm:$0xff]
        %s1320 = scalar_lea.vmem [#allocation6], 128
        %v1321 = vld [vmem:[%s1320] sm:$0xff]
        %v1322 = vld [vmem:[%s1320 + $0x8] sm:$0xff]
        %v1323 = vld [vmem:[%s1320 + $0x10] sm:$0xff]
        %v1324 = vld [vmem:[%s1320 + $0x18] sm:$0xff]
        %v1325 = vld [vmem:[%s1320 + $0x20] sm:$0xff]
        %v1326 = vld [vmem:[%s1320 + $0x28] sm:$0xff]
        %v1327 = vld [vmem:[%s1320 + $0x30] sm:$0xff]
        %v1328 = vld [vmem:[%s1320 + $0x38] sm:$0xff]
        %v1329 = vld [vmem:[%s1320 + $0x40] sm:$0xff]
        %v1330 = vld [vmem:[%s1320 + $0x48] sm:$0xff]
        %v1331 = vld [vmem:[%s1320 + $0x50] sm:$0xff]
        %v1332 = vld [vmem:[%s1320 + $0x58] sm:$0xff]
        %v1333 = vld [vmem:[%s1320 + $0x60] sm:$0xff]
        %v1334 = vld [vmem:[%s1320 + $0x68] sm:$0xff]
        %v1335 = vld [vmem:[%s1320 + $0x70] sm:$0xff]
        %v1336 = vld [vmem:[%s1320 + $0x78] sm:$0xff]
        %1337 = vmatprep.subr.mxu0 0.0
        %1338 = vmatpush1.msra.mxu0 %v1321
        %1339 = vmatprep.subr.mxu0 0.0
        %1340 = vmatpush1.msra.mxu0 %v1322
        %1341 = vmatprep.subr.mxu0 0.0
        %1342 = vmatpush1.msra.mxu0 %v1323
        %1343 = vmatprep.subr.mxu0 0.0
        %1344 = vmatpush1.msra.mxu0 %v1324
        %1345 = vmatprep.subr.mxu0 0.0
        %1346 = vmatpush1.msra.mxu0 %v1325
        %1347 = vmatprep.subr.mxu0 0.0
        %1348 = vmatpush1.msra.mxu0 %v1326
        %1349 = vmatprep.subr.mxu0 0.0
        %1350 = vmatpush1.msra.mxu0 %v1327
        %1351 = vmatprep.subr.mxu0 0.0
        %1352 = vmatpush1.msra.mxu0 %v1328
        %1353 = vmatprep.subr.mxu0 0.0
        %1354 = vmatpush1.msra.mxu0 %v1329
        %1355 = vmatprep.subr.mxu0 0.0
        %1356 = vmatpush1.msra.mxu0 %v1330
        %1357 = vmatprep.subr.mxu0 0.0
        %1358 = vmatpush1.msra.mxu0 %v1331
        %1359 = vmatprep.subr.mxu0 0.0
        %1360 = vmatpush1.msra.mxu0 %v1332
        %1361 = vmatprep.subr.mxu0 0.0
        %1362 = vmatpush1.msra.mxu0 %v1333
        %1363 = vmatprep.subr.mxu0 0.0
        %1364 = vmatpush1.msra.mxu0 %v1334
        %1365 = vmatprep.subr.mxu0 0.0
        %1366 = vmatpush1.msra.mxu0 %v1335
        %1367 = vmatprep.subr.mxu0 0.0
        %1368 = vmatpush1.msra.mxu0 %v1336
        %1369 = vmatprep.subr.mxu0 0.0
        %1370 = vmatpush1.msra.mxu0 0.0
        %1371 = vmatprep.subr.mxu0 0.0
        %1372 = vmatpush1.msra.mxu0 0.0
        %1373 = vmatprep.subr.mxu0 0.0
        %1374 = vmatpush1.msra.mxu0 0.0
        %1375 = vmatprep.subr.mxu0 0.0
        %1376 = vmatpush1.msra.mxu0 0.0
        %1377 = vmatprep.subr.mxu0 0.0
        %1378 = vmatpush1.msra.mxu0 0.0
        %1379 = vmatprep.subr.mxu0 0.0
        %1380 = vmatpush1.msra.mxu0 0.0
        %1381 = vmatprep.subr.mxu0 0.0
        %1382 = vmatpush1.msra.mxu0 0.0
        %1383 = vmatprep.subr.mxu0 0.0
        %1384 = vmatpush1.msra.mxu0 0.0
        %1385 = vmatprep.subr.mxu0 0.0
        %1386 = vmatpush1.msra.mxu0 0.0
        %1387 = vmatprep.subr.mxu0 0.0
        %1388 = vmatpush1.msra.mxu0 0.0
        %1389 = vmatprep.subr.mxu0 0.0
        %1390 = vmatpush1.msra.mxu0 0.0
        %1391 = vmatprep.subr.mxu0 0.0
        %1392 = vmatpush1.msra.mxu0 0.0
        %1393 = vmatprep.subr.mxu0 0.0
        %1394 = vmatpush1.msra.mxu0 0.0
        %1395 = vmatprep.subr.mxu0 0.0
        %1396 = vmatpush1.msra.mxu0 0.0
        %1397 = vmatprep.subr.mxu0 0.0
        %1398 = vmatpush1.msra.mxu0 0.0
        %1399 = vmatprep.subr.mxu0 0.0
        %1400 = vmatpush1.msra.mxu0 0.0
        %1401 = vmatprep.mubr.f32.mxu0 0.0
        %1402 = vmatmul.mubr.f32.gmra.mrb[0].mxu0 %v1275
        %v1403 = vpop.f32.mrb[0].mxu0
        %v1404 = vadd.f32 0.0, %v1403
        %v1405 = vpop.f32.mrb[0].mxu0
        %1406 = vmatprep.mubr.f32.mxu0 0.0
        %1407 = vmatmul.mubr.f32.gmra.mrb[0].mxu0 %v1276
        %v1408 = vpop.f32.mrb[0].mxu0
        %v1409 = vadd.f32 0.0, %v1408
        %v1410 = vpop.f32.mrb[0].mxu0
        %1411 = vmatprep.mubr.f32.mxu0 0.0
        %1412 = vmatmul.mubr.f32.gmra.mrb[0].mxu0 %v1277
        %v1413 = vpop.f32.mrb[0].mxu0
        %v1414 = vadd.f32 0.0, %v1413
        %v1415 = vpop.f32.mrb[0].mxu0
        %1416 = vmatprep.mubr.f32.mxu0 0.0
        %1417 = vmatmul.mubr.f32.gmra.mrb[0].mxu0 %v1278
        %v1418 = vpop.f32.mrb[0].mxu0
        %v1419 = vadd.f32 0.0, %v1418
        %v1420 = vpop.f32.mrb[0].mxu0
        %1421 = vmatprep.mubr.f32.mxu0 0.0
        %1422 = vmatmul.mubr.f32.gmra.mrb[0].mxu0 %v1279
        %v1423 = vpop.f32.mrb[0].mxu0
        %v1424 = vadd.f32 0.0, %v1423
        %v1425 = vpop.f32.mrb[0].mxu0
        %1426 = vmatprep.mubr.f32.mxu0 0.0
        %1427 = vmatmul.mubr.f32.gmra.mrb[0].mxu0 %v1280
        %v1428 = vpop.f32.mrb[0].mxu0
        %v1429 = vadd.f32 0.0, %v1428
        %v1430 = vpop.f32.mrb[0].mxu0
        %1431 = vmatprep.mubr.f32.mxu0 0.0
        %1432 = vmatmul.mubr.f32.gmra.mrb[0].mxu0 %v1281
        %v1433 = vpop.f32.mrb[0].mxu0
        %v1434 = vadd.f32 0.0, %v1433
        %v1435 = vpop.f32.mrb[0].mxu0
        %1436 = vmatprep.mubr.f32.mxu0 0.0
        %1437 = vmatmul.mubr.f32.gmra.mrb[0].mxu0 %v1282
        %v1438 = vpop.f32.mrb[0].mxu0
        %v1439 = vadd.f32 0.0, %v1438
        %v1440 = vpop.f32.mrb[0].mxu0
        %1441 = vmatprep.mubr.f32.mxu0 0.0
        %1442 = vmatmul.mubr.f32.gmra.mrb[0].mxu0 %v1283
        %v1443 = vpop.f32.mrb[0].mxu0
        %v1444 = vadd.f32 0.0, %v1443
        %v1445 = vpop.f32.mrb[0].mxu0
        %1446 = vmatprep.mubr.f32.mxu0 0.0
        %1447 = vmatmul.mubr.f32.gmra.mrb[0].mxu0 %v1284
        %v1448 = vpop.f32.mrb[0].mxu0
        %v1449 = vadd.f32 0.0, %v1448
        %v1450 = vpop.f32.mrb[0].mxu0
        %1451 = vmatprep.mubr.f32.mxu0 0.0
        %1452 = vmatmul.mubr.f32.gmra.mrb[0].mxu0 %v1285
        %v1453 = vpop.f32.mrb[0].mxu0
        %v1454 = vadd.f32 0.0, %v1453
        %v1455 = vpop.f32.mrb[0].mxu0
        %1456 = vmatprep.mubr.f32.mxu0 0.0
        %1457 = vmatmul.mubr.f32.gmra.mrb[0].mxu0 %v1286
        %v1458 = vpop.f32.mrb[0].mxu0
        %v1459 = vadd.f32 0.0, %v1458
        %v1460 = vpop.f32.mrb[0].mxu0
        %1461 = vmatprep.mubr.f32.mxu0 0.0
        %1462 = vmatmul.mubr.f32.gmra.mrb[0].mxu0 %v1287
        %v1463 = vpop.f32.mrb[0].mxu0
        %v1464 = vadd.f32 0.0, %v1463
        %v1465 = vpop.f32.mrb[0].mxu0
        %1466 = vmatprep.mubr.f32.mxu0 0.0
        %1467 = vmatmul.mubr.f32.gmra.mrb[0].mxu0 %v1288
        %v1468 = vpop.f32.mrb[0].mxu0
        %v1469 = vadd.f32 0.0, %v1468
        %v1470 = vpop.f32.mrb[0].mxu0
        %1471 = vmatprep.mubr.f32.mxu0 0.0
        %1472 = vmatmul.mubr.f32.gmra.mrb[0].mxu0 %v1289
        %v1473 = vpop.f32.mrb[0].mxu0
        %v1474 = vadd.f32 0.0, %v1473
        %v1475 = vpop.f32.mrb[0].mxu0
        %1476 = vmatprep.mubr.f32.mxu0 0.0
        %1477 = vmatmul.mubr.f32.gmra.mrb[0].mxu0 %v1290
        %v1478 = vpop.f32.mrb[0].mxu0
        %v1479 = vadd.f32 0.0, %v1478
        %v1480 = vpop.f32.mrb[0].mxu0
        %1481 = vmatprep.mubr.f32.mxu0 0.0
        %1482 = vmatmul.mubr.f32.gmra.mrb[0].mxu0 %v1291
        %v1483 = vpop.f32.mrb[0].mxu0
        %v1484 = vadd.f32 0.0, %v1483
        %v1485 = vpop.f32.mrb[0].mxu0
        %1486 = vmatprep.mubr.f32.mxu0 0.0
        %1487 = vmatmul.mubr.f32.gmra.mrb[0].mxu0 %v1292
        %v1488 = vpop.f32.mrb[0].mxu0
        %v1489 = vadd.f32 0.0, %v1488
        %v1490 = vpop.f32.mrb[0].mxu0
        %1491 = vmatprep.mubr.f32.mxu0 0.0
        %1492 = vmatmul.mubr.f32.gmra.mrb[0].mxu0 %v1293
        %v1493 = vpop.f32.mrb[0].mxu0
        %v1494 = vadd.f32 0.0, %v1493
        %v1495 = vpop.f32.mrb[0].mxu0
        %1496 = vmatprep.mubr.f32.mxu0 0.0
        %1497 = vmatmul.mubr.f32.gmra.mrb[0].mxu0 %v1294
        %v1498 = vpop.f32.mrb[0].mxu0
        %v1499 = vadd.f32 0.0, %v1498
        %v1500 = vpop.f32.mrb[0].mxu0
        %1501 = vmatprep.mubr.f32.mxu0 0.0
        %1502 = vmatmul.mubr.f32.gmra.mrb[0].mxu0 %v1295
        %v1503 = vpop.f32.mrb[0].mxu0
        %v1504 = vadd.f32 0.0, %v1503
        %v1505 = vpop.f32.mrb[0].mxu0
        %1506 = vmatprep.mubr.f32.mxu0 0.0
        %1507 = vmatmul.mubr.f32.gmra.mrb[0].mxu0 %v1296
        %v1508 = vpop.f32.mrb[0].mxu0
        %v1509 = vadd.f32 0.0, %v1508
        %v1510 = vpop.f32.mrb[0].mxu0
        %1511 = vmatprep.mubr.f32.mxu0 0.0
        %1512 = vmatmul.mubr.f32.gmra.mrb[0].mxu0 %v1297
        %v1513 = vpop.f32.mrb[0].mxu0
        %v1514 = vadd.f32 0.0, %v1513
        %v1515 = vpop.f32.mrb[0].mxu0
        %1516 = vmatprep.mubr.f32.mxu0 0.0
        %1517 = vmatmul.mubr.f32.gmra.mrb[0].mxu0 %v1298
        %v1518 = vpop.f32.mrb[0].mxu0
        %v1519 = vadd.f32 0.0, %v1518
        %v1520 = vpop.f32.mrb[0].mxu0
        %1521 = vmatprep.mubr.f32.mxu0 0.0
        %1522 = vmatmul.mubr.f32.gmra.mrb[0].mxu0 %v1299
        %v1523 = vpop.f32.mrb[0].mxu0
        %v1524 = vadd.f32 0.0, %v1523
        %v1525 = vpop.f32.mrb[0].mxu0
        %1526 = vmatprep.mubr.f32.mxu0 0.0
        %1527 = vmatmul.mubr.f32.gmra.mrb[0].mxu0 %v1300
        %v1528 = vpop.f32.mrb[0].mxu0
        %v1529 = vadd.f32 0.0, %v1528
        %v1530 = vpop.f32.mrb[0].mxu0
        %1531 = vmatprep.mubr.f32.mxu0 0.0
        %1532 = vmatmul.mubr.f32.gmra.mrb[0].mxu0 %v1301
        %v1533 = vpop.f32.mrb[0].mxu0
        %v1534 = vadd.f32 0.0, %v1533
        %v1535 = vpop.f32.mrb[0].mxu0
        %1536 = vmatprep.mubr.f32.mxu0 0.0
        %1537 = vmatmul.mubr.f32.gmra.mrb[0].mxu0 %v1302
        %v1538 = vpop.f32.mrb[0].mxu0
        %v1539 = vadd.f32 0.0, %v1538
        %v1540 = vpop.f32.mrb[0].mxu0
        %1541 = vmatprep.mubr.f32.mxu0 0.0
        %1542 = vmatmul.mubr.f32.gmra.mrb[0].mxu0 %v1303
        %v1543 = vpop.f32.mrb[0].mxu0
        %v1544 = vadd.f32 0.0, %v1543
        %v1545 = vpop.f32.mrb[0].mxu0
        %1546 = vmatprep.mubr.f32.mxu0 0.0
        %1547 = vmatmul.mubr.f32.gmra.mrb[0].mxu0 %v1304
        %v1548 = vpop.f32.mrb[0].mxu0
        %v1549 = vadd.f32 0.0, %v1548
        %v1550 = vpop.f32.mrb[0].mxu0
        %1551 = vmatprep.mubr.f32.mxu0 0.0
        %1552 = vmatmul.mubr.f32.gmra.mrb[0].mxu0 %v1305
        %v1553 = vpop.f32.mrb[0].mxu0
        %v1554 = vadd.f32 0.0, %v1553
        %v1555 = vpop.f32.mrb[0].mxu0
        %1556 = vmatprep.mubr.f32.mxu0 0.0
        %1557 = vmatmul.mubr.f32.gmra.mrb[0].mxu0 %v1306
        %v1558 = vpop.f32.mrb[0].mxu0
        %v1559 = vadd.f32 0.0, %v1558
        %v1560 = vpop.f32.mrb[0].mxu0
        %1561 = vmatprep.mubr.f32.mxu0 0.0
        %1562 = vmatmul.mubr.f32.gmra.mrb[0].mxu0 %v1307
        %v1563 = vpop.f32.mrb[0].mxu0
        %v1564 = vadd.f32 0.0, %v1563
        %v1565 = vpop.f32.mrb[0].mxu0
        %1566 = vmatprep.mubr.f32.mxu0 0.0
        %1567 = vmatmul.mubr.f32.gmra.mrb[0].mxu0 %v1308
        %v1568 = vpop.f32.mrb[0].mxu0
        %v1569 = vadd.f32 0.0, %v1568
        %v1570 = vpop.f32.mrb[0].mxu0
        %1571 = vmatprep.mubr.f32.mxu0 0.0
        %1572 = vmatmul.mubr.f32.gmra.mrb[0].mxu0 %v1309
        %v1573 = vpop.f32.mrb[0].mxu0
        %v1574 = vadd.f32 0.0, %v1573
        %v1575 = vpop.f32.mrb[0].mxu0
        %1576 = vmatprep.mubr.f32.mxu0 0.0
        %1577 = vmatmul.mubr.f32.gmra.mrb[0].mxu0 %v1310
        %v1578 = vpop.f32.mrb[0].mxu0
        %v1579 = vadd.f32 0.0, %v1578
        %v1580 = vpop.f32.mrb[0].mxu0
        %1581 = vmatprep.mubr.f32.mxu0 0.0
        %1582 = vmatmul.mubr.f32.gmra.mrb[0].mxu0 %v1311
        %v1583 = vpop.f32.mrb[0].mxu0
        %v1584 = vadd.f32 0.0, %v1583
        %v1585 = vpop.f32.mrb[0].mxu0
        %1586 = vmatprep.mubr.f32.mxu0 0.0
        %1587 = vmatmul.mubr.f32.gmra.mrb[0].mxu0 %v1312
        %v1588 = vpop.f32.mrb[0].mxu0
        %v1589 = vadd.f32 0.0, %v1588
        %v1590 = vpop.f32.mrb[0].mxu0
        %1591 = vmatprep.mubr.f32.mxu0 0.0
        %1592 = vmatmul.mubr.f32.gmra.mrb[0].mxu0 %v1313
        %v1593 = vpop.f32.mrb[0].mxu0
        %v1594 = vadd.f32 0.0, %v1593
        %v1595 = vpop.f32.mrb[0].mxu0
        %1596 = vmatprep.mubr.f32.mxu0 0.0
        %1597 = vmatmul.mubr.f32.gmra.mrb[0].mxu0 %v1314
        %v1598 = vpop.f32.mrb[0].mxu0
        %v1599 = vadd.f32 0.0, %v1598
        %v1600 = vpop.f32.mrb[0].mxu0
        %1601 = vmatprep.mubr.f32.mxu0 0.0
        %1602 = vmatmul.mubr.f32.gmra.mrb[0].mxu0 %v1315
        %v1603 = vpop.f32.mrb[0].mxu0
        %v1604 = vadd.f32 0.0, %v1603
        %v1605 = vpop.f32.mrb[0].mxu0
        %1606 = vmatprep.mubr.f32.mxu0 0.0
        %1607 = vmatmul.mubr.f32.gmra.mrb[0].mxu0 %v1316
        %v1608 = vpop.f32.mrb[0].mxu0
        %v1609 = vadd.f32 0.0, %v1608
        %v1610 = vpop.f32.mrb[0].mxu0
        %1611 = vmatprep.mubr.f32.mxu0 0.0
        %1612 = vmatmul.mubr.f32.gmra.mrb[0].mxu0 %v1317
        %v1613 = vpop.f32.mrb[0].mxu0
        %v1614 = vadd.f32 0.0, %v1613
        %v1615 = vpop.f32.mrb[0].mxu0
        %1616 = vmatprep.mubr.f32.mxu0 0.0
        %1617 = vmatmul.mubr.f32.gmra.mrb[0].mxu0 %v1318
        %v1618 = vpop.f32.mrb[0].mxu0
        %v1619 = vadd.f32 0.0, %v1618
        %v1620 = vpop.f32.mrb[0].mxu0
        %1621 = vmatprep.mubr.f32.mxu0 0.0
        %1622 = vmatmul.mubr.f32.gmra.mrb[0].mxu0 %v1319
        %v1623 = vpop.f32.mrb[0].mxu0
        %v1624 = vadd.f32 0.0, %v1623
        %v1625 = vpop.f32.mrb[0].mxu0
        %1626 = vdwg.mxu0
        %1627 = vmatprep.subr.mxu0 0.0
        %1628 = vmatpush1.msra.mxu0 %v1259
        %1629 = vmatprep.subr.mxu0 0.0
        %1630 = vmatpush1.msra.mxu0 %v1260
        %1631 = vmatprep.subr.mxu0 0.0
        %1632 = vmatpush1.msra.mxu0 %v1261
        %1633 = vmatprep.subr.mxu0 0.0
        %1634 = vmatpush1.msra.mxu0 %v1262
        %1635 = vmatprep.subr.mxu0 0.0
        %1636 = vmatpush1.msra.mxu0 %v1263
        %1637 = vmatprep.subr.mxu0 0.0
        %1638 = vmatpush1.msra.mxu0 %v1264
        %1639 = vmatprep.subr.mxu0 0.0
        %1640 = vmatpush1.msra.mxu0 %v1265
        %1641 = vmatprep.subr.mxu0 0.0
        %1642 = vmatpush1.msra.mxu0 %v1266
        %1643 = vmatprep.subr.mxu0 0.0
        %1644 = vmatpush1.msra.mxu0 %v1267
        %1645 = vmatprep.subr.mxu0 0.0
        %1646 = vmatpush1.msra.mxu0 %v1268
        %1647 = vmatprep.subr.mxu0 0.0
        %1648 = vmatpush1.msra.mxu0 %v1269
        %1649 = vmatprep.subr.mxu0 0.0
        %1650 = vmatpush1.msra.mxu0 %v1270
        %1651 = vmatprep.subr.mxu0 0.0
        %1652 = vmatpush1.msra.mxu0 %v1271
        %1653 = vmatprep.subr.mxu0 0.0
        %1654 = vmatpush1.msra.mxu0 %v1272
        %1655 = vmatprep.subr.mxu0 0.0
        %1656 = vmatpush1.msra.mxu0 %v1273
        %1657 = vmatprep.subr.mxu0 0.0
        %1658 = vmatpush1.msra.mxu0 %v1274
        %1659 = vmatprep.subr.mxu0 0.0
        %1660 = vmatpush1.msra.mxu0 0.0
        %1661 = vmatprep.subr.mxu0 0.0
        %1662 = vmatpush1.msra.mxu0 0.0
        %1663 = vmatprep.subr.mxu0 0.0
        %1664 = vmatpush1.msra.mxu0 0.0
        %1665 = vmatprep.subr.mxu0 0.0
        %1666 = vmatpush1.msra.mxu0 0.0
        %1667 = vmatprep.subr.mxu0 0.0
        %1668 = vmatpush1.msra.mxu0 0.0
        %1669 = vmatprep.subr.mxu0 0.0
        %1670 = vmatpush1.msra.mxu0 0.0
        %1671 = vmatprep.subr.mxu0 0.0
        %1672 = vmatpush1.msra.mxu0 0.0
        %1673 = vmatprep.subr.mxu0 0.0
        %1674 = vmatpush1.msra.mxu0 0.0
        %1675 = vmatprep.subr.mxu0 0.0
        %1676 = vmatpush1.msra.mxu0 0.0
        %1677 = vmatprep.subr.mxu0 0.0
        %1678 = vmatpush1.msra.mxu0 0.0
        %1679 = vmatprep.subr.mxu0 0.0
        %1680 = vmatpush1.msra.mxu0 0.0
        %1681 = vmatprep.subr.mxu0 0.0
        %1682 = vmatpush1.msra.mxu0 0.0
        %1683 = vmatprep.subr.mxu0 0.0
        %1684 = vmatpush1.msra.mxu0 0.0
        %1685 = vmatprep.subr.mxu0 0.0
        %1686 = vmatpush1.msra.mxu0 0.0
        %1687 = vmatprep.subr.mxu0 0.0
        %1688 = vmatpush1.msra.mxu0 0.0
        %1689 = vmatprep.subr.mxu0 0.0
        %1690 = vmatpush1.msra.mxu0 0.0
        %1691 = vmatprep.mubr.f32.mxu0 0.0
        %1692 = vmatmul.mubr.f32.gmra.mrb[0].mxu0 %v1214
        %v1693 = vpop.f32.mrb[0].mxu0
        %v1694 = vadd.f32 %v1404, %v1693
        %v1695 = vpop.f32.mrb[0].mxu0
        %1696 = vmatprep.mubr.f32.mxu0 0.0
        %1697 = vmatmul.mubr.f32.gmra.mrb[0].mxu0 %v1215
        %v1698 = vpop.f32.mrb[0].mxu0
        %v1699 = vadd.f32 %v1409, %v1698
        %v1700 = vpop.f32.mrb[0].mxu0
        %1701 = vmatprep.mubr.f32.mxu0 0.0
        %1702 = vmatmul.mubr.f32.gmra.mrb[0].mxu0 %v1216
        %v1703 = vpop.f32.mrb[0].mxu0
        %v1704 = vadd.f32 %v1414, %v1703
        %v1705 = vpop.f32.mrb[0].mxu0
        %1706 = vmatprep.mubr.f32.mxu0 0.0
        %1707 = vmatmul.mubr.f32.gmra.mrb[0].mxu0 %v1217
        %v1708 = vpop.f32.mrb[0].mxu0
        %v1709 = vadd.f32 %v1419, %v1708
        %v1710 = vpop.f32.mrb[0].mxu0
        %1711 = vmatprep.mubr.f32.mxu0 0.0
        %1712 = vmatmul.mubr.f32.gmra.mrb[0].mxu0 %v1218
        %v1713 = vpop.f32.mrb[0].mxu0
        %v1714 = vadd.f32 %v1424, %v1713
        %v1715 = vpop.f32.mrb[0].mxu0
        %1716 = vmatprep.mubr.f32.mxu0 0.0
        %1717 = vmatmul.mubr.f32.gmra.mrb[0].mxu0 %v1219
        %v1718 = vpop.f32.mrb[0].mxu0
        %v1719 = vadd.f32 %v1429, %v1718
        %v1720 = vpop.f32.mrb[0].mxu0
        %1721 = vmatprep.mubr.f32.mxu0 0.0
        %1722 = vmatmul.mubr.f32.gmra.mrb[0].mxu0 %v1220
        %v1723 = vpop.f32.mrb[0].mxu0
        %v1724 = vadd.f32 %v1434, %v1723
        %v1725 = vpop.f32.mrb[0].mxu0
        %1726 = vmatprep.mubr.f32.mxu0 0.0
        %1727 = vmatmul.mubr.f32.gmra.mrb[0].mxu0 %v1221
        %v1728 = vpop.f32.mrb[0].mxu0
        %v1729 = vadd.f32 %v1439, %v1728
        %v1730 = vpop.f32.mrb[0].mxu0
        %1731 = vmatprep.mubr.f32.mxu0 0.0
        %1732 = vmatmul.mubr.f32.gmra.mrb[0].mxu0 %v1222
        %v1733 = vpop.f32.mrb[0].mxu0
        %v1734 = vadd.f32 %v1444, %v1733
        %v1735 = vpop.f32.mrb[0].mxu0
        %1736 = vmatprep.mubr.f32.mxu0 0.0
        %1737 = vmatmul.mubr.f32.gmra.mrb[0].mxu0 %v1223
        %v1738 = vpop.f32.mrb[0].mxu0
        %v1739 = vadd.f32 %v1449, %v1738
        %v1740 = vpop.f32.mrb[0].mxu0
        %1741 = vmatprep.mubr.f32.mxu0 0.0
        %1742 = vmatmul.mubr.f32.gmra.mrb[0].mxu0 %v1224
        %v1743 = vpop.f32.mrb[0].mxu0
        %v1744 = vadd.f32 %v1454, %v1743
        %v1745 = vpop.f32.mrb[0].mxu0
        %1746 = vmatprep.mubr.f32.mxu0 0.0
        %1747 = vmatmul.mubr.f32.gmra.mrb[0].mxu0 %v1225
        %v1748 = vpop.f32.mrb[0].mxu0
        %v1749 = vadd.f32 %v1459, %v1748
        %v1750 = vpop.f32.mrb[0].mxu0
        %1751 = vmatprep.mubr.f32.mxu0 0.0
        %1752 = vmatmul.mubr.f32.gmra.mrb[0].mxu0 %v1226
        %v1753 = vpop.f32.mrb[0].mxu0
        %v1754 = vadd.f32 %v1464, %v1753
        %v1755 = vpop.f32.mrb[0].mxu0
        %1756 = vmatprep.mubr.f32.mxu0 0.0
        %1757 = vmatmul.mubr.f32.gmra.mrb[0].mxu0 %v1227
        %v1758 = vpop.f32.mrb[0].mxu0
        %v1759 = vadd.f32 %v1469, %v1758
        %v1760 = vpop.f32.mrb[0].mxu0
        %1761 = vmatprep.mubr.f32.mxu0 0.0
        %1762 = vmatmul.mubr.f32.gmra.mrb[0].mxu0 %v1228
        %v1763 = vpop.f32.mrb[0].mxu0
        %v1764 = vadd.f32 %v1474, %v1763
        %v1765 = vpop.f32.mrb[0].mxu0
        %1766 = vmatprep.mubr.f32.mxu0 0.0
        %1767 = vmatmul.mubr.f32.gmra.mrb[0].mxu0 %v1229
        %v1768 = vpop.f32.mrb[0].mxu0
        %v1769 = vadd.f32 %v1479, %v1768
        %v1770 = vpop.f32.mrb[0].mxu0
        %1771 = vmatprep.mubr.f32.mxu0 0.0
        %1772 = vmatmul.mubr.f32.gmra.mrb[0].mxu0 %v1230
        %v1773 = vpop.f32.mrb[0].mxu0
        %v1774 = vadd.f32 %v1484, %v1773
        %v1775 = vpop.f32.mrb[0].mxu0
        %1776 = vmatprep.mubr.f32.mxu0 0.0
        %1777 = vmatmul.mubr.f32.gmra.mrb[0].mxu0 %v1231
        %v1778 = vpop.f32.mrb[0].mxu0
        %v1779 = vadd.f32 %v1489, %v1778
        %v1780 = vpop.f32.mrb[0].mxu0
        %1781 = vmatprep.mubr.f32.mxu0 0.0
        %1782 = vmatmul.mubr.f32.gmra.mrb[0].mxu0 %v1232
        %v1783 = vpop.f32.mrb[0].mxu0
        %v1784 = vadd.f32 %v1494, %v1783
        %v1785 = vpop.f32.mrb[0].mxu0
        %1786 = vmatprep.mubr.f32.mxu0 0.0
        %1787 = vmatmul.mubr.f32.gmra.mrb[0].mxu0 %v1233
        %v1788 = vpop.f32.mrb[0].mxu0
        %v1789 = vadd.f32 %v1499, %v1788
        %v1790 = vpop.f32.mrb[0].mxu0
        %1791 = vmatprep.mubr.f32.mxu0 0.0
        %1792 = vmatmul.mubr.f32.gmra.mrb[0].mxu0 %v1234
        %v1793 = vpop.f32.mrb[0].mxu0
        %v1794 = vadd.f32 %v1504, %v1793
        %v1795 = vpop.f32.mrb[0].mxu0
        %1796 = vmatprep.mubr.f32.mxu0 0.0
        %1797 = vmatmul.mubr.f32.gmra.mrb[0].mxu0 %v1235
        %v1798 = vpop.f32.mrb[0].mxu0
        %v1799 = vadd.f32 %v1509, %v1798
        %v1800 = vpop.f32.mrb[0].mxu0
        %1801 = vmatprep.mubr.f32.mxu0 0.0
        %1802 = vmatmul.mubr.f32.gmra.mrb[0].mxu0 %v1236
        %v1803 = vpop.f32.mrb[0].mxu0
        %v1804 = vadd.f32 %v1514, %v1803
        %v1805 = vpop.f32.mrb[0].mxu0
        %1806 = vmatprep.mubr.f32.mxu0 0.0
        %1807 = vmatmul.mubr.f32.gmra.mrb[0].mxu0 %v1237
        %v1808 = vpop.f32.mrb[0].mxu0
        %v1809 = vadd.f32 %v1519, %v1808
        %v1810 = vpop.f32.mrb[0].mxu0
        %1811 = vmatprep.mubr.f32.mxu0 0.0
        %1812 = vmatmul.mubr.f32.gmra.mrb[0].mxu0 %v1238
        %v1813 = vpop.f32.mrb[0].mxu0
        %v1814 = vadd.f32 %v1524, %v1813
        %v1815 = vpop.f32.mrb[0].mxu0
        %1816 = vmatprep.mubr.f32.mxu0 0.0
        %1817 = vmatmul.mubr.f32.gmra.mrb[0].mxu0 %v1239
        %v1818 = vpop.f32.mrb[0].mxu0
        %v1819 = vadd.f32 %v1529, %v1818
        %v1820 = vpop.f32.mrb[0].mxu0
        %1821 = vmatprep.mubr.f32.mxu0 0.0
        %1822 = vmatmul.mubr.f32.gmra.mrb[0].mxu0 %v1240
        %v1823 = vpop.f32.mrb[0].mxu0
        %v1824 = vadd.f32 %v1534, %v1823
        %v1825 = vpop.f32.mrb[0].mxu0
        %1826 = vmatprep.mubr.f32.mxu0 0.0
        %1827 = vmatmul.mubr.f32.gmra.mrb[0].mxu0 %v1241
        %v1828 = vpop.f32.mrb[0].mxu0
        %v1829 = vadd.f32 %v1539, %v1828
        %v1830 = vpop.f32.mrb[0].mxu0
        %1831 = vmatprep.mubr.f32.mxu0 0.0
        %1832 = vmatmul.mubr.f32.gmra.mrb[0].mxu0 %v1242
        %v1833 = vpop.f32.mrb[0].mxu0
        %v1834 = vadd.f32 %v1544, %v1833
        %v1835 = vpop.f32.mrb[0].mxu0
        %1836 = vmatprep.mubr.f32.mxu0 0.0
        %1837 = vmatmul.mubr.f32.gmra.mrb[0].mxu0 %v1243
        %v1838 = vpop.f32.mrb[0].mxu0
        %v1839 = vadd.f32 %v1549, %v1838
        %v1840 = vpop.f32.mrb[0].mxu0
        %1841 = vmatprep.mubr.f32.mxu0 0.0
        %1842 = vmatmul.mubr.f32.gmra.mrb[0].mxu0 %v1244
        %v1843 = vpop.f32.mrb[0].mxu0
        %v1844 = vadd.f32 %v1554, %v1843
        %v1845 = vpop.f32.mrb[0].mxu0
        %1846 = vmatprep.mubr.f32.mxu0 0.0
        %1847 = vmatmul.mubr.f32.gmra.mrb[0].mxu0 %v1245
        %v1848 = vpop.f32.mrb[0].mxu0
        %v1849 = vadd.f32 %v1559, %v1848
        %v1850 = vpop.f32.mrb[0].mxu0
        %1851 = vmatprep.mubr.f32.mxu0 0.0
        %1852 = vmatmul.mubr.f32.gmra.mrb[0].mxu0 %v1246
        %v1853 = vpop.f32.mrb[0].mxu0
        %v1854 = vadd.f32 %v1564, %v1853
        %v1855 = vpop.f32.mrb[0].mxu0
        %1856 = vmatprep.mubr.f32.mxu0 0.0
        %1857 = vmatmul.mubr.f32.gmra.mrb[0].mxu0 %v1247
        %v1858 = vpop.f32.mrb[0].mxu0
        %v1859 = vadd.f32 %v1569, %v1858
        %v1860 = vpop.f32.mrb[0].mxu0
        %1861 = vmatprep.mubr.f32.mxu0 0.0
        %1862 = vmatmul.mubr.f32.gmra.mrb[0].mxu0 %v1248
        %v1863 = vpop.f32.mrb[0].mxu0
        %v1864 = vadd.f32 %v1574, %v1863
        %v1865 = vpop.f32.mrb[0].mxu0
        %1866 = vmatprep.mubr.f32.mxu0 0.0
        %1867 = vmatmul.mubr.f32.gmra.mrb[0].mxu0 %v1249
        %v1868 = vpop.f32.mrb[0].mxu0
        %v1869 = vadd.f32 %v1579, %v1868
        %v1870 = vpop.f32.mrb[0].mxu0
        %1871 = vmatprep.mubr.f32.mxu0 0.0
        %1872 = vmatmul.mubr.f32.gmra.mrb[0].mxu0 %v1250
        %v1873 = vpop.f32.mrb[0].mxu0
        %v1874 = vadd.f32 %v1584, %v1873
        %v1875 = vpop.f32.mrb[0].mxu0
        %1876 = vmatprep.mubr.f32.mxu0 0.0
        %1877 = vmatmul.mubr.f32.gmra.mrb[0].mxu0 %v1251
        %v1878 = vpop.f32.mrb[0].mxu0
        %v1879 = vadd.f32 %v1589, %v1878
        %v1880 = vpop.f32.mrb[0].mxu0
        %1881 = vmatprep.mubr.f32.mxu0 0.0
        %1882 = vmatmul.mubr.f32.gmra.mrb[0].mxu0 %v1252
        %v1883 = vpop.f32.mrb[0].mxu0
        %v1884 = vadd.f32 %v1594, %v1883
        %v1885 = vpop.f32.mrb[0].mxu0
        %1886 = vmatprep.mubr.f32.mxu0 0.0
        %1887 = vmatmul.mubr.f32.gmra.mrb[0].mxu0 %v1253
        %v1888 = vpop.f32.mrb[0].mxu0
        %v1889 = vadd.f32 %v1599, %v1888
        %v1890 = vpop.f32.mrb[0].mxu0
        %1891 = vmatprep.mubr.f32.mxu0 0.0
        %1892 = vmatmul.mubr.f32.gmra.mrb[0].mxu0 %v1254
        %v1893 = vpop.f32.mrb[0].mxu0
        %v1894 = vadd.f32 %v1604, %v1893
        %v1895 = vpop.f32.mrb[0].mxu0
        %1896 = vmatprep.mubr.f32.mxu0 0.0
        %1897 = vmatmul.mubr.f32.gmra.mrb[0].mxu0 %v1255
        %v1898 = vpop.f32.mrb[0].mxu0
        %v1899 = vadd.f32 %v1609, %v1898
        %v1900 = vpop.f32.mrb[0].mxu0
        %1901 = vmatprep.mubr.f32.mxu0 0.0
        %1902 = vmatmul.mubr.f32.gmra.mrb[0].mxu0 %v1256
        %v1903 = vpop.f32.mrb[0].mxu0
        %v1904 = vadd.f32 %v1614, %v1903
        %v1905 = vpop.f32.mrb[0].mxu0
        %1906 = vmatprep.mubr.f32.mxu0 0.0
        %1907 = vmatmul.mubr.f32.gmra.mrb[0].mxu0 %v1257
        %v1908 = vpop.f32.mrb[0].mxu0
        %v1909 = vadd.f32 %v1619, %v1908
        %v1910 = vpop.f32.mrb[0].mxu0
        %1911 = vmatprep.mubr.f32.mxu0 0.0
        %1912 = vmatmul.mubr.f32.gmra.mrb[0].mxu0 %v1258
        %v1913 = vpop.f32.mrb[0].mxu0
        %v1914 = vadd.f32 %v1624, %v1913
        %v1915 = vpop.f32.mrb[0].mxu0
        %1916 = vdwg.mxu0
        %v1917 = vld [vmem:[#allocation2 + $0x2] sm:$0xff]
        %v1918 = vld [vmem:[#allocation2 + $0xa] sm:$0xff]
        %v1919 = vld [vmem:[#allocation2 + $0x12] sm:$0xff]
        %v1920 = vld [vmem:[#allocation2 + $0x1a] sm:$0xff]
        %v1921 = vld [vmem:[#allocation2 + $0x22] sm:$0xff]
        %v1922 = vld [vmem:[#allocation2 + $0x2a] sm:$0xff]
        %v1923 = vld [vmem:[#allocation2 + $0x32] sm:$0xff]
        %v1924 = vld [vmem:[#allocation2 + $0x3a] sm:$0xff]
        %v1925 = vld [vmem:[#allocation2 + $0x42] sm:$0xff]
        %v1926 = vld [vmem:[#allocation2 + $0x4a] sm:$0xff]
        %v1927 = vld [vmem:[#allocation2 + $0x52] sm:$0xff]
        %v1928 = vld [vmem:[#allocation2 + $0x5a] sm:$0xff]
        %v1929 = vld [vmem:[#allocation2 + $0x62] sm:$0xff]
        %v1930 = vld [vmem:[#allocation2 + $0x6a] sm:$0xff]
        %v1931 = vld [vmem:[#allocation2 + $0x72] sm:$0xff]
        %v1932 = vld [vmem:[#allocation2 + $0x7a] sm:$0xff]
        %v1933 = vld [vmem:[#allocation2 + $0x82] sm:$0xff]
        %v1934 = vld [vmem:[#allocation2 + $0x8a] sm:$0xff]
        %v1935 = vld [vmem:[#allocation2 + $0x92] sm:$0xff]
        %v1936 = vld [vmem:[#allocation2 + $0x9a] sm:$0xff]
        %v1937 = vld [vmem:[#allocation2 + $0xa2] sm:$0xff]
        %v1938 = vld [vmem:[#allocation2 + $0xaa] sm:$0xff]
        %v1939 = vld [vmem:[#allocation2 + $0xb2] sm:$0xff]
        %v1940 = vld [vmem:[#allocation2 + $0xba] sm:$0xff]
        %v1941 = vld [vmem:[#allocation2 + $0xc2] sm:$0xff]
        %v1942 = vld [vmem:[#allocation2 + $0xca] sm:$0xff]
        %v1943 = vld [vmem:[#allocation2 + $0xd2] sm:$0xff]
        %v1944 = vld [vmem:[#allocation2 + $0xda] sm:$0xff]
        %v1945 = vld [vmem:[#allocation2 + $0xe2] sm:$0xff]
        %v1946 = vld [vmem:[#allocation2 + $0xea] sm:$0xff]
        %v1947 = vld [vmem:[#allocation2 + $0xf2] sm:$0xff]
        %v1948 = vld [vmem:[#allocation2 + $0xfa] sm:$0xff]
        %v1949 = vld [vmem:[#allocation2 + $0x102] sm:$0xff]
        %v1950 = vld [vmem:[#allocation2 + $0x10a] sm:$0xff]
        %v1951 = vld [vmem:[#allocation2 + $0x112] sm:$0xff]
        %v1952 = vld [vmem:[#allocation2 + $0x11a] sm:$0xff]
        %v1953 = vld [vmem:[#allocation2 + $0x122] sm:$0xff]
        %v1954 = vld [vmem:[#allocation2 + $0x12a] sm:$0xff]
        %v1955 = vld [vmem:[#allocation2 + $0x132] sm:$0xff]
        %v1956 = vld [vmem:[#allocation2 + $0x13a] sm:$0xff]
        %v1957 = vld [vmem:[#allocation2 + $0x142] sm:$0xff]
        %v1958 = vld [vmem:[#allocation2 + $0x14a] sm:$0xff]
        %v1959 = vld [vmem:[#allocation2 + $0x152] sm:$0xff]
        %v1960 = vld [vmem:[#allocation2 + $0x15a] sm:$0xff]
        %v1961 = vld [vmem:[#allocation2 + $0x162] sm:$0xff]
        %s1962 = scalar_lea.vmem [#allocation6], 256
        %v1963 = vld [vmem:[%s1962] sm:$0xff]
        %v1964 = vld [vmem:[%s1962 + $0x8] sm:$0xff]
        %v1965 = vld [vmem:[%s1962 + $0x10] sm:$0xff]
        %v1966 = vld [vmem:[%s1962 + $0x18] sm:$0xff]
        %v1967 = vld [vmem:[%s1962 + $0x20] sm:$0xff]
        %v1968 = vld [vmem:[%s1962 + $0x28] sm:$0xff]
        %v1969 = vld [vmem:[%s1962 + $0x30] sm:$0xff]
        %v1970 = vld [vmem:[%s1962 + $0x38] sm:$0xff]
        %v1971 = vld [vmem:[%s1962 + $0x40] sm:$0xff]
        %v1972 = vld [vmem:[%s1962 + $0x48] sm:$0xff]
        %v1973 = vld [vmem:[%s1962 + $0x50] sm:$0xff]
        %v1974 = vld [vmem:[%s1962 + $0x58] sm:$0xff]
        %v1975 = vld [vmem:[%s1962 + $0x60] sm:$0xff]
        %v1976 = vld [vmem:[%s1962 + $0x68] sm:$0xff]
        %v1977 = vld [vmem:[%s1962 + $0x70] sm:$0xff]
        %v1978 = vld [vmem:[%s1962 + $0x78] sm:$0xff]
        %1979 = vmatprep.subr.mxu0 0.0
        %1980 = vmatpush1.msra.mxu0 %v1963
        %1981 = vmatprep.subr.mxu0 0.0
        %1982 = vmatpush1.msra.mxu0 %v1964
        %1983 = vmatprep.subr.mxu0 0.0
        %1984 = vmatpush1.msra.mxu0 %v1965
        %1985 = vmatprep.subr.mxu0 0.0
        %1986 = vmatpush1.msra.mxu0 %v1966
        %1987 = vmatprep.subr.mxu0 0.0
        %1988 = vmatpush1.msra.mxu0 %v1967
        %1989 = vmatprep.subr.mxu0 0.0
        %1990 = vmatpush1.msra.mxu0 %v1968
        %1991 = vmatprep.subr.mxu0 0.0
        %1992 = vmatpush1.msra.mxu0 %v1969
        %1993 = vmatprep.subr.mxu0 0.0
        %1994 = vmatpush1.msra.mxu0 %v1970
        %1995 = vmatprep.subr.mxu0 0.0
        %1996 = vmatpush1.msra.mxu0 %v1971
        %1997 = vmatprep.subr.mxu0 0.0
        %1998 = vmatpush1.msra.mxu0 %v1972
        %1999 = vmatprep.subr.mxu0 0.0
        %2000 = vmatpush1.msra.mxu0 %v1973
        %2001 = vmatprep.subr.mxu0 0.0
        %2002 = vmatpush1.msra.mxu0 %v1974
        %2003 = vmatprep.subr.mxu0 0.0
        %2004 = vmatpush1.msra.mxu0 %v1975
        %2005 = vmatprep.subr.mxu0 0.0
        %2006 = vmatpush1.msra.mxu0 %v1976
        %2007 = vmatprep.subr.mxu0 0.0
        %2008 = vmatpush1.msra.mxu0 %v1977
        %2009 = vmatprep.subr.mxu0 0.0
        %2010 = vmatpush1.msra.mxu0 %v1978
        %2011 = vmatprep.subr.mxu0 0.0
        %2012 = vmatpush1.msra.mxu0 0.0
        %2013 = vmatprep.subr.mxu0 0.0
        %2014 = vmatpush1.msra.mxu0 0.0
        %2015 = vmatprep.subr.mxu0 0.0
        %2016 = vmatpush1.msra.mxu0 0.0
        %2017 = vmatprep.subr.mxu0 0.0
        %2018 = vmatpush1.msra.mxu0 0.0
        %2019 = vmatprep.subr.mxu0 0.0
        %2020 = vmatpush1.msra.mxu0 0.0
        %2021 = vmatprep.subr.mxu0 0.0
        %2022 = vmatpush1.msra.mxu0 0.0
        %2023 = vmatprep.subr.mxu0 0.0
        %2024 = vmatpush1.msra.mxu0 0.0
        %2025 = vmatprep.subr.mxu0 0.0
        %2026 = vmatpush1.msra.mxu0 0.0
        %2027 = vmatprep.subr.mxu0 0.0
        %2028 = vmatpush1.msra.mxu0 0.0
        %2029 = vmatprep.subr.mxu0 0.0
        %2030 = vmatpush1.msra.mxu0 0.0
        %2031 = vmatprep.subr.mxu0 0.0
        %2032 = vmatpush1.msra.mxu0 0.0
        %2033 = vmatprep.subr.mxu0 0.0
        %2034 = vmatpush1.msra.mxu0 0.0
        %2035 = vmatprep.subr.mxu0 0.0
        %2036 = vmatpush1.msra.mxu0 0.0
        %2037 = vmatprep.subr.mxu0 0.0
        %2038 = vmatpush1.msra.mxu0 0.0
        %2039 = vmatprep.subr.mxu0 0.0
        %2040 = vmatpush1.msra.mxu0 0.0
        %2041 = vmatprep.subr.mxu0 0.0
        %2042 = vmatpush1.msra.mxu0 0.0
        %2043 = vmatprep.mubr.f32.mxu0 0.0
        %2044 = vmatmul.mubr.f32.gmra.mrb[0].mxu0 %v1917
        %v2045 = vpop.f32.mrb[0].mxu0
        %v2046 = vadd.f32 0.0, %v2045
        %v2047 = vpop.f32.mrb[0].mxu0
        %2048 = vmatprep.mubr.f32.mxu0 0.0
        %2049 = vmatmul.mubr.f32.gmra.mrb[0].mxu0 %v1918
        %v2050 = vpop.f32.mrb[0].mxu0
        %v2051 = vadd.f32 0.0, %v2050
        %v2052 = vpop.f32.mrb[0].mxu0
        %2053 = vmatprep.mubr.f32.mxu0 0.0
        %2054 = vmatmul.mubr.f32.gmra.mrb[0].mxu0 %v1919
        %v2055 = vpop.f32.mrb[0].mxu0
        %v2056 = vadd.f32 0.0, %v2055
        %v2057 = vpop.f32.mrb[0].mxu0
        %2058 = vmatprep.mubr.f32.mxu0 0.0
        %2059 = vmatmul.mubr.f32.gmra.mrb[0].mxu0 %v1920
        %v2060 = vpop.f32.mrb[0].mxu0
        %v2061 = vadd.f32 0.0, %v2060
        %v2062 = vpop.f32.mrb[0].mxu0
        %2063 = vmatprep.mubr.f32.mxu0 0.0
        %2064 = vmatmul.mubr.f32.gmra.mrb[0].mxu0 %v1921
        %v2065 = vpop.f32.mrb[0].mxu0
        %v2066 = vadd.f32 0.0, %v2065
        %v2067 = vpop.f32.mrb[0].mxu0
        %2068 = vmatprep.mubr.f32.mxu0 0.0
        %2069 = vmatmul.mubr.f32.gmra.mrb[0].mxu0 %v1922
        %v2070 = vpop.f32.mrb[0].mxu0
        %v2071 = vadd.f32 0.0, %v2070
        %v2072 = vpop.f32.mrb[0].mxu0
        %2073 = vmatprep.mubr.f32.mxu0 0.0
        %2074 = vmatmul.mubr.f32.gmra.mrb[0].mxu0 %v1923
        %v2075 = vpop.f32.mrb[0].mxu0
        %v2076 = vadd.f32 0.0, %v2075
        %v2077 = vpop.f32.mrb[0].mxu0
        %2078 = vmatprep.mubr.f32.mxu0 0.0
        %2079 = vmatmul.mubr.f32.gmra.mrb[0].mxu0 %v1924
        %v2080 = vpop.f32.mrb[0].mxu0
        %v2081 = vadd.f32 0.0, %v2080
        %v2082 = vpop.f32.mrb[0].mxu0
        %2083 = vmatprep.mubr.f32.mxu0 0.0
        %2084 = vmatmul.mubr.f32.gmra.mrb[0].mxu0 %v1925
        %v2085 = vpop.f32.mrb[0].mxu0
        %v2086 = vadd.f32 0.0, %v2085
        %v2087 = vpop.f32.mrb[0].mxu0
        %2088 = vmatprep.mubr.f32.mxu0 0.0
        %2089 = vmatmul.mubr.f32.gmra.mrb[0].mxu0 %v1926
        %v2090 = vpop.f32.mrb[0].mxu0
        %v2091 = vadd.f32 0.0, %v2090
        %v2092 = vpop.f32.mrb[0].mxu0
        %2093 = vmatprep.mubr.f32.mxu0 0.0
        %2094 = vmatmul.mubr.f32.gmra.mrb[0].mxu0 %v1927
        %v2095 = vpop.f32.mrb[0].mxu0
        %v2096 = vadd.f32 0.0, %v2095
        %v2097 = vpop.f32.mrb[0].mxu0
        %2098 = vmatprep.mubr.f32.mxu0 0.0
        %2099 = vmatmul.mubr.f32.gmra.mrb[0].mxu0 %v1928
        %v2100 = vpop.f32.mrb[0].mxu0
        %v2101 = vadd.f32 0.0, %v2100
        %v2102 = vpop.f32.mrb[0].mxu0
        %2103 = vmatprep.mubr.f32.mxu0 0.0
        %2104 = vmatmul.mubr.f32.gmra.mrb[0].mxu0 %v1929
        %v2105 = vpop.f32.mrb[0].mxu0
        %v2106 = vadd.f32 0.0, %v2105
        %v2107 = vpop.f32.mrb[0].mxu0
        %2108 = vmatprep.mubr.f32.mxu0 0.0
        %2109 = vmatmul.mubr.f32.gmra.mrb[0].mxu0 %v1930
        %v2110 = vpop.f32.mrb[0].mxu0
        %v2111 = vadd.f32 0.0, %v2110
        %v2112 = vpop.f32.mrb[0].mxu0
        %2113 = vmatprep.mubr.f32.mxu0 0.0
        %2114 = vmatmul.mubr.f32.gmra.mrb[0].mxu0 %v1931
        %v2115 = vpop.f32.mrb[0].mxu0
        %v2116 = vadd.f32 0.0, %v2115
        %v2117 = vpop.f32.mrb[0].mxu0
        %2118 = vmatprep.mubr.f32.mxu0 0.0
        %2119 = vmatmul.mubr.f32.gmra.mrb[0].mxu0 %v1932
        %v2120 = vpop.f32.mrb[0].mxu0
        %v2121 = vadd.f32 0.0, %v2120
        %v2122 = vpop.f32.mrb[0].mxu0
        %2123 = vmatprep.mubr.f32.mxu0 0.0
        %2124 = vmatmul.mubr.f32.gmra.mrb[0].mxu0 %v1933
        %v2125 = vpop.f32.mrb[0].mxu0
        %v2126 = vadd.f32 0.0, %v2125
        %v2127 = vpop.f32.mrb[0].mxu0
        %2128 = vmatprep.mubr.f32.mxu0 0.0
        %2129 = vmatmul.mubr.f32.gmra.mrb[0].mxu0 %v1934
        %v2130 = vpop.f32.mrb[0].mxu0
        %v2131 = vadd.f32 0.0, %v2130
        %v2132 = vpop.f32.mrb[0].mxu0
        %2133 = vmatprep.mubr.f32.mxu0 0.0
        %2134 = vmatmul.mubr.f32.gmra.mrb[0].mxu0 %v1935
        %v2135 = vpop.f32.mrb[0].mxu0
        %v2136 = vadd.f32 0.0, %v2135
        %v2137 = vpop.f32.mrb[0].mxu0
        %2138 = vmatprep.mubr.f32.mxu0 0.0
        %2139 = vmatmul.mubr.f32.gmra.mrb[0].mxu0 %v1936
        %v2140 = vpop.f32.mrb[0].mxu0
        %v2141 = vadd.f32 0.0, %v2140
        %v2142 = vpop.f32.mrb[0].mxu0
        %2143 = vmatprep.mubr.f32.mxu0 0.0
        %2144 = vmatmul.mubr.f32.gmra.mrb[0].mxu0 %v1937
        %v2145 = vpop.f32.mrb[0].mxu0
        %v2146 = vadd.f32 0.0, %v2145
        %v2147 = vpop.f32.mrb[0].mxu0
        %2148 = vmatprep.mubr.f32.mxu0 0.0
        %2149 = vmatmul.mubr.f32.gmra.mrb[0].mxu0 %v1938
        %v2150 = vpop.f32.mrb[0].mxu0
        %v2151 = vadd.f32 0.0, %v2150
        %v2152 = vpop.f32.mrb[0].mxu0
        %2153 = vmatprep.mubr.f32.mxu0 0.0
        %2154 = vmatmul.mubr.f32.gmra.mrb[0].mxu0 %v1939
        %v2155 = vpop.f32.mrb[0].mxu0
        %v2156 = vadd.f32 0.0, %v2155
        %v2157 = vpop.f32.mrb[0].mxu0
        %2158 = vmatprep.mubr.f32.mxu0 0.0
        %2159 = vmatmul.mubr.f32.gmra.mrb[0].mxu0 %v1940
        %v2160 = vpop.f32.mrb[0].mxu0
        %v2161 = vadd.f32 0.0, %v2160
        %v2162 = vpop.f32.mrb[0].mxu0
        %2163 = vmatprep.mubr.f32.mxu0 0.0
        %2164 = vmatmul.mubr.f32.gmra.mrb[0].mxu0 %v1941
        %v2165 = vpop.f32.mrb[0].mxu0
        %v2166 = vadd.f32 0.0, %v2165
        %v2167 = vpop.f32.mrb[0].mxu0
        %2168 = vmatprep.mubr.f32.mxu0 0.0
        %2169 = vmatmul.mubr.f32.gmra.mrb[0].mxu0 %v1942
        %v2170 = vpop.f32.mrb[0].mxu0
        %v2171 = vadd.f32 0.0, %v2170
        %v2172 = vpop.f32.mrb[0].mxu0
        %2173 = vmatprep.mubr.f32.mxu0 0.0
        %2174 = vmatmul.mubr.f32.gmra.mrb[0].mxu0 %v1943
        %v2175 = vpop.f32.mrb[0].mxu0
        %v2176 = vadd.f32 0.0, %v2175
        %v2177 = vpop.f32.mrb[0].mxu0
        %2178 = vmatprep.mubr.f32.mxu0 0.0
        %2179 = vmatmul.mubr.f32.gmra.mrb[0].mxu0 %v1944
        %v2180 = vpop.f32.mrb[0].mxu0
        %v2181 = vadd.f32 0.0, %v2180
        %v2182 = vpop.f32.mrb[0].mxu0
        %2183 = vmatprep.mubr.f32.mxu0 0.0
        %2184 = vmatmul.mubr.f32.gmra.mrb[0].mxu0 %v1945
        %v2185 = vpop.f32.mrb[0].mxu0
        %v2186 = vadd.f32 0.0, %v2185
        %v2187 = vpop.f32.mrb[0].mxu0
        %2188 = vmatprep.mubr.f32.mxu0 0.0
        %2189 = vmatmul.mubr.f32.gmra.mrb[0].mxu0 %v1946
        %v2190 = vpop.f32.mrb[0].mxu0
        %v2191 = vadd.f32 0.0, %v2190
        %v2192 = vpop.f32.mrb[0].mxu0
        %2193 = vmatprep.mubr.f32.mxu0 0.0
        %2194 = vmatmul.mubr.f32.gmra.mrb[0].mxu0 %v1947
        %v2195 = vpop.f32.mrb[0].mxu0
        %v2196 = vadd.f32 0.0, %v2195
        %v2197 = vpop.f32.mrb[0].mxu0
        %2198 = vmatprep.mubr.f32.mxu0 0.0
        %2199 = vmatmul.mubr.f32.gmra.mrb[0].mxu0 %v1948
        %v2200 = vpop.f32.mrb[0].mxu0
        %v2201 = vadd.f32 0.0, %v2200
        %v2202 = vpop.f32.mrb[0].mxu0
        %2203 = vmatprep.mubr.f32.mxu0 0.0
        %2204 = vmatmul.mubr.f32.gmra.mrb[0].mxu0 %v1949
        %v2205 = vpop.f32.mrb[0].mxu0
        %v2206 = vadd.f32 0.0, %v2205
        %v2207 = vpop.f32.mrb[0].mxu0
        %2208 = vmatprep.mubr.f32.mxu0 0.0
        %2209 = vmatmul.mubr.f32.gmra.mrb[0].mxu0 %v1950
        %v2210 = vpop.f32.mrb[0].mxu0
        %v2211 = vadd.f32 0.0, %v2210
        %v2212 = vpop.f32.mrb[0].mxu0
        %2213 = vmatprep.mubr.f32.mxu0 0.0
        %2214 = vmatmul.mubr.f32.gmra.mrb[0].mxu0 %v1951
        %v2215 = vpop.f32.mrb[0].mxu0
        %v2216 = vadd.f32 0.0, %v2215
        %v2217 = vpop.f32.mrb[0].mxu0
        %2218 = vmatprep.mubr.f32.mxu0 0.0
        %2219 = vmatmul.mubr.f32.gmra.mrb[0].mxu0 %v1952
        %v2220 = vpop.f32.mrb[0].mxu0
        %v2221 = vadd.f32 0.0, %v2220
        %v2222 = vpop.f32.mrb[0].mxu0
        %2223 = vmatprep.mubr.f32.mxu0 0.0
        %2224 = vmatmul.mubr.f32.gmra.mrb[0].mxu0 %v1953
        %v2225 = vpop.f32.mrb[0].mxu0
        %v2226 = vadd.f32 0.0, %v2225
        %v2227 = vpop.f32.mrb[0].mxu0
        %2228 = vmatprep.mubr.f32.mxu0 0.0
        %2229 = vmatmul.mubr.f32.gmra.mrb[0].mxu0 %v1954
        %v2230 = vpop.f32.mrb[0].mxu0
        %v2231 = vadd.f32 0.0, %v2230
        %v2232 = vpop.f32.mrb[0].mxu0
        %2233 = vmatprep.mubr.f32.mxu0 0.0
        %2234 = vmatmul.mubr.f32.gmra.mrb[0].mxu0 %v1955
        %v2235 = vpop.f32.mrb[0].mxu0
        %v2236 = vadd.f32 0.0, %v2235
        %v2237 = vpop.f32.mrb[0].mxu0
        %2238 = vmatprep.mubr.f32.mxu0 0.0
        %2239 = vmatmul.mubr.f32.gmra.mrb[0].mxu0 %v1956
        %v2240 = vpop.f32.mrb[0].mxu0
        %v2241 = vadd.f32 0.0, %v2240
        %v2242 = vpop.f32.mrb[0].mxu0
        %2243 = vmatprep.mubr.f32.mxu0 0.0
        %2244 = vmatmul.mubr.f32.gmra.mrb[0].mxu0 %v1957
        %v2245 = vpop.f32.mrb[0].mxu0
        %v2246 = vadd.f32 0.0, %v2245
        %v2247 = vpop.f32.mrb[0].mxu0
        %2248 = vmatprep.mubr.f32.mxu0 0.0
        %2249 = vmatmul.mubr.f32.gmra.mrb[0].mxu0 %v1958
        %v2250 = vpop.f32.mrb[0].mxu0
        %v2251 = vadd.f32 0.0, %v2250
        %v2252 = vpop.f32.mrb[0].mxu0
        %2253 = vmatprep.mubr.f32.mxu0 0.0
        %2254 = vmatmul.mubr.f32.gmra.mrb[0].mxu0 %v1959
        %v2255 = vpop.f32.mrb[0].mxu0
        %v2256 = vadd.f32 0.0, %v2255
        %v2257 = vpop.f32.mrb[0].mxu0
        %2258 = vmatprep.mubr.f32.mxu0 0.0
        %2259 = vmatmul.mubr.f32.gmra.mrb[0].mxu0 %v1960
        %v2260 = vpop.f32.mrb[0].mxu0
        %v2261 = vadd.f32 0.0, %v2260
        %v2262 = vpop.f32.mrb[0].mxu0
        %2263 = vmatprep.mubr.f32.mxu0 0.0
        %2264 = vmatmul.mubr.f32.gmra.mrb[0].mxu0 %v1961
        %v2265 = vpop.f32.mrb[0].mxu0
        %v2266 = vadd.f32 0.0, %v2265
        %v2267 = vpop.f32.mrb[0].mxu0
        %2268 = vdwg.mxu0
        %v2269 = vadd.f32 %v1694, %v2046
        %v2270 = vadd.f32 %v1699, %v2051
        %v2271 = vadd.f32 %v1704, %v2056
        %v2272 = vadd.f32 %v1709, %v2061
        %v2273 = vadd.f32 %v1714, %v2066
        %v2274 = vadd.f32 %v1719, %v2071
        %v2275 = vadd.f32 %v1724, %v2076
        %v2276 = vadd.f32 %v1729, %v2081
        %v2277 = vadd.f32 %v1734, %v2086
        %v2278 = vadd.f32 %v1739, %v2091
        %v2279 = vadd.f32 %v1744, %v2096
        %v2280 = vadd.f32 %v1749, %v2101
        %v2281 = vadd.f32 %v1754, %v2106
        %v2282 = vadd.f32 %v1759, %v2111
        %v2283 = vadd.f32 %v1764, %v2116
        %v2284 = vadd.f32 %v1769, %v2121
        %v2285 = vadd.f32 %v1774, %v2126
        %v2286 = vadd.f32 %v1779, %v2131
        %v2287 = vadd.f32 %v1784, %v2136
        %v2288 = vadd.f32 %v1789, %v2141
        %v2289 = vadd.f32 %v1794, %v2146
        %v2290 = vadd.f32 %v1799, %v2151
        %v2291 = vadd.f32 %v1804, %v2156
        %v2292 = vadd.f32 %v1809, %v2161
        %v2293 = vadd.f32 %v1814, %v2166
        %v2294 = vadd.f32 %v1819, %v2171
        %v2295 = vadd.f32 %v1824, %v2176
        %v2296 = vadd.f32 %v1829, %v2181
        %v2297 = vadd.f32 %v1834, %v2186
        %v2298 = vadd.f32 %v1839, %v2191
        %v2299 = vadd.f32 %v1844, %v2196
        %v2300 = vadd.f32 %v1849, %v2201
        %v2301 = vadd.f32 %v1854, %v2206
        %v2302 = vadd.f32 %v1859, %v2211
        %v2303 = vadd.f32 %v1864, %v2216
        %v2304 = vadd.f32 %v1869, %v2221
        %v2305 = vadd.f32 %v1874, %v2226
        %v2306 = vadd.f32 %v1879, %v2231
        %v2307 = vadd.f32 %v1884, %v2236
        %v2308 = vadd.f32 %v1889, %v2241
        %v2309 = vadd.f32 %v1894, %v2246
        %v2310 = vadd.f32 %v1899, %v2251
        %v2311 = vadd.f32 %v1904, %v2256
        %v2312 = vadd.f32 %v1909, %v2261
        %v2313 = vadd.f32 %v1914, %v2266
        %v2314 = vld [vmem:[#allocation2 + $0x14] sm:$0xff]
        %v2315 = vld [vmem:[#allocation2 + $0x1c] sm:$0xff]
        %v2316 = vld [vmem:[#allocation2 + $0x24] sm:$0xff]
        %v2317 = vld [vmem:[#allocation2 + $0x2c] sm:$0xff]
        %v2318 = vld [vmem:[#allocation2 + $0x34] sm:$0xff]
        %v2319 = vld [vmem:[#allocation2 + $0x3c] sm:$0xff]
        %v2320 = vld [vmem:[#allocation2 + $0x44] sm:$0xff]
        %v2321 = vld [vmem:[#allocation2 + $0x4c] sm:$0xff]
        %v2322 = vld [vmem:[#allocation2 + $0x54] sm:$0xff]
        %v2323 = vld [vmem:[#allocation2 + $0x5c] sm:$0xff]
        %v2324 = vld [vmem:[#allocation2 + $0x64] sm:$0xff]
        %v2325 = vld [vmem:[#allocation2 + $0x6c] sm:$0xff]
        %v2326 = vld [vmem:[#allocation2 + $0x74] sm:$0xff]
        %v2327 = vld [vmem:[#allocation2 + $0x7c] sm:$0xff]
        %v2328 = vld [vmem:[#allocation2 + $0x84] sm:$0xff]
        %v2329 = vld [vmem:[#allocation2 + $0x8c] sm:$0xff]
        %v2330 = vld [vmem:[#allocation2 + $0x94] sm:$0xff]
        %v2331 = vld [vmem:[#allocation2 + $0x9c] sm:$0xff]
        %v2332 = vld [vmem:[#allocation2 + $0xa4] sm:$0xff]
        %v2333 = vld [vmem:[#allocation2 + $0xac] sm:$0xff]
        %v2334 = vld [vmem:[#allocation2 + $0xb4] sm:$0xff]
        %v2335 = vld [vmem:[#allocation2 + $0xbc] sm:$0xff]
        %v2336 = vld [vmem:[#allocation2 + $0xc4] sm:$0xff]
        %v2337 = vld [vmem:[#allocation2 + $0xcc] sm:$0xff]
        %v2338 = vld [vmem:[#allocation2 + $0xd4] sm:$0xff]
        %v2339 = vld [vmem:[#allocation2 + $0xdc] sm:$0xff]
        %v2340 = vld [vmem:[#allocation2 + $0xe4] sm:$0xff]
        %v2341 = vld [vmem:[#allocation2 + $0xec] sm:$0xff]
        %v2342 = vld [vmem:[#allocation2 + $0xf4] sm:$0xff]
        %v2343 = vld [vmem:[#allocation2 + $0xfc] sm:$0xff]
        %v2344 = vld [vmem:[#allocation2 + $0x104] sm:$0xff]
        %v2345 = vld [vmem:[#allocation2 + $0x10c] sm:$0xff]
        %v2346 = vld [vmem:[#allocation2 + $0x114] sm:$0xff]
        %v2347 = vld [vmem:[#allocation2 + $0x11c] sm:$0xff]
        %v2348 = vld [vmem:[#allocation2 + $0x124] sm:$0xff]
        %v2349 = vld [vmem:[#allocation2 + $0x12c] sm:$0xff]
        %v2350 = vld [vmem:[#allocation2 + $0x134] sm:$0xff]
        %v2351 = vld [vmem:[#allocation2 + $0x13c] sm:$0xff]
        %v2352 = vld [vmem:[#allocation2 + $0x144] sm:$0xff]
        %v2353 = vld [vmem:[#allocation2 + $0x14c] sm:$0xff]
        %v2354 = vld [vmem:[#allocation2 + $0x154] sm:$0xff]
        %v2355 = vld [vmem:[#allocation2 + $0x15c] sm:$0xff]
        %v2356 = vld [vmem:[#allocation2 + $0x164] sm:$0xff]
        %v2357 = vld [vmem:[#allocation2 + $0x16c] sm:$0xff]
        %v2358 = vld [vmem:[#allocation2 + $0x174] sm:$0xff]
        %s2359 = scalar_lea.vmem [#allocation6], 384
        %v2360 = vld [vmem:[%s2359] sm:$0xff]
        %v2361 = vld [vmem:[%s2359 + $0x8] sm:$0xff]
        %v2362 = vld [vmem:[%s2359 + $0x10] sm:$0xff]
        %v2363 = vld [vmem:[%s2359 + $0x18] sm:$0xff]
        %v2364 = vld [vmem:[%s2359 + $0x20] sm:$0xff]
        %v2365 = vld [vmem:[%s2359 + $0x28] sm:$0xff]
        %v2366 = vld [vmem:[%s2359 + $0x30] sm:$0xff]
        %v2367 = vld [vmem:[%s2359 + $0x38] sm:$0xff]
        %v2368 = vld [vmem:[%s2359 + $0x40] sm:$0xff]
        %v2369 = vld [vmem:[%s2359 + $0x48] sm:$0xff]
        %v2370 = vld [vmem:[%s2359 + $0x50] sm:$0xff]
        %v2371 = vld [vmem:[%s2359 + $0x58] sm:$0xff]
        %v2372 = vld [vmem:[%s2359 + $0x60] sm:$0xff]
        %v2373 = vld [vmem:[%s2359 + $0x68] sm:$0xff]
        %v2374 = vld [vmem:[%s2359 + $0x70] sm:$0xff]
        %v2375 = vld [vmem:[%s2359 + $0x78] sm:$0xff]
        %2376 = vmatprep.subr.mxu0 0.0
        %2377 = vmatpush1.msra.mxu0 %v2360
        %2378 = vmatprep.subr.mxu0 0.0
        %2379 = vmatpush1.msra.mxu0 %v2361
        %2380 = vmatprep.subr.mxu0 0.0
        %2381 = vmatpush1.msra.mxu0 %v2362
        %2382 = vmatprep.subr.mxu0 0.0
        %2383 = vmatpush1.msra.mxu0 %v2363
        %2384 = vmatprep.subr.mxu0 0.0
        %2385 = vmatpush1.msra.mxu0 %v2364
        %2386 = vmatprep.subr.mxu0 0.0
        %2387 = vmatpush1.msra.mxu0 %v2365
        %2388 = vmatprep.subr.mxu0 0.0
        %2389 = vmatpush1.msra.mxu0 %v2366
        %2390 = vmatprep.subr.mxu0 0.0
        %2391 = vmatpush1.msra.mxu0 %v2367
        %2392 = vmatprep.subr.mxu0 0.0
        %2393 = vmatpush1.msra.mxu0 %v2368
        %2394 = vmatprep.subr.mxu0 0.0
        %2395 = vmatpush1.msra.mxu0 %v2369
        %2396 = vmatprep.subr.mxu0 0.0
        %2397 = vmatpush1.msra.mxu0 %v2370
        %2398 = vmatprep.subr.mxu0 0.0
        %2399 = vmatpush1.msra.mxu0 %v2371
        %2400 = vmatprep.subr.mxu0 0.0
        %2401 = vmatpush1.msra.mxu0 %v2372
        %2402 = vmatprep.subr.mxu0 0.0
        %2403 = vmatpush1.msra.mxu0 %v2373
        %2404 = vmatprep.subr.mxu0 0.0
        %2405 = vmatpush1.msra.mxu0 %v2374
        %2406 = vmatprep.subr.mxu0 0.0
        %2407 = vmatpush1.msra.mxu0 %v2375
        %2408 = vmatprep.subr.mxu0 0.0
        %2409 = vmatpush1.msra.mxu0 0.0
        %2410 = vmatprep.subr.mxu0 0.0
        %2411 = vmatpush1.msra.mxu0 0.0
        %2412 = vmatprep.subr.mxu0 0.0
        %2413 = vmatpush1.msra.mxu0 0.0
        %2414 = vmatprep.subr.mxu0 0.0
        %2415 = vmatpush1.msra.mxu0 0.0
        %2416 = vmatprep.subr.mxu0 0.0
        %2417 = vmatpush1.msra.mxu0 0.0
        %2418 = vmatprep.subr.mxu0 0.0
        %2419 = vmatpush1.msra.mxu0 0.0
        %2420 = vmatprep.subr.mxu0 0.0
        %2421 = vmatpush1.msra.mxu0 0.0
        %2422 = vmatprep.subr.mxu0 0.0
        %2423 = vmatpush1.msra.mxu0 0.0
        %2424 = vmatprep.subr.mxu0 0.0
        %2425 = vmatpush1.msra.mxu0 0.0
        %2426 = vmatprep.subr.mxu0 0.0
        %2427 = vmatpush1.msra.mxu0 0.0
        %2428 = vmatprep.subr.mxu0 0.0
        %2429 = vmatpush1.msra.mxu0 0.0
        %2430 = vmatprep.subr.mxu0 0.0
        %2431 = vmatpush1.msra.mxu0 0.0
        %2432 = vmatprep.subr.mxu0 0.0
        %2433 = vmatpush1.msra.mxu0 0.0
        %2434 = vmatprep.subr.mxu0 0.0
        %2435 = vmatpush1.msra.mxu0 0.0
        %2436 = vmatprep.subr.mxu0 0.0
        %2437 = vmatpush1.msra.mxu0 0.0
        %2438 = vmatprep.subr.mxu0 0.0
        %2439 = vmatpush1.msra.mxu0 0.0
        %2440 = vmatprep.mubr.f32.mxu0 0.0
        %2441 = vmatmul.mubr.f32.gmra.mrb[0].mxu0 %v2314
        %v2442 = vpop.f32.mrb[0].mxu0
        %v2443 = vadd.f32 0.0, %v2442
        %v2444 = vpop.f32.mrb[0].mxu0
        %2445 = vmatprep.mubr.f32.mxu0 0.0
        %2446 = vmatmul.mubr.f32.gmra.mrb[0].mxu0 %v2315
        %v2447 = vpop.f32.mrb[0].mxu0
        %v2448 = vadd.f32 0.0, %v2447
        %v2449 = vpop.f32.mrb[0].mxu0
        %2450 = vmatprep.mubr.f32.mxu0 0.0
        %2451 = vmatmul.mubr.f32.gmra.mrb[0].mxu0 %v2316
        %v2452 = vpop.f32.mrb[0].mxu0
        %v2453 = vadd.f32 0.0, %v2452
        %v2454 = vpop.f32.mrb[0].mxu0
        %2455 = vmatprep.mubr.f32.mxu0 0.0
        %2456 = vmatmul.mubr.f32.gmra.mrb[0].mxu0 %v2317
        %v2457 = vpop.f32.mrb[0].mxu0
        %v2458 = vadd.f32 0.0, %v2457
        %v2459 = vpop.f32.mrb[0].mxu0
        %2460 = vmatprep.mubr.f32.mxu0 0.0
        %2461 = vmatmul.mubr.f32.gmra.mrb[0].mxu0 %v2318
        %v2462 = vpop.f32.mrb[0].mxu0
        %v2463 = vadd.f32 0.0, %v2462
        %v2464 = vpop.f32.mrb[0].mxu0
        %2465 = vmatprep.mubr.f32.mxu0 0.0
        %2466 = vmatmul.mubr.f32.gmra.mrb[0].mxu0 %v2319
        %v2467 = vpop.f32.mrb[0].mxu0
        %v2468 = vadd.f32 0.0, %v2467
        %v2469 = vpop.f32.mrb[0].mxu0
        %2470 = vmatprep.mubr.f32.mxu0 0.0
        %2471 = vmatmul.mubr.f32.gmra.mrb[0].mxu0 %v2320
        %v2472 = vpop.f32.mrb[0].mxu0
        %v2473 = vadd.f32 0.0, %v2472
        %v2474 = vpop.f32.mrb[0].mxu0
        %2475 = vmatprep.mubr.f32.mxu0 0.0
        %2476 = vmatmul.mubr.f32.gmra.mrb[0].mxu0 %v2321
        %v2477 = vpop.f32.mrb[0].mxu0
        %v2478 = vadd.f32 0.0, %v2477
        %v2479 = vpop.f32.mrb[0].mxu0
        %2480 = vmatprep.mubr.f32.mxu0 0.0
        %2481 = vmatmul.mubr.f32.gmra.mrb[0].mxu0 %v2322
        %v2482 = vpop.f32.mrb[0].mxu0
        %v2483 = vadd.f32 0.0, %v2482
        %v2484 = vpop.f32.mrb[0].mxu0
        %2485 = vmatprep.mubr.f32.mxu0 0.0
        %2486 = vmatmul.mubr.f32.gmra.mrb[0].mxu0 %v2323
        %v2487 = vpop.f32.mrb[0].mxu0
        %v2488 = vadd.f32 0.0, %v2487
        %v2489 = vpop.f32.mrb[0].mxu0
        %2490 = vmatprep.mubr.f32.mxu0 0.0
        %2491 = vmatmul.mubr.f32.gmra.mrb[0].mxu0 %v2324
        %v2492 = vpop.f32.mrb[0].mxu0
        %v2493 = vadd.f32 0.0, %v2492
        %v2494 = vpop.f32.mrb[0].mxu0
        %2495 = vmatprep.mubr.f32.mxu0 0.0
        %2496 = vmatmul.mubr.f32.gmra.mrb[0].mxu0 %v2325
        %v2497 = vpop.f32.mrb[0].mxu0
        %v2498 = vadd.f32 0.0, %v2497
        %v2499 = vpop.f32.mrb[0].mxu0
        %2500 = vmatprep.mubr.f32.mxu0 0.0
        %2501 = vmatmul.mubr.f32.gmra.mrb[0].mxu0 %v2326
        %v2502 = vpop.f32.mrb[0].mxu0
        %v2503 = vadd.f32 0.0, %v2502
        %v2504 = vpop.f32.mrb[0].mxu0
        %2505 = vmatprep.mubr.f32.mxu0 0.0
        %2506 = vmatmul.mubr.f32.gmra.mrb[0].mxu0 %v2327
        %v2507 = vpop.f32.mrb[0].mxu0
        %v2508 = vadd.f32 0.0, %v2507
        %v2509 = vpop.f32.mrb[0].mxu0
        %2510 = vmatprep.mubr.f32.mxu0 0.0
        %2511 = vmatmul.mubr.f32.gmra.mrb[0].mxu0 %v2328
        %v2512 = vpop.f32.mrb[0].mxu0
        %v2513 = vadd.f32 0.0, %v2512
        %v2514 = vpop.f32.mrb[0].mxu0
        %2515 = vmatprep.mubr.f32.mxu0 0.0
        %2516 = vmatmul.mubr.f32.gmra.mrb[0].mxu0 %v2329
        %v2517 = vpop.f32.mrb[0].mxu0
        %v2518 = vadd.f32 0.0, %v2517
        %v2519 = vpop.f32.mrb[0].mxu0
        %2520 = vmatprep.mubr.f32.mxu0 0.0
        %2521 = vmatmul.mubr.f32.gmra.mrb[0].mxu0 %v2330
        %v2522 = vpop.f32.mrb[0].mxu0
        %v2523 = vadd.f32 0.0, %v2522
        %v2524 = vpop.f32.mrb[0].mxu0
        %2525 = vmatprep.mubr.f32.mxu0 0.0
        %2526 = vmatmul.mubr.f32.gmra.mrb[0].mxu0 %v2331
        %v2527 = vpop.f32.mrb[0].mxu0
        %v2528 = vadd.f32 0.0, %v2527
        %v2529 = vpop.f32.mrb[0].mxu0
        %2530 = vmatprep.mubr.f32.mxu0 0.0
        %2531 = vmatmul.mubr.f32.gmra.mrb[0].mxu0 %v2332
        %v2532 = vpop.f32.mrb[0].mxu0
        %v2533 = vadd.f32 0.0, %v2532
        %v2534 = vpop.f32.mrb[0].mxu0
        %2535 = vmatprep.mubr.f32.mxu0 0.0
        %2536 = vmatmul.mubr.f32.gmra.mrb[0].mxu0 %v2333
        %v2537 = vpop.f32.mrb[0].mxu0
        %v2538 = vadd.f32 0.0, %v2537
        %v2539 = vpop.f32.mrb[0].mxu0
        %2540 = vmatprep.mubr.f32.mxu0 0.0
        %2541 = vmatmul.mubr.f32.gmra.mrb[0].mxu0 %v2334
        %v2542 = vpop.f32.mrb[0].mxu0
        %v2543 = vadd.f32 0.0, %v2542
        %v2544 = vpop.f32.mrb[0].mxu0
        %2545 = vmatprep.mubr.f32.mxu0 0.0
        %2546 = vmatmul.mubr.f32.gmra.mrb[0].mxu0 %v2335
        %v2547 = vpop.f32.mrb[0].mxu0
        %v2548 = vadd.f32 0.0, %v2547
        %v2549 = vpop.f32.mrb[0].mxu0
        %2550 = vmatprep.mubr.f32.mxu0 0.0
        %2551 = vmatmul.mubr.f32.gmra.mrb[0].mxu0 %v2336
        %v2552 = vpop.f32.mrb[0].mxu0
        %v2553 = vadd.f32 0.0, %v2552
        %v2554 = vpop.f32.mrb[0].mxu0
        %2555 = vmatprep.mubr.f32.mxu0 0.0
        %2556 = vmatmul.mubr.f32.gmra.mrb[0].mxu0 %v2337
        %v2557 = vpop.f32.mrb[0].mxu0
        %v2558 = vadd.f32 0.0, %v2557
        %v2559 = vpop.f32.mrb[0].mxu0
        %2560 = vmatprep.mubr.f32.mxu0 0.0
        %2561 = vmatmul.mubr.f32.gmra.mrb[0].mxu0 %v2338
        %v2562 = vpop.f32.mrb[0].mxu0
        %v2563 = vadd.f32 0.0, %v2562
        %v2564 = vpop.f32.mrb[0].mxu0
        %2565 = vmatprep.mubr.f32.mxu0 0.0
        %2566 = vmatmul.mubr.f32.gmra.mrb[0].mxu0 %v2339
        %v2567 = vpop.f32.mrb[0].mxu0
        %v2568 = vadd.f32 0.0, %v2567
        %v2569 = vpop.f32.mrb[0].mxu0
        %2570 = vmatprep.mubr.f32.mxu0 0.0
        %2571 = vmatmul.mubr.f32.gmra.mrb[0].mxu0 %v2340
        %v2572 = vpop.f32.mrb[0].mxu0
        %v2573 = vadd.f32 0.0, %v2572
        %v2574 = vpop.f32.mrb[0].mxu0
        %2575 = vmatprep.mubr.f32.mxu0 0.0
        %2576 = vmatmul.mubr.f32.gmra.mrb[0].mxu0 %v2341
        %v2577 = vpop.f32.mrb[0].mxu0
        %v2578 = vadd.f32 0.0, %v2577
        %v2579 = vpop.f32.mrb[0].mxu0
        %2580 = vmatprep.mubr.f32.mxu0 0.0
        %2581 = vmatmul.mubr.f32.gmra.mrb[0].mxu0 %v2342
        %v2582 = vpop.f32.mrb[0].mxu0
        %v2583 = vadd.f32 0.0, %v2582
        %v2584 = vpop.f32.mrb[0].mxu0
        %2585 = vmatprep.mubr.f32.mxu0 0.0
        %2586 = vmatmul.mubr.f32.gmra.mrb[0].mxu0 %v2343
        %v2587 = vpop.f32.mrb[0].mxu0
        %v2588 = vadd.f32 0.0, %v2587
        %v2589 = vpop.f32.mrb[0].mxu0
        %2590 = vmatprep.mubr.f32.mxu0 0.0
        %2591 = vmatmul.mubr.f32.gmra.mrb[0].mxu0 %v2344
        %v2592 = vpop.f32.mrb[0].mxu0
        %v2593 = vadd.f32 0.0, %v2592
        %v2594 = vpop.f32.mrb[0].mxu0
        %2595 = vmatprep.mubr.f32.mxu0 0.0
        %2596 = vmatmul.mubr.f32.gmra.mrb[0].mxu0 %v2345
        %v2597 = vpop.f32.mrb[0].mxu0
        %v2598 = vadd.f32 0.0, %v2597
        %v2599 = vpop.f32.mrb[0].mxu0
        %2600 = vmatprep.mubr.f32.mxu0 0.0
        %2601 = vmatmul.mubr.f32.gmra.mrb[0].mxu0 %v2346
        %v2602 = vpop.f32.mrb[0].mxu0
        %v2603 = vadd.f32 0.0, %v2602
        %v2604 = vpop.f32.mrb[0].mxu0
        %2605 = vmatprep.mubr.f32.mxu0 0.0
        %2606 = vmatmul.mubr.f32.gmra.mrb[0].mxu0 %v2347
        %v2607 = vpop.f32.mrb[0].mxu0
        %v2608 = vadd.f32 0.0, %v2607
        %v2609 = vpop.f32.mrb[0].mxu0
        %2610 = vmatprep.mubr.f32.mxu0 0.0
        %2611 = vmatmul.mubr.f32.gmra.mrb[0].mxu0 %v2348
        %v2612 = vpop.f32.mrb[0].mxu0
        %v2613 = vadd.f32 0.0, %v2612
        %v2614 = vpop.f32.mrb[0].mxu0
        %2615 = vmatprep.mubr.f32.mxu0 0.0
        %2616 = vmatmul.mubr.f32.gmra.mrb[0].mxu0 %v2349
        %v2617 = vpop.f32.mrb[0].mxu0
        %v2618 = vadd.f32 0.0, %v2617
        %v2619 = vpop.f32.mrb[0].mxu0
        %2620 = vmatprep.mubr.f32.mxu0 0.0
        %2621 = vmatmul.mubr.f32.gmra.mrb[0].mxu0 %v2350
        %v2622 = vpop.f32.mrb[0].mxu0
        %v2623 = vadd.f32 0.0, %v2622
        %v2624 = vpop.f32.mrb[0].mxu0
        %2625 = vmatprep.mubr.f32.mxu0 0.0
        %2626 = vmatmul.mubr.f32.gmra.mrb[0].mxu0 %v2351
        %v2627 = vpop.f32.mrb[0].mxu0
        %v2628 = vadd.f32 0.0, %v2627
        %v2629 = vpop.f32.mrb[0].mxu0
        %2630 = vmatprep.mubr.f32.mxu0 0.0
        %2631 = vmatmul.mubr.f32.gmra.mrb[0].mxu0 %v2352
        %v2632 = vpop.f32.mrb[0].mxu0
        %v2633 = vadd.f32 0.0, %v2632
        %v2634 = vpop.f32.mrb[0].mxu0
        %2635 = vmatprep.mubr.f32.mxu0 0.0
        %2636 = vmatmul.mubr.f32.gmra.mrb[0].mxu0 %v2353
        %v2637 = vpop.f32.mrb[0].mxu0
        %v2638 = vadd.f32 0.0, %v2637
        %v2639 = vpop.f32.mrb[0].mxu0
        %2640 = vmatprep.mubr.f32.mxu0 0.0
        %2641 = vmatmul.mubr.f32.gmra.mrb[0].mxu0 %v2354
        %v2642 = vpop.f32.mrb[0].mxu0
        %v2643 = vadd.f32 0.0, %v2642
        %v2644 = vpop.f32.mrb[0].mxu0
        %2645 = vmatprep.mubr.f32.mxu0 0.0
        %2646 = vmatmul.mubr.f32.gmra.mrb[0].mxu0 %v2355
        %v2647 = vpop.f32.mrb[0].mxu0
        %v2648 = vadd.f32 0.0, %v2647
        %v2649 = vpop.f32.mrb[0].mxu0
        %2650 = vmatprep.mubr.f32.mxu0 0.0
        %2651 = vmatmul.mubr.f32.gmra.mrb[0].mxu0 %v2356
        %v2652 = vpop.f32.mrb[0].mxu0
        %v2653 = vadd.f32 0.0, %v2652
        %v2654 = vpop.f32.mrb[0].mxu0
        %2655 = vmatprep.mubr.f32.mxu0 0.0
        %2656 = vmatmul.mubr.f32.gmra.mrb[0].mxu0 %v2357
        %v2657 = vpop.f32.mrb[0].mxu0
        %v2658 = vadd.f32 0.0, %v2657
        %v2659 = vpop.f32.mrb[0].mxu0
        %2660 = vmatprep.mubr.f32.mxu0 0.0
        %2661 = vmatmul.mubr.f32.gmra.mrb[0].mxu0 %v2358
        %v2662 = vpop.f32.mrb[0].mxu0
        %v2663 = vadd.f32 0.0, %v2662
        %v2664 = vpop.f32.mrb[0].mxu0
        %2665 = vdwg.mxu0
        %v2666 = vadd.f32 %v2269, %v2443
        %v2667 = vadd.f32 %v2270, %v2448
        %v2668 = vadd.f32 %v2271, %v2453
        %v2669 = vadd.f32 %v2272, %v2458
        %v2670 = vadd.f32 %v2273, %v2463
        %v2671 = vadd.f32 %v2274, %v2468
        %v2672 = vadd.f32 %v2275, %v2473
        %v2673 = vadd.f32 %v2276, %v2478
        %v2674 = vadd.f32 %v2277, %v2483
        %v2675 = vadd.f32 %v2278, %v2488
        %v2676 = vadd.f32 %v2279, %v2493
        %v2677 = vadd.f32 %v2280, %v2498
        %v2678 = vadd.f32 %v2281, %v2503
        %v2679 = vadd.f32 %v2282, %v2508
        %v2680 = vadd.f32 %v2283, %v2513
        %v2681 = vadd.f32 %v2284, %v2518
        %v2682 = vadd.f32 %v2285, %v2523
        %v2683 = vadd.f32 %v2286, %v2528
        %v2684 = vadd.f32 %v2287, %v2533
        %v2685 = vadd.f32 %v2288, %v2538
        %v2686 = vadd.f32 %v2289, %v2543
        %v2687 = vadd.f32 %v2290, %v2548
        %v2688 = vadd.f32 %v2291, %v2553
        %v2689 = vadd.f32 %v2292, %v2558
        %v2690 = vadd.f32 %v2293, %v2563
        %v2691 = vadd.f32 %v2294, %v2568
        %v2692 = vadd.f32 %v2295, %v2573
        %v2693 = vadd.f32 %v2296, %v2578
        %v2694 = vadd.f32 %v2297, %v2583
        %v2695 = vadd.f32 %v2298, %v2588
        %v2696 = vadd.f32 %v2299, %v2593
        %v2697 = vadd.f32 %v2300, %v2598
        %v2698 = vadd.f32 %v2301, %v2603
        %v2699 = vadd.f32 %v2302, %v2608
        %v2700 = vadd.f32 %v2303, %v2613
        %v2701 = vadd.f32 %v2304, %v2618
        %v2702 = vadd.f32 %v2305, %v2623
        %v2703 = vadd.f32 %v2306, %v2628
        %v2704 = vadd.f32 %v2307, %v2633
        %v2705 = vadd.f32 %v2308, %v2638
        %v2706 = vadd.f32 %v2309, %v2643
        %v2707 = vadd.f32 %v2310, %v2648
        %v2708 = vadd.f32 %v2311, %v2653
        %v2709 = vadd.f32 %v2312, %v2658
        %v2710 = vadd.f32 %v2313, %v2663
        %v2711 = vld [vmem:[#allocation2 + $0x15] sm:$0xff]
        %v2712 = vld [vmem:[#allocation2 + $0x1d] sm:$0xff]
        %v2713 = vld [vmem:[#allocation2 + $0x25] sm:$0xff]
        %v2714 = vld [vmem:[#allocation2 + $0x2d] sm:$0xff]
        %v2715 = vld [vmem:[#allocation2 + $0x35] sm:$0xff]
        %v2716 = vld [vmem:[#allocation2 + $0x3d] sm:$0xff]
        %v2717 = vld [vmem:[#allocation2 + $0x45] sm:$0xff]
        %v2718 = vld [vmem:[#allocation2 + $0x4d] sm:$0xff]
        %v2719 = vld [vmem:[#allocation2 + $0x55] sm:$0xff]
        %v2720 = vld [vmem:[#allocation2 + $0x5d] sm:$0xff]
        %v2721 = vld [vmem:[#allocation2 + $0x65] sm:$0xff]
        %v2722 = vld [vmem:[#allocation2 + $0x6d] sm:$0xff]
        %v2723 = vld [vmem:[#allocation2 + $0x75] sm:$0xff]
        %v2724 = vld [vmem:[#allocation2 + $0x7d] sm:$0xff]
        %v2725 = vld [vmem:[#allocation2 + $0x85] sm:$0xff]
        %v2726 = vld [vmem:[#allocation2 + $0x8d] sm:$0xff]
        %v2727 = vld [vmem:[#allocation2 + $0x95] sm:$0xff]
        %v2728 = vld [vmem:[#allocation2 + $0x9d] sm:$0xff]
        %v2729 = vld [vmem:[#allocation2 + $0xa5] sm:$0xff]
        %v2730 = vld [vmem:[#allocation2 + $0xad] sm:$0xff]
        %v2731 = vld [vmem:[#allocation2 + $0xb5] sm:$0xff]
        %v2732 = vld [vmem:[#allocation2 + $0xbd] sm:$0xff]
        %v2733 = vld [vmem:[#allocation2 + $0xc5] sm:$0xff]
        %v2734 = vld [vmem:[#allocation2 + $0xcd] sm:$0xff]
        %v2735 = vld [vmem:[#allocation2 + $0xd5] sm:$0xff]
        %v2736 = vld [vmem:[#allocation2 + $0xdd] sm:$0xff]
        %v2737 = vld [vmem:[#allocation2 + $0xe5] sm:$0xff]
        %v2738 = vld [vmem:[#allocation2 + $0xed] sm:$0xff]
        %v2739 = vld [vmem:[#allocation2 + $0xf5] sm:$0xff]
        %v2740 = vld [vmem:[#allocation2 + $0xfd] sm:$0xff]
        %v2741 = vld [vmem:[#allocation2 + $0x105] sm:$0xff]
        %v2742 = vld [vmem:[#allocation2 + $0x10d] sm:$0xff]
        %v2743 = vld [vmem:[#allocation2 + $0x115] sm:$0xff]
        %v2744 = vld [vmem:[#allocation2 + $0x11d] sm:$0xff]
        %v2745 = vld [vmem:[#allocation2 + $0x125] sm:$0xff]
        %v2746 = vld [vmem:[#allocation2 + $0x12d] sm:$0xff]
        %v2747 = vld [vmem:[#allocation2 + $0x135] sm:$0xff]
        %v2748 = vld [vmem:[#allocation2 + $0x13d] sm:$0xff]
        %v2749 = vld [vmem:[#allocation2 + $0x145] sm:$0xff]
        %v2750 = vld [vmem:[#allocation2 + $0x14d] sm:$0xff]
        %v2751 = vld [vmem:[#allocation2 + $0x155] sm:$0xff]
        %v2752 = vld [vmem:[#allocation2 + $0x15d] sm:$0xff]
        %v2753 = vld [vmem:[#allocation2 + $0x165] sm:$0xff]
        %v2754 = vld [vmem:[#allocation2 + $0x16d] sm:$0xff]
        %v2755 = vld [vmem:[#allocation2 + $0x175] sm:$0xff]
        %s2756 = scalar_lea.vmem [#allocation6], 512
        %v2757 = vld [vmem:[%s2756] sm:$0xff]
        %v2758 = vld [vmem:[%s2756 + $0x8] sm:$0xff]
        %v2759 = vld [vmem:[%s2756 + $0x10] sm:$0xff]
        %v2760 = vld [vmem:[%s2756 + $0x18] sm:$0xff]
        %v2761 = vld [vmem:[%s2756 + $0x20] sm:$0xff]
        %v2762 = vld [vmem:[%s2756 + $0x28] sm:$0xff]
        %v2763 = vld [vmem:[%s2756 + $0x30] sm:$0xff]
        %v2764 = vld [vmem:[%s2756 + $0x38] sm:$0xff]
        %v2765 = vld [vmem:[%s2756 + $0x40] sm:$0xff]
        %v2766 = vld [vmem:[%s2756 + $0x48] sm:$0xff]
        %v2767 = vld [vmem:[%s2756 + $0x50] sm:$0xff]
        %v2768 = vld [vmem:[%s2756 + $0x58] sm:$0xff]
        %v2769 = vld [vmem:[%s2756 + $0x60] sm:$0xff]
        %v2770 = vld [vmem:[%s2756 + $0x68] sm:$0xff]
        %v2771 = vld [vmem:[%s2756 + $0x70] sm:$0xff]
        %v2772 = vld [vmem:[%s2756 + $0x78] sm:$0xff]
        %2773 = vmatprep.subr.mxu0 0.0
        %2774 = vmatpush1.msra.mxu0 %v2757
        %2775 = vmatprep.subr.mxu0 0.0
        %2776 = vmatpush1.msra.mxu0 %v2758
        %2777 = vmatprep.subr.mxu0 0.0
        %2778 = vmatpush1.msra.mxu0 %v2759
        %2779 = vmatprep.subr.mxu0 0.0
        %2780 = vmatpush1.msra.mxu0 %v2760
        %2781 = vmatprep.subr.mxu0 0.0
        %2782 = vmatpush1.msra.mxu0 %v2761
        %2783 = vmatprep.subr.mxu0 0.0
        %2784 = vmatpush1.msra.mxu0 %v2762
        %2785 = vmatprep.subr.mxu0 0.0
        %2786 = vmatpush1.msra.mxu0 %v2763
        %2787 = vmatprep.subr.mxu0 0.0
        %2788 = vmatpush1.msra.mxu0 %v2764
        %2789 = vmatprep.subr.mxu0 0.0
        %2790 = vmatpush1.msra.mxu0 %v2765
        %2791 = vmatprep.subr.mxu0 0.0
        %2792 = vmatpush1.msra.mxu0 %v2766
        %2793 = vmatprep.subr.mxu0 0.0
        %2794 = vmatpush1.msra.mxu0 %v2767
        %2795 = vmatprep.subr.mxu0 0.0
        %2796 = vmatpush1.msra.mxu0 %v2768
        %2797 = vmatprep.subr.mxu0 0.0
        %2798 = vmatpush1.msra.mxu0 %v2769
        %2799 = vmatprep.subr.mxu0 0.0
        %2800 = vmatpush1.msra.mxu0 %v2770
        %2801 = vmatprep.subr.mxu0 0.0
        %2802 = vmatpush1.msra.mxu0 %v2771
        %2803 = vmatprep.subr.mxu0 0.0
        %2804 = vmatpush1.msra.mxu0 %v2772
        %2805 = vmatprep.subr.mxu0 0.0
        %2806 = vmatpush1.msra.mxu0 0.0
        %2807 = vmatprep.subr.mxu0 0.0
        %2808 = vmatpush1.msra.mxu0 0.0
        %2809 = vmatprep.subr.mxu0 0.0
        %2810 = vmatpush1.msra.mxu0 0.0
        %2811 = vmatprep.subr.mxu0 0.0
        %2812 = vmatpush1.msra.mxu0 0.0
        %2813 = vmatprep.subr.mxu0 0.0
        %2814 = vmatpush1.msra.mxu0 0.0
        %2815 = vmatprep.subr.mxu0 0.0
        %2816 = vmatpush1.msra.mxu0 0.0
        %2817 = vmatprep.subr.mxu0 0.0
        %2818 = vmatpush1.msra.mxu0 0.0
        %2819 = vmatprep.subr.mxu0 0.0
        %2820 = vmatpush1.msra.mxu0 0.0
        %2821 = vmatprep.subr.mxu0 0.0
        %2822 = vmatpush1.msra.mxu0 0.0
        %2823 = vmatprep.subr.mxu0 0.0
        %2824 = vmatpush1.msra.mxu0 0.0
        %2825 = vmatprep.subr.mxu0 0.0
        %2826 = vmatpush1.msra.mxu0 0.0
        %2827 = vmatprep.subr.mxu0 0.0
        %2828 = vmatpush1.msra.mxu0 0.0
        %2829 = vmatprep.subr.mxu0 0.0
        %2830 = vmatpush1.msra.mxu0 0.0
        %2831 = vmatprep.subr.mxu0 0.0
        %2832 = vmatpush1.msra.mxu0 0.0
        %2833 = vmatprep.subr.mxu0 0.0
        %2834 = vmatpush1.msra.mxu0 0.0
        %2835 = vmatprep.subr.mxu0 0.0
        %2836 = vmatpush1.msra.mxu0 0.0
        %2837 = vmatprep.mubr.f32.mxu0 0.0
        %2838 = vmatmul.mubr.f32.gmra.mrb[0].mxu0 %v2711
        %v2839 = vpop.f32.mrb[0].mxu0
        %v2840 = vadd.f32 0.0, %v2839
        %v2841 = vpop.f32.mrb[0].mxu0
        %2842 = vmatprep.mubr.f32.mxu0 0.0
        %2843 = vmatmul.mubr.f32.gmra.mrb[0].mxu0 %v2712
        %v2844 = vpop.f32.mrb[0].mxu0
        %v2845 = vadd.f32 0.0, %v2844
        %v2846 = vpop.f32.mrb[0].mxu0
        %2847 = vmatprep.mubr.f32.mxu0 0.0
        %2848 = vmatmul.mubr.f32.gmra.mrb[0].mxu0 %v2713
        %v2849 = vpop.f32.mrb[0].mxu0
        %v2850 = vadd.f32 0.0, %v2849
        %v2851 = vpop.f32.mrb[0].mxu0
        %2852 = vmatprep.mubr.f32.mxu0 0.0
        %2853 = vmatmul.mubr.f32.gmra.mrb[0].mxu0 %v2714
        %v2854 = vpop.f32.mrb[0].mxu0
        %v2855 = vadd.f32 0.0, %v2854
        %v2856 = vpop.f32.mrb[0].mxu0
        %2857 = vmatprep.mubr.f32.mxu0 0.0
        %2858 = vmatmul.mubr.f32.gmra.mrb[0].mxu0 %v2715
        %v2859 = vpop.f32.mrb[0].mxu0
        %v2860 = vadd.f32 0.0, %v2859
        %v2861 = vpop.f32.mrb[0].mxu0
        %2862 = vmatprep.mubr.f32.mxu0 0.0
        %2863 = vmatmul.mubr.f32.gmra.mrb[0].mxu0 %v2716
        %v2864 = vpop.f32.mrb[0].mxu0
        %v2865 = vadd.f32 0.0, %v2864
        %v2866 = vpop.f32.mrb[0].mxu0
        %2867 = vmatprep.mubr.f32.mxu0 0.0
        %2868 = vmatmul.mubr.f32.gmra.mrb[0].mxu0 %v2717
        %v2869 = vpop.f32.mrb[0].mxu0
        %v2870 = vadd.f32 0.0, %v2869
        %v2871 = vpop.f32.mrb[0].mxu0
        %2872 = vmatprep.mubr.f32.mxu0 0.0
        %2873 = vmatmul.mubr.f32.gmra.mrb[0].mxu0 %v2718
        %v2874 = vpop.f32.mrb[0].mxu0
        %v2875 = vadd.f32 0.0, %v2874
        %v2876 = vpop.f32.mrb[0].mxu0
        %2877 = vmatprep.mubr.f32.mxu0 0.0
        %2878 = vmatmul.mubr.f32.gmra.mrb[0].mxu0 %v2719
        %v2879 = vpop.f32.mrb[0].mxu0
        %v2880 = vadd.f32 0.0, %v2879
        %v2881 = vpop.f32.mrb[0].mxu0
        %2882 = vmatprep.mubr.f32.mxu0 0.0
        %2883 = vmatmul.mubr.f32.gmra.mrb[0].mxu0 %v2720
        %v2884 = vpop.f32.mrb[0].mxu0
        %v2885 = vadd.f32 0.0, %v2884
        %v2886 = vpop.f32.mrb[0].mxu0
        %2887 = vmatprep.mubr.f32.mxu0 0.0
        %2888 = vmatmul.mubr.f32.gmra.mrb[0].mxu0 %v2721
        %v2889 = vpop.f32.mrb[0].mxu0
        %v2890 = vadd.f32 0.0, %v2889
        %v2891 = vpop.f32.mrb[0].mxu0
        %2892 = vmatprep.mubr.f32.mxu0 0.0
        %2893 = vmatmul.mubr.f32.gmra.mrb[0].mxu0 %v2722
        %v2894 = vpop.f32.mrb[0].mxu0
        %v2895 = vadd.f32 0.0, %v2894
        %v2896 = vpop.f32.mrb[0].mxu0
        %2897 = vmatprep.mubr.f32.mxu0 0.0
        %2898 = vmatmul.mubr.f32.gmra.mrb[0].mxu0 %v2723
        %v2899 = vpop.f32.mrb[0].mxu0
        %v2900 = vadd.f32 0.0, %v2899
        %v2901 = vpop.f32.mrb[0].mxu0
        %2902 = vmatprep.mubr.f32.mxu0 0.0
        %2903 = vmatmul.mubr.f32.gmra.mrb[0].mxu0 %v2724
        %v2904 = vpop.f32.mrb[0].mxu0
        %v2905 = vadd.f32 0.0, %v2904
        %v2906 = vpop.f32.mrb[0].mxu0
        %2907 = vmatprep.mubr.f32.mxu0 0.0
        %2908 = vmatmul.mubr.f32.gmra.mrb[0].mxu0 %v2725
        %v2909 = vpop.f32.mrb[0].mxu0
        %v2910 = vadd.f32 0.0, %v2909
        %v2911 = vpop.f32.mrb[0].mxu0
        %2912 = vmatprep.mubr.f32.mxu0 0.0
        %2913 = vmatmul.mubr.f32.gmra.mrb[0].mxu0 %v2726
        %v2914 = vpop.f32.mrb[0].mxu0
        %v2915 = vadd.f32 0.0, %v2914
        %v2916 = vpop.f32.mrb[0].mxu0
        %2917 = vmatprep.mubr.f32.mxu0 0.0
        %2918 = vmatmul.mubr.f32.gmra.mrb[0].mxu0 %v2727
        %v2919 = vpop.f32.mrb[0].mxu0
        %v2920 = vadd.f32 0.0, %v2919
        %v2921 = vpop.f32.mrb[0].mxu0
        %2922 = vmatprep.mubr.f32.mxu0 0.0
        %2923 = vmatmul.mubr.f32.gmra.mrb[0].mxu0 %v2728
        %v2924 = vpop.f32.mrb[0].mxu0
        %v2925 = vadd.f32 0.0, %v2924
        %v2926 = vpop.f32.mrb[0].mxu0
        %2927 = vmatprep.mubr.f32.mxu0 0.0
        %2928 = vmatmul.mubr.f32.gmra.mrb[0].mxu0 %v2729
        %v2929 = vpop.f32.mrb[0].mxu0
        %v2930 = vadd.f32 0.0, %v2929
        %v2931 = vpop.f32.mrb[0].mxu0
        %2932 = vmatprep.mubr.f32.mxu0 0.0
        %2933 = vmatmul.mubr.f32.gmra.mrb[0].mxu0 %v2730
        %v2934 = vpop.f32.mrb[0].mxu0
        %v2935 = vadd.f32 0.0, %v2934
        %v2936 = vpop.f32.mrb[0].mxu0
        %2937 = vmatprep.mubr.f32.mxu0 0.0
        %2938 = vmatmul.mubr.f32.gmra.mrb[0].mxu0 %v2731
        %v2939 = vpop.f32.mrb[0].mxu0
        %v2940 = vadd.f32 0.0, %v2939
        %v2941 = vpop.f32.mrb[0].mxu0
        %2942 = vmatprep.mubr.f32.mxu0 0.0
        %2943 = vmatmul.mubr.f32.gmra.mrb[0].mxu0 %v2732
        %v2944 = vpop.f32.mrb[0].mxu0
        %v2945 = vadd.f32 0.0, %v2944
        %v2946 = vpop.f32.mrb[0].mxu0
        %2947 = vmatprep.mubr.f32.mxu0 0.0
        %2948 = vmatmul.mubr.f32.gmra.mrb[0].mxu0 %v2733
        %v2949 = vpop.f32.mrb[0].mxu0
        %v2950 = vadd.f32 0.0, %v2949
        %v2951 = vpop.f32.mrb[0].mxu0
        %2952 = vmatprep.mubr.f32.mxu0 0.0
        %2953 = vmatmul.mubr.f32.gmra.mrb[0].mxu0 %v2734
        %v2954 = vpop.f32.mrb[0].mxu0
        %v2955 = vadd.f32 0.0, %v2954
        %v2956 = vpop.f32.mrb[0].mxu0
        %2957 = vmatprep.mubr.f32.mxu0 0.0
        %2958 = vmatmul.mubr.f32.gmra.mrb[0].mxu0 %v2735
        %v2959 = vpop.f32.mrb[0].mxu0
        %v2960 = vadd.f32 0.0, %v2959
        %v2961 = vpop.f32.mrb[0].mxu0
        %2962 = vmatprep.mubr.f32.mxu0 0.0
        %2963 = vmatmul.mubr.f32.gmra.mrb[0].mxu0 %v2736
        %v2964 = vpop.f32.mrb[0].mxu0
        %v2965 = vadd.f32 0.0, %v2964
        %v2966 = vpop.f32.mrb[0].mxu0
        %2967 = vmatprep.mubr.f32.mxu0 0.0
        %2968 = vmatmul.mubr.f32.gmra.mrb[0].mxu0 %v2737
        %v2969 = vpop.f32.mrb[0].mxu0
        %v2970 = vadd.f32 0.0, %v2969
        %v2971 = vpop.f32.mrb[0].mxu0
        %2972 = vmatprep.mubr.f32.mxu0 0.0
        %2973 = vmatmul.mubr.f32.gmra.mrb[0].mxu0 %v2738
        %v2974 = vpop.f32.mrb[0].mxu0
        %v2975 = vadd.f32 0.0, %v2974
        %v2976 = vpop.f32.mrb[0].mxu0
        %2977 = vmatprep.mubr.f32.mxu0 0.0
        %2978 = vmatmul.mubr.f32.gmra.mrb[0].mxu0 %v2739
        %v2979 = vpop.f32.mrb[0].mxu0
        %v2980 = vadd.f32 0.0, %v2979
        %v2981 = vpop.f32.mrb[0].mxu0
        %2982 = vmatprep.mubr.f32.mxu0 0.0
        %2983 = vmatmul.mubr.f32.gmra.mrb[0].mxu0 %v2740
        %v2984 = vpop.f32.mrb[0].mxu0
        %v2985 = vadd.f32 0.0, %v2984
        %v2986 = vpop.f32.mrb[0].mxu0
        %2987 = vmatprep.mubr.f32.mxu0 0.0
        %2988 = vmatmul.mubr.f32.gmra.mrb[0].mxu0 %v2741
        %v2989 = vpop.f32.mrb[0].mxu0
        %v2990 = vadd.f32 0.0, %v2989
        %v2991 = vpop.f32.mrb[0].mxu0
        %2992 = vmatprep.mubr.f32.mxu0 0.0
        %2993 = vmatmul.mubr.f32.gmra.mrb[0].mxu0 %v2742
        %v2994 = vpop.f32.mrb[0].mxu0
        %v2995 = vadd.f32 0.0, %v2994
        %v2996 = vpop.f32.mrb[0].mxu0
        %2997 = vmatprep.mubr.f32.mxu0 0.0
        %2998 = vmatmul.mubr.f32.gmra.mrb[0].mxu0 %v2743
        %v2999 = vpop.f32.mrb[0].mxu0
        %v3000 = vadd.f32 0.0, %v2999
        %v3001 = vpop.f32.mrb[0].mxu0
        %3002 = vmatprep.mubr.f32.mxu0 0.0
        %3003 = vmatmul.mubr.f32.gmra.mrb[0].mxu0 %v2744
        %v3004 = vpop.f32.mrb[0].mxu0
        %v3005 = vadd.f32 0.0, %v3004
        %v3006 = vpop.f32.mrb[0].mxu0
        %3007 = vmatprep.mubr.f32.mxu0 0.0
        %3008 = vmatmul.mubr.f32.gmra.mrb[0].mxu0 %v2745
        %v3009 = vpop.f32.mrb[0].mxu0
        %v3010 = vadd.f32 0.0, %v3009
        %v3011 = vpop.f32.mrb[0].mxu0
        %3012 = vmatprep.mubr.f32.mxu0 0.0
        %3013 = vmatmul.mubr.f32.gmra.mrb[0].mxu0 %v2746
        %v3014 = vpop.f32.mrb[0].mxu0
        %v3015 = vadd.f32 0.0, %v3014
        %v3016 = vpop.f32.mrb[0].mxu0
        %3017 = vmatprep.mubr.f32.mxu0 0.0
        %3018 = vmatmul.mubr.f32.gmra.mrb[0].mxu0 %v2747
        %v3019 = vpop.f32.mrb[0].mxu0
        %v3020 = vadd.f32 0.0, %v3019
        %v3021 = vpop.f32.mrb[0].mxu0
        %3022 = vmatprep.mubr.f32.mxu0 0.0
        %3023 = vmatmul.mubr.f32.gmra.mrb[0].mxu0 %v2748
        %v3024 = vpop.f32.mrb[0].mxu0
        %v3025 = vadd.f32 0.0, %v3024
        %v3026 = vpop.f32.mrb[0].mxu0
        %3027 = vmatprep.mubr.f32.mxu0 0.0
        %3028 = vmatmul.mubr.f32.gmra.mrb[0].mxu0 %v2749
        %v3029 = vpop.f32.mrb[0].mxu0
        %v3030 = vadd.f32 0.0, %v3029
        %v3031 = vpop.f32.mrb[0].mxu0
        %3032 = vmatprep.mubr.f32.mxu0 0.0
        %3033 = vmatmul.mubr.f32.gmra.mrb[0].mxu0 %v2750
        %v3034 = vpop.f32.mrb[0].mxu0
        %v3035 = vadd.f32 0.0, %v3034
        %v3036 = vpop.f32.mrb[0].mxu0
        %3037 = vmatprep.mubr.f32.mxu0 0.0
        %3038 = vmatmul.mubr.f32.gmra.mrb[0].mxu0 %v2751
        %v3039 = vpop.f32.mrb[0].mxu0
        %v3040 = vadd.f32 0.0, %v3039
        %v3041 = vpop.f32.mrb[0].mxu0
        %3042 = vmatprep.mubr.f32.mxu0 0.0
        %3043 = vmatmul.mubr.f32.gmra.mrb[0].mxu0 %v2752
        %v3044 = vpop.f32.mrb[0].mxu0
        %v3045 = vadd.f32 0.0, %v3044
        %v3046 = vpop.f32.mrb[0].mxu0
        %3047 = vmatprep.mubr.f32.mxu0 0.0
        %3048 = vmatmul.mubr.f32.gmra.mrb[0].mxu0 %v2753
        %v3049 = vpop.f32.mrb[0].mxu0
        %v3050 = vadd.f32 0.0, %v3049
        %v3051 = vpop.f32.mrb[0].mxu0
        %3052 = vmatprep.mubr.f32.mxu0 0.0
        %3053 = vmatmul.mubr.f32.gmra.mrb[0].mxu0 %v2754
        %v3054 = vpop.f32.mrb[0].mxu0
        %v3055 = vadd.f32 0.0, %v3054
        %v3056 = vpop.f32.mrb[0].mxu0
        %3057 = vmatprep.mubr.f32.mxu0 0.0
        %3058 = vmatmul.mubr.f32.gmra.mrb[0].mxu0 %v2755
        %v3059 = vpop.f32.mrb[0].mxu0
        %v3060 = vadd.f32 0.0, %v3059
        %v3061 = vpop.f32.mrb[0].mxu0
        %3062 = vdwg.mxu0
        %v3063 = vadd.f32 %v2666, %v2840
        %v3064 = vadd.f32 %v2667, %v2845
        %v3065 = vadd.f32 %v2668, %v2850
        %v3066 = vadd.f32 %v2669, %v2855
        %v3067 = vadd.f32 %v2670, %v2860
        %v3068 = vadd.f32 %v2671, %v2865
        %v3069 = vadd.f32 %v2672, %v2870
        %v3070 = vadd.f32 %v2673, %v2875
        %v3071 = vadd.f32 %v2674, %v2880
        %v3072 = vadd.f32 %v2675, %v2885
        %v3073 = vadd.f32 %v2676, %v2890
        %v3074 = vadd.f32 %v2677, %v2895
        %v3075 = vadd.f32 %v2678, %v2900
        %v3076 = vadd.f32 %v2679, %v2905
        %v3077 = vadd.f32 %v2680, %v2910
        %v3078 = vadd.f32 %v2681, %v2915
        %v3079 = vadd.f32 %v2682, %v2920
        %v3080 = vadd.f32 %v2683, %v2925
        %v3081 = vadd.f32 %v2684, %v2930
        %v3082 = vadd.f32 %v2685, %v2935
        %v3083 = vadd.f32 %v2686, %v2940
        %v3084 = vadd.f32 %v2687, %v2945
        %v3085 = vadd.f32 %v2688, %v2950
        %v3086 = vadd.f32 %v2689, %v2955
        %v3087 = vadd.f32 %v2690, %v2960
        %v3088 = vadd.f32 %v2691, %v2965
        %v3089 = vadd.f32 %v2692, %v2970
        %v3090 = vadd.f32 %v2693, %v2975
        %v3091 = vadd.f32 %v2694, %v2980
        %v3092 = vadd.f32 %v2695, %v2985
        %v3093 = vadd.f32 %v2696, %v2990
        %v3094 = vadd.f32 %v2697, %v2995
        %v3095 = vadd.f32 %v2698, %v3000
        %v3096 = vadd.f32 %v2699, %v3005
        %v3097 = vadd.f32 %v2700, %v3010
        %v3098 = vadd.f32 %v2701, %v3015
        %v3099 = vadd.f32 %v2702, %v3020
        %v3100 = vadd.f32 %v2703, %v3025
        %v3101 = vadd.f32 %v2704, %v3030
        %v3102 = vadd.f32 %v2705, %v3035
        %v3103 = vadd.f32 %v2706, %v3040
        %v3104 = vadd.f32 %v2707, %v3045
        %v3105 = vadd.f32 %v2708, %v3050
        %v3106 = vadd.f32 %v2709, %v3055
        %v3107 = vadd.f32 %v2710, %v3060
        %v3108 = vld [vmem:[#allocation2 + $0x16] sm:$0xff]
        %v3109 = vld [vmem:[#allocation2 + $0x1e] sm:$0xff]
        %v3110 = vld [vmem:[#allocation2 + $0x26] sm:$0xff]
        %v3111 = vld [vmem:[#allocation2 + $0x2e] sm:$0xff]
        %v3112 = vld [vmem:[#allocation2 + $0x36] sm:$0xff]
        %v3113 = vld [vmem:[#allocation2 + $0x3e] sm:$0xff]
        %v3114 = vld [vmem:[#allocation2 + $0x46] sm:$0xff]
        %v3115 = vld [vmem:[#allocation2 + $0x4e] sm:$0xff]
        %v3116 = vld [vmem:[#allocation2 + $0x56] sm:$0xff]
        %v3117 = vld [vmem:[#allocation2 + $0x5e] sm:$0xff]
        %v3118 = vld [vmem:[#allocation2 + $0x66] sm:$0xff]
        %v3119 = vld [vmem:[#allocation2 + $0x6e] sm:$0xff]
        %v3120 = vld [vmem:[#allocation2 + $0x76] sm:$0xff]
        %v3121 = vld [vmem:[#allocation2 + $0x7e] sm:$0xff]
        %v3122 = vld [vmem:[#allocation2 + $0x86] sm:$0xff]
        %v3123 = vld [vmem:[#allocation2 + $0x8e] sm:$0xff]
        %v3124 = vld [vmem:[#allocation2 + $0x96] sm:$0xff]
        %v3125 = vld [vmem:[#allocation2 + $0x9e] sm:$0xff]
        %v3126 = vld [vmem:[#allocation2 + $0xa6] sm:$0xff]
        %v3127 = vld [vmem:[#allocation2 + $0xae] sm:$0xff]
        %v3128 = vld [vmem:[#allocation2 + $0xb6] sm:$0xff]
        %v3129 = vld [vmem:[#allocation2 + $0xbe] sm:$0xff]
        %v3130 = vld [vmem:[#allocation2 + $0xc6] sm:$0xff]
        %v3131 = vld [vmem:[#allocation2 + $0xce] sm:$0xff]
        %v3132 = vld [vmem:[#allocation2 + $0xd6] sm:$0xff]
        %v3133 = vld [vmem:[#allocation2 + $0xde] sm:$0xff]
        %v3134 = vld [vmem:[#allocation2 + $0xe6] sm:$0xff]
        %v3135 = vld [vmem:[#allocation2 + $0xee] sm:$0xff]
        %v3136 = vld [vmem:[#allocation2 + $0xf6] sm:$0xff]
        %v3137 = vld [vmem:[#allocation2 + $0xfe] sm:$0xff]
        %v3138 = vld [vmem:[#allocation2 + $0x106] sm:$0xff]
        %v3139 = vld [vmem:[#allocation2 + $0x10e] sm:$0xff]
        %v3140 = vld [vmem:[#allocation2 + $0x116] sm:$0xff]
        %v3141 = vld [vmem:[#allocation2 + $0x11e] sm:$0xff]
        %v3142 = vld [vmem:[#allocation2 + $0x126] sm:$0xff]
        %v3143 = vld [vmem:[#allocation2 + $0x12e] sm:$0xff]
        %v3144 = vld [vmem:[#allocation2 + $0x136] sm:$0xff]
        %v3145 = vld [vmem:[#allocation2 + $0x13e] sm:$0xff]
        %v3146 = vld [vmem:[#allocation2 + $0x146] sm:$0xff]
        %v3147 = vld [vmem:[#allocation2 + $0x14e] sm:$0xff]
        %v3148 = vld [vmem:[#allocation2 + $0x156] sm:$0xff]
        %v3149 = vld [vmem:[#allocation2 + $0x15e] sm:$0xff]
        %v3150 = vld [vmem:[#allocation2 + $0x166] sm:$0xff]
        %v3151 = vld [vmem:[#allocation2 + $0x16e] sm:$0xff]
        %v3152 = vld [vmem:[#allocation2 + $0x176] sm:$0xff]
        %s3153 = scalar_lea.vmem [#allocation6], 640
        %v3154 = vld [vmem:[%s3153] sm:$0xff]
        %v3155 = vld [vmem:[%s3153 + $0x8] sm:$0xff]
        %v3156 = vld [vmem:[%s3153 + $0x10] sm:$0xff]
        %v3157 = vld [vmem:[%s3153 + $0x18] sm:$0xff]
        %v3158 = vld [vmem:[%s3153 + $0x20] sm:$0xff]
        %v3159 = vld [vmem:[%s3153 + $0x28] sm:$0xff]
        %v3160 = vld [vmem:[%s3153 + $0x30] sm:$0xff]
        %v3161 = vld [vmem:[%s3153 + $0x38] sm:$0xff]
        %v3162 = vld [vmem:[%s3153 + $0x40] sm:$0xff]
        %v3163 = vld [vmem:[%s3153 + $0x48] sm:$0xff]
        %v3164 = vld [vmem:[%s3153 + $0x50] sm:$0xff]
        %v3165 = vld [vmem:[%s3153 + $0x58] sm:$0xff]
        %v3166 = vld [vmem:[%s3153 + $0x60] sm:$0xff]
        %v3167 = vld [vmem:[%s3153 + $0x68] sm:$0xff]
        %v3168 = vld [vmem:[%s3153 + $0x70] sm:$0xff]
        %v3169 = vld [vmem:[%s3153 + $0x78] sm:$0xff]
        %3170 = vmatprep.subr.mxu0 0.0
        %3171 = vmatpush1.msra.mxu0 %v3154
        %3172 = vmatprep.subr.mxu0 0.0
        %3173 = vmatpush1.msra.mxu0 %v3155
        %3174 = vmatprep.subr.mxu0 0.0
        %3175 = vmatpush1.msra.mxu0 %v3156
        %3176 = vmatprep.subr.mxu0 0.0
        %3177 = vmatpush1.msra.mxu0 %v3157
        %3178 = vmatprep.subr.mxu0 0.0
        %3179 = vmatpush1.msra.mxu0 %v3158
        %3180 = vmatprep.subr.mxu0 0.0
        %3181 = vmatpush1.msra.mxu0 %v3159
        %3182 = vmatprep.subr.mxu0 0.0
        %3183 = vmatpush1.msra.mxu0 %v3160
        %3184 = vmatprep.subr.mxu0 0.0
        %3185 = vmatpush1.msra.mxu0 %v3161
        %3186 = vmatprep.subr.mxu0 0.0
        %3187 = vmatpush1.msra.mxu0 %v3162
        %3188 = vmatprep.subr.mxu0 0.0
        %3189 = vmatpush1.msra.mxu0 %v3163
        %3190 = vmatprep.subr.mxu0 0.0
        %3191 = vmatpush1.msra.mxu0 %v3164
        %3192 = vmatprep.subr.mxu0 0.0
        %3193 = vmatpush1.msra.mxu0 %v3165
        %3194 = vmatprep.subr.mxu0 0.0
        %3195 = vmatpush1.msra.mxu0 %v3166
        %3196 = vmatprep.subr.mxu0 0.0
        %3197 = vmatpush1.msra.mxu0 %v3167
        %3198 = vmatprep.subr.mxu0 0.0
        %3199 = vmatpush1.msra.mxu0 %v3168
        %3200 = vmatprep.subr.mxu0 0.0
        %3201 = vmatpush1.msra.mxu0 %v3169
        %3202 = vmatprep.subr.mxu0 0.0
        %3203 = vmatpush1.msra.mxu0 0.0
        %3204 = vmatprep.subr.mxu0 0.0
        %3205 = vmatpush1.msra.mxu0 0.0
        %3206 = vmatprep.subr.mxu0 0.0
        %3207 = vmatpush1.msra.mxu0 0.0
        %3208 = vmatprep.subr.mxu0 0.0
        %3209 = vmatpush1.msra.mxu0 0.0
        %3210 = vmatprep.subr.mxu0 0.0
        %3211 = vmatpush1.msra.mxu0 0.0
        %3212 = vmatprep.subr.mxu0 0.0
        %3213 = vmatpush1.msra.mxu0 0.0
        %3214 = vmatprep.subr.mxu0 0.0
        %3215 = vmatpush1.msra.mxu0 0.0
        %3216 = vmatprep.subr.mxu0 0.0
        %3217 = vmatpush1.msra.mxu0 0.0
        %3218 = vmatprep.subr.mxu0 0.0
        %3219 = vmatpush1.msra.mxu0 0.0
        %3220 = vmatprep.subr.mxu0 0.0
        %3221 = vmatpush1.msra.mxu0 0.0
        %3222 = vmatprep.subr.mxu0 0.0
        %3223 = vmatpush1.msra.mxu0 0.0
        %3224 = vmatprep.subr.mxu0 0.0
        %3225 = vmatpush1.msra.mxu0 0.0
        %3226 = vmatprep.subr.mxu0 0.0
        %3227 = vmatpush1.msra.mxu0 0.0
        %3228 = vmatprep.subr.mxu0 0.0
        %3229 = vmatpush1.msra.mxu0 0.0
        %3230 = vmatprep.subr.mxu0 0.0
        %3231 = vmatpush1.msra.mxu0 0.0
        %3232 = vmatprep.subr.mxu0 0.0
        %3233 = vmatpush1.msra.mxu0 0.0
        %3234 = vmatprep.mubr.f32.mxu0 0.0
        %3235 = vmatmul.mubr.f32.gmra.mrb[0].mxu0 %v3108
        %v3236 = vpop.f32.mrb[0].mxu0
        %v3237 = vadd.f32 0.0, %v3236
        %v3238 = vpop.f32.mrb[0].mxu0
        %3239 = vmatprep.mubr.f32.mxu0 0.0
        %3240 = vmatmul.mubr.f32.gmra.mrb[0].mxu0 %v3109
        %v3241 = vpop.f32.mrb[0].mxu0
        %v3242 = vadd.f32 0.0, %v3241
        %v3243 = vpop.f32.mrb[0].mxu0
        %3244 = vmatprep.mubr.f32.mxu0 0.0
        %3245 = vmatmul.mubr.f32.gmra.mrb[0].mxu0 %v3110
        %v3246 = vpop.f32.mrb[0].mxu0
        %v3247 = vadd.f32 0.0, %v3246
        %v3248 = vpop.f32.mrb[0].mxu0
        %3249 = vmatprep.mubr.f32.mxu0 0.0
        %3250 = vmatmul.mubr.f32.gmra.mrb[0].mxu0 %v3111
        %v3251 = vpop.f32.mrb[0].mxu0
        %v3252 = vadd.f32 0.0, %v3251
        %v3253 = vpop.f32.mrb[0].mxu0
        %3254 = vmatprep.mubr.f32.mxu0 0.0
        %3255 = vmatmul.mubr.f32.gmra.mrb[0].mxu0 %v3112
        %v3256 = vpop.f32.mrb[0].mxu0
        %v3257 = vadd.f32 0.0, %v3256
        %v3258 = vpop.f32.mrb[0].mxu0
        %3259 = vmatprep.mubr.f32.mxu0 0.0
        %3260 = vmatmul.mubr.f32.gmra.mrb[0].mxu0 %v3113
        %v3261 = vpop.f32.mrb[0].mxu0
        %v3262 = vadd.f32 0.0, %v3261
        %v3263 = vpop.f32.mrb[0].mxu0
        %3264 = vmatprep.mubr.f32.mxu0 0.0
        %3265 = vmatmul.mubr.f32.gmra.mrb[0].mxu0 %v3114
        %v3266 = vpop.f32.mrb[0].mxu0
        %v3267 = vadd.f32 0.0, %v3266
        %v3268 = vpop.f32.mrb[0].mxu0
        %3269 = vmatprep.mubr.f32.mxu0 0.0
        %3270 = vmatmul.mubr.f32.gmra.mrb[0].mxu0 %v3115
        %v3271 = vpop.f32.mrb[0].mxu0
        %v3272 = vadd.f32 0.0, %v3271
        %v3273 = vpop.f32.mrb[0].mxu0
        %3274 = vmatprep.mubr.f32.mxu0 0.0
        %3275 = vmatmul.mubr.f32.gmra.mrb[0].mxu0 %v3116
        %v3276 = vpop.f32.mrb[0].mxu0
        %v3277 = vadd.f32 0.0, %v3276
        %v3278 = vpop.f32.mrb[0].mxu0
        %3279 = vmatprep.mubr.f32.mxu0 0.0
        %3280 = vmatmul.mubr.f32.gmra.mrb[0].mxu0 %v3117
        %v3281 = vpop.f32.mrb[0].mxu0
        %v3282 = vadd.f32 0.0, %v3281
        %v3283 = vpop.f32.mrb[0].mxu0
        %3284 = vmatprep.mubr.f32.mxu0 0.0
        %3285 = vmatmul.mubr.f32.gmra.mrb[0].mxu0 %v3118
        %v3286 = vpop.f32.mrb[0].mxu0
        %v3287 = vadd.f32 0.0, %v3286
        %v3288 = vpop.f32.mrb[0].mxu0
        %3289 = vmatprep.mubr.f32.mxu0 0.0
        %3290 = vmatmul.mubr.f32.gmra.mrb[0].mxu0 %v3119
        %v3291 = vpop.f32.mrb[0].mxu0
        %v3292 = vadd.f32 0.0, %v3291
        %v3293 = vpop.f32.mrb[0].mxu0
        %3294 = vmatprep.mubr.f32.mxu0 0.0
        %3295 = vmatmul.mubr.f32.gmra.mrb[0].mxu0 %v3120
        %v3296 = vpop.f32.mrb[0].mxu0
        %v3297 = vadd.f32 0.0, %v3296
        %v3298 = vpop.f32.mrb[0].mxu0
        %3299 = vmatprep.mubr.f32.mxu0 0.0
        %3300 = vmatmul.mubr.f32.gmra.mrb[0].mxu0 %v3121
        %v3301 = vpop.f32.mrb[0].mxu0
        %v3302 = vadd.f32 0.0, %v3301
        %v3303 = vpop.f32.mrb[0].mxu0
        %3304 = vmatprep.mubr.f32.mxu0 0.0
        %3305 = vmatmul.mubr.f32.gmra.mrb[0].mxu0 %v3122
        %v3306 = vpop.f32.mrb[0].mxu0
        %v3307 = vadd.f32 0.0, %v3306
        %v3308 = vpop.f32.mrb[0].mxu0
        %3309 = vmatprep.mubr.f32.mxu0 0.0
        %3310 = vmatmul.mubr.f32.gmra.mrb[0].mxu0 %v3123
        %v3311 = vpop.f32.mrb[0].mxu0
        %v3312 = vadd.f32 0.0, %v3311
        %v3313 = vpop.f32.mrb[0].mxu0
        %3314 = vmatprep.mubr.f32.mxu0 0.0
        %3315 = vmatmul.mubr.f32.gmra.mrb[0].mxu0 %v3124
        %v3316 = vpop.f32.mrb[0].mxu0
        %v3317 = vadd.f32 0.0, %v3316
        %v3318 = vpop.f32.mrb[0].mxu0
        %3319 = vmatprep.mubr.f32.mxu0 0.0
        %3320 = vmatmul.mubr.f32.gmra.mrb[0].mxu0 %v3125
        %v3321 = vpop.f32.mrb[0].mxu0
        %v3322 = vadd.f32 0.0, %v3321
        %v3323 = vpop.f32.mrb[0].mxu0
        %3324 = vmatprep.mubr.f32.mxu0 0.0
        %3325 = vmatmul.mubr.f32.gmra.mrb[0].mxu0 %v3126
        %v3326 = vpop.f32.mrb[0].mxu0
        %v3327 = vadd.f32 0.0, %v3326
        %v3328 = vpop.f32.mrb[0].mxu0
        %3329 = vmatprep.mubr.f32.mxu0 0.0
        %3330 = vmatmul.mubr.f32.gmra.mrb[0].mxu0 %v3127
        %v3331 = vpop.f32.mrb[0].mxu0
        %v3332 = vadd.f32 0.0, %v3331
        %v3333 = vpop.f32.mrb[0].mxu0
        %3334 = vmatprep.mubr.f32.mxu0 0.0
        %3335 = vmatmul.mubr.f32.gmra.mrb[0].mxu0 %v3128
        %v3336 = vpop.f32.mrb[0].mxu0
        %v3337 = vadd.f32 0.0, %v3336
        %v3338 = vpop.f32.mrb[0].mxu0
        %3339 = vmatprep.mubr.f32.mxu0 0.0
        %3340 = vmatmul.mubr.f32.gmra.mrb[0].mxu0 %v3129
        %v3341 = vpop.f32.mrb[0].mxu0
        %v3342 = vadd.f32 0.0, %v3341
        %v3343 = vpop.f32.mrb[0].mxu0
        %3344 = vmatprep.mubr.f32.mxu0 0.0
        %3345 = vmatmul.mubr.f32.gmra.mrb[0].mxu0 %v3130
        %v3346 = vpop.f32.mrb[0].mxu0
        %v3347 = vadd.f32 0.0, %v3346
        %v3348 = vpop.f32.mrb[0].mxu0
        %3349 = vmatprep.mubr.f32.mxu0 0.0
        %3350 = vmatmul.mubr.f32.gmra.mrb[0].mxu0 %v3131
        %v3351 = vpop.f32.mrb[0].mxu0
        %v3352 = vadd.f32 0.0, %v3351
        %v3353 = vpop.f32.mrb[0].mxu0
        %3354 = vmatprep.mubr.f32.mxu0 0.0
        %3355 = vmatmul.mubr.f32.gmra.mrb[0].mxu0 %v3132
        %v3356 = vpop.f32.mrb[0].mxu0
        %v3357 = vadd.f32 0.0, %v3356
        %v3358 = vpop.f32.mrb[0].mxu0
        %3359 = vmatprep.mubr.f32.mxu0 0.0
        %3360 = vmatmul.mubr.f32.gmra.mrb[0].mxu0 %v3133
        %v3361 = vpop.f32.mrb[0].mxu0
        %v3362 = vadd.f32 0.0, %v3361
        %v3363 = vpop.f32.mrb[0].mxu0
        %3364 = vmatprep.mubr.f32.mxu0 0.0
        %3365 = vmatmul.mubr.f32.gmra.mrb[0].mxu0 %v3134
        %v3366 = vpop.f32.mrb[0].mxu0
        %v3367 = vadd.f32 0.0, %v3366
        %v3368 = vpop.f32.mrb[0].mxu0
        %3369 = vmatprep.mubr.f32.mxu0 0.0
        %3370 = vmatmul.mubr.f32.gmra.mrb[0].mxu0 %v3135
        %v3371 = vpop.f32.mrb[0].mxu0
        %v3372 = vadd.f32 0.0, %v3371
        %v3373 = vpop.f32.mrb[0].mxu0
        %3374 = vmatprep.mubr.f32.mxu0 0.0
        %3375 = vmatmul.mubr.f32.gmra.mrb[0].mxu0 %v3136
        %v3376 = vpop.f32.mrb[0].mxu0
        %v3377 = vadd.f32 0.0, %v3376
        %v3378 = vpop.f32.mrb[0].mxu0
        %3379 = vmatprep.mubr.f32.mxu0 0.0
        %3380 = vmatmul.mubr.f32.gmra.mrb[0].mxu0 %v3137
        %v3381 = vpop.f32.mrb[0].mxu0
        %v3382 = vadd.f32 0.0, %v3381
        %v3383 = vpop.f32.mrb[0].mxu0
        %3384 = vmatprep.mubr.f32.mxu0 0.0
        %3385 = vmatmul.mubr.f32.gmra.mrb[0].mxu0 %v3138
        %v3386 = vpop.f32.mrb[0].mxu0
        %v3387 = vadd.f32 0.0, %v3386
        %v3388 = vpop.f32.mrb[0].mxu0
        %3389 = vmatprep.mubr.f32.mxu0 0.0
        %3390 = vmatmul.mubr.f32.gmra.mrb[0].mxu0 %v3139
        %v3391 = vpop.f32.mrb[0].mxu0
        %v3392 = vadd.f32 0.0, %v3391
        %v3393 = vpop.f32.mrb[0].mxu0
        %3394 = vmatprep.mubr.f32.mxu0 0.0
        %3395 = vmatmul.mubr.f32.gmra.mrb[0].mxu0 %v3140
        %v3396 = vpop.f32.mrb[0].mxu0
        %v3397 = vadd.f32 0.0, %v3396
        %v3398 = vpop.f32.mrb[0].mxu0
        %3399 = vmatprep.mubr.f32.mxu0 0.0
        %3400 = vmatmul.mubr.f32.gmra.mrb[0].mxu0 %v3141
        %v3401 = vpop.f32.mrb[0].mxu0
        %v3402 = vadd.f32 0.0, %v3401
        %v3403 = vpop.f32.mrb[0].mxu0
        %3404 = vmatprep.mubr.f32.mxu0 0.0
        %3405 = vmatmul.mubr.f32.gmra.mrb[0].mxu0 %v3142
        %v3406 = vpop.f32.mrb[0].mxu0
        %v3407 = vadd.f32 0.0, %v3406
        %v3408 = vpop.f32.mrb[0].mxu0
        %3409 = vmatprep.mubr.f32.mxu0 0.0
        %3410 = vmatmul.mubr.f32.gmra.mrb[0].mxu0 %v3143
        %v3411 = vpop.f32.mrb[0].mxu0
        %v3412 = vadd.f32 0.0, %v3411
        %v3413 = vpop.f32.mrb[0].mxu0
        %3414 = vmatprep.mubr.f32.mxu0 0.0
        %3415 = vmatmul.mubr.f32.gmra.mrb[0].mxu0 %v3144
        %v3416 = vpop.f32.mrb[0].mxu0
        %v3417 = vadd.f32 0.0, %v3416
        %v3418 = vpop.f32.mrb[0].mxu0
        %3419 = vmatprep.mubr.f32.mxu0 0.0
        %3420 = vmatmul.mubr.f32.gmra.mrb[0].mxu0 %v3145
        %v3421 = vpop.f32.mrb[0].mxu0
        %v3422 = vadd.f32 0.0, %v3421
        %v3423 = vpop.f32.mrb[0].mxu0
        %3424 = vmatprep.mubr.f32.mxu0 0.0
        %3425 = vmatmul.mubr.f32.gmra.mrb[0].mxu0 %v3146
        %v3426 = vpop.f32.mrb[0].mxu0
        %v3427 = vadd.f32 0.0, %v3426
        %v3428 = vpop.f32.mrb[0].mxu0
        %3429 = vmatprep.mubr.f32.mxu0 0.0
        %3430 = vmatmul.mubr.f32.gmra.mrb[0].mxu0 %v3147
        %v3431 = vpop.f32.mrb[0].mxu0
        %v3432 = vadd.f32 0.0, %v3431
        %v3433 = vpop.f32.mrb[0].mxu0
        %3434 = vmatprep.mubr.f32.mxu0 0.0
        %3435 = vmatmul.mubr.f32.gmra.mrb[0].mxu0 %v3148
        %v3436 = vpop.f32.mrb[0].mxu0
        %v3437 = vadd.f32 0.0, %v3436
        %v3438 = vpop.f32.mrb[0].mxu0
        %3439 = vmatprep.mubr.f32.mxu0 0.0
        %3440 = vmatmul.mubr.f32.gmra.mrb[0].mxu0 %v3149
        %v3441 = vpop.f32.mrb[0].mxu0
        %v3442 = vadd.f32 0.0, %v3441
        %v3443 = vpop.f32.mrb[0].mxu0
        %3444 = vmatprep.mubr.f32.mxu0 0.0
        %3445 = vmatmul.mubr.f32.gmra.mrb[0].mxu0 %v3150
        %v3446 = vpop.f32.mrb[0].mxu0
        %v3447 = vadd.f32 0.0, %v3446
        %v3448 = vpop.f32.mrb[0].mxu0
        %3449 = vmatprep.mubr.f32.mxu0 0.0
        %3450 = vmatmul.mubr.f32.gmra.mrb[0].mxu0 %v3151
        %v3451 = vpop.f32.mrb[0].mxu0
        %v3452 = vadd.f32 0.0, %v3451
        %v3453 = vpop.f32.mrb[0].mxu0
        %3454 = vmatprep.mubr.f32.mxu0 0.0
        %3455 = vmatmul.mubr.f32.gmra.mrb[0].mxu0 %v3152
        %v3456 = vpop.f32.mrb[0].mxu0
        %v3457 = vadd.f32 0.0, %v3456
        %v3458 = vpop.f32.mrb[0].mxu0
        %3459 = vdwg.mxu0
        %v3460 = vadd.f32 %v3063, %v3237
        %v3461 = vadd.f32 %v3064, %v3242
        %v3462 = vadd.f32 %v3065, %v3247
        %v3463 = vadd.f32 %v3066, %v3252
        %v3464 = vadd.f32 %v3067, %v3257
        %v3465 = vadd.f32 %v3068, %v3262
        %v3466 = vadd.f32 %v3069, %v3267
        %v3467 = vadd.f32 %v3070, %v3272
        %v3468 = vadd.f32 %v3071, %v3277
        %v3469 = vadd.f32 %v3072, %v3282
        %v3470 = vadd.f32 %v3073, %v3287
        %v3471 = vadd.f32 %v3074, %v3292
        %v3472 = vadd.f32 %v3075, %v3297
        %v3473 = vadd.f32 %v3076, %v3302
        %v3474 = vadd.f32 %v3077, %v3307
        %v3475 = vadd.f32 %v3078, %v3312
        %v3476 = vadd.f32 %v3079, %v3317
        %v3477 = vadd.f32 %v3080, %v3322
        %v3478 = vadd.f32 %v3081, %v3327
        %v3479 = vadd.f32 %v3082, %v3332
        %v3480 = vadd.f32 %v3083, %v3337
        %v3481 = vadd.f32 %v3084, %v3342
        %v3482 = vadd.f32 %v3085, %v3347
        %v3483 = vadd.f32 %v3086, %v3352
        %v3484 = vadd.f32 %v3087, %v3357
        %v3485 = vadd.f32 %v3088, %v3362
        %v3486 = vadd.f32 %v3089, %v3367
        %v3487 = vadd.f32 %v3090, %v3372
        %v3488 = vadd.f32 %v3091, %v3377
        %v3489 = vadd.f32 %v3092, %v3382
        %v3490 = vadd.f32 %v3093, %v3387
        %v3491 = vadd.f32 %v3094, %v3392
        %v3492 = vadd.f32 %v3095, %v3397
        %v3493 = vadd.f32 %v3096, %v3402
        %v3494 = vadd.f32 %v3097, %v3407
        %v3495 = vadd.f32 %v3098, %v3412
        %v3496 = vadd.f32 %v3099, %v3417
        %v3497 = vadd.f32 %v3100, %v3422
        %v3498 = vadd.f32 %v3101, %v3427
        %v3499 = vadd.f32 %v3102, %v3432
        %v3500 = vadd.f32 %v3103, %v3437
        %v3501 = vadd.f32 %v3104, %v3442
        %v3502 = vadd.f32 %v3105, %v3447
        %v3503 = vadd.f32 %v3106, %v3452
        %v3504 = vadd.f32 %v3107, %v3457
        %v3505 = vld [vmem:[#allocation2 + $0x28] sm:$0xff]
        %v3506 = vld [vmem:[#allocation2 + $0x30] sm:$0xff]
        %v3507 = vld [vmem:[#allocation2 + $0x38] sm:$0xff]
        %v3508 = vld [vmem:[#allocation2 + $0x40] sm:$0xff]
        %v3509 = vld [vmem:[#allocation2 + $0x48] sm:$0xff]
        %v3510 = vld [vmem:[#allocation2 + $0x50] sm:$0xff]
        %v3511 = vld [vmem:[#allocation2 + $0x58] sm:$0xff]
        %v3512 = vld [vmem:[#allocation2 + $0x60] sm:$0xff]
        %v3513 = vld [vmem:[#allocation2 + $0x68] sm:$0xff]
        %v3514 = vld [vmem:[#allocation2 + $0x70] sm:$0xff]
        %v3515 = vld [vmem:[#allocation2 + $0x78] sm:$0xff]
        %v3516 = vld [vmem:[#allocation2 + $0x80] sm:$0xff]
        %v3517 = vld [vmem:[#allocation2 + $0x88] sm:$0xff]
        %v3518 = vld [vmem:[#allocation2 + $0x90] sm:$0xff]
        %v3519 = vld [vmem:[#allocation2 + $0x98] sm:$0xff]
        %v3520 = vld [vmem:[#allocation2 + $0xa0] sm:$0xff]
        %v3521 = vld [vmem:[#allocation2 + $0xa8] sm:$0xff]
        %v3522 = vld [vmem:[#allocation2 + $0xb0] sm:$0xff]
        %v3523 = vld [vmem:[#allocation2 + $0xb8] sm:$0xff]
        %v3524 = vld [vmem:[#allocation2 + $0xc0] sm:$0xff]
        %v3525 = vld [vmem:[#allocation2 + $0xc8] sm:$0xff]
        %v3526 = vld [vmem:[#allocation2 + $0xd0] sm:$0xff]
        %v3527 = vld [vmem:[#allocation2 + $0xd8] sm:$0xff]
        %v3528 = vld [vmem:[#allocation2 + $0xe0] sm:$0xff]
        %v3529 = vld [vmem:[#allocation2 + $0xe8] sm:$0xff]
        %v3530 = vld [vmem:[#allocation2 + $0xf0] sm:$0xff]
        %v3531 = vld [vmem:[#allocation2 + $0xf8] sm:$0xff]
        %v3532 = vld [vmem:[#allocation2 + $0x100] sm:$0xff]
        %v3533 = vld [vmem:[#allocation2 + $0x108] sm:$0xff]
        %v3534 = vld [vmem:[#allocation2 + $0x110] sm:$0xff]
        %v3535 = vld [vmem:[#allocation2 + $0x118] sm:$0xff]
        %v3536 = vld [vmem:[#allocation2 + $0x120] sm:$0xff]
        %v3537 = vld [vmem:[#allocation2 + $0x128] sm:$0xff]
        %v3538 = vld [vmem:[#allocation2 + $0x130] sm:$0xff]
        %v3539 = vld [vmem:[#allocation2 + $0x138] sm:$0xff]
        %v3540 = vld [vmem:[#allocation2 + $0x140] sm:$0xff]
        %v3541 = vld [vmem:[#allocation2 + $0x148] sm:$0xff]
        %v3542 = vld [vmem:[#allocation2 + $0x150] sm:$0xff]
        %v3543 = vld [vmem:[#allocation2 + $0x158] sm:$0xff]
        %v3544 = vld [vmem:[#allocation2 + $0x160] sm:$0xff]
        %v3545 = vld [vmem:[#allocation2 + $0x168] sm:$0xff]
        %v3546 = vld [vmem:[#allocation2 + $0x170] sm:$0xff]
        %v3547 = vld [vmem:[#allocation2 + $0x178] sm:$0xff]
        %v3548 = vld [vmem:[#allocation2 + $0x180] sm:$0xff]
        %v3549 = vld [vmem:[#allocation2 + $0x188] sm:$0xff]
        %s3550 = scalar_lea.vmem [#allocation6], 768
        %v3551 = vld [vmem:[%s3550] sm:$0xff]
        %v3552 = vld [vmem:[%s3550 + $0x8] sm:$0xff]
        %v3553 = vld [vmem:[%s3550 + $0x10] sm:$0xff]
        %v3554 = vld [vmem:[%s3550 + $0x18] sm:$0xff]
        %v3555 = vld [vmem:[%s3550 + $0x20] sm:$0xff]
        %v3556 = vld [vmem:[%s3550 + $0x28] sm:$0xff]
        %v3557 = vld [vmem:[%s3550 + $0x30] sm:$0xff]
        %v3558 = vld [vmem:[%s3550 + $0x38] sm:$0xff]
        %v3559 = vld [vmem:[%s3550 + $0x40] sm:$0xff]
        %v3560 = vld [vmem:[%s3550 + $0x48] sm:$0xff]
        %v3561 = vld [vmem:[%s3550 + $0x50] sm:$0xff]
        %v3562 = vld [vmem:[%s3550 + $0x58] sm:$0xff]
        %v3563 = vld [vmem:[%s3550 + $0x60] sm:$0xff]
        %v3564 = vld [vmem:[%s3550 + $0x68] sm:$0xff]
        %v3565 = vld [vmem:[%s3550 + $0x70] sm:$0xff]
        %v3566 = vld [vmem:[%s3550 + $0x78] sm:$0xff]
        %3567 = vmatprep.subr.mxu0 0.0
        %3568 = vmatpush1.msra.mxu0 %v3551
        %3569 = vmatprep.subr.mxu0 0.0
        %3570 = vmatpush1.msra.mxu0 %v3552
        %3571 = vmatprep.subr.mxu0 0.0
        %3572 = vmatpush1.msra.mxu0 %v3553
        %3573 = vmatprep.subr.mxu0 0.0
        %3574 = vmatpush1.msra.mxu0 %v3554
        %3575 = vmatprep.subr.mxu0 0.0
        %3576 = vmatpush1.msra.mxu0 %v3555
        %3577 = vmatprep.subr.mxu0 0.0
        %3578 = vmatpush1.msra.mxu0 %v3556
        %3579 = vmatprep.subr.mxu0 0.0
        %3580 = vmatpush1.msra.mxu0 %v3557
        %3581 = vmatprep.subr.mxu0 0.0
        %3582 = vmatpush1.msra.mxu0 %v3558
        %3583 = vmatprep.subr.mxu0 0.0
        %3584 = vmatpush1.msra.mxu0 %v3559
        %3585 = vmatprep.subr.mxu0 0.0
        %3586 = vmatpush1.msra.mxu0 %v3560
        %3587 = vmatprep.subr.mxu0 0.0
        %3588 = vmatpush1.msra.mxu0 %v3561
        %3589 = vmatprep.subr.mxu0 0.0
        %3590 = vmatpush1.msra.mxu0 %v3562
        %3591 = vmatprep.subr.mxu0 0.0
        %3592 = vmatpush1.msra.mxu0 %v3563
        %3593 = vmatprep.subr.mxu0 0.0
        %3594 = vmatpush1.msra.mxu0 %v3564
        %3595 = vmatprep.subr.mxu0 0.0
        %3596 = vmatpush1.msra.mxu0 %v3565
        %3597 = vmatprep.subr.mxu0 0.0
        %3598 = vmatpush1.msra.mxu0 %v3566
        %3599 = vmatprep.subr.mxu0 0.0
        %3600 = vmatpush1.msra.mxu0 0.0
        %3601 = vmatprep.subr.mxu0 0.0
        %3602 = vmatpush1.msra.mxu0 0.0
        %3603 = vmatprep.subr.mxu0 0.0
        %3604 = vmatpush1.msra.mxu0 0.0
        %3605 = vmatprep.subr.mxu0 0.0
        %3606 = vmatpush1.msra.mxu0 0.0
        %3607 = vmatprep.subr.mxu0 0.0
        %3608 = vmatpush1.msra.mxu0 0.0
        %3609 = vmatprep.subr.mxu0 0.0
        %3610 = vmatpush1.msra.mxu0 0.0
        %3611 = vmatprep.subr.mxu0 0.0
        %3612 = vmatpush1.msra.mxu0 0.0
        %3613 = vmatprep.subr.mxu0 0.0
        %3614 = vmatpush1.msra.mxu0 0.0
        %3615 = vmatprep.subr.mxu0 0.0
        %3616 = vmatpush1.msra.mxu0 0.0
        %3617 = vmatprep.subr.mxu0 0.0
        %3618 = vmatpush1.msra.mxu0 0.0
        %3619 = vmatprep.subr.mxu0 0.0
        %3620 = vmatpush1.msra.mxu0 0.0
        %3621 = vmatprep.subr.mxu0 0.0
        %3622 = vmatpush1.msra.mxu0 0.0
        %3623 = vmatprep.subr.mxu0 0.0
        %3624 = vmatpush1.msra.mxu0 0.0
        %3625 = vmatprep.subr.mxu0 0.0
        %3626 = vmatpush1.msra.mxu0 0.0
        %3627 = vmatprep.subr.mxu0 0.0
        %3628 = vmatpush1.msra.mxu0 0.0
        %3629 = vmatprep.subr.mxu0 0.0
        %3630 = vmatpush1.msra.mxu0 0.0
        %3631 = vmatprep.mubr.f32.mxu0 0.0
        %3632 = vmatmul.mubr.f32.gmra.mrb[0].mxu0 %v3505
        %v3633 = vpop.f32.mrb[0].mxu0
        %v3634 = vadd.f32 0.0, %v3633
        %v3635 = vpop.f32.mrb[0].mxu0
        %3636 = vmatprep.mubr.f32.mxu0 0.0
        %3637 = vmatmul.mubr.f32.gmra.mrb[0].mxu0 %v3506
        %v3638 = vpop.f32.mrb[0].mxu0
        %v3639 = vadd.f32 0.0, %v3638
        %v3640 = vpop.f32.mrb[0].mxu0
        %3641 = vmatprep.mubr.f32.mxu0 0.0
        %3642 = vmatmul.mubr.f32.gmra.mrb[0].mxu0 %v3507
        %v3643 = vpop.f32.mrb[0].mxu0
        %v3644 = vadd.f32 0.0, %v3643
        %v3645 = vpop.f32.mrb[0].mxu0
        %3646 = vmatprep.mubr.f32.mxu0 0.0
        %3647 = vmatmul.mubr.f32.gmra.mrb[0].mxu0 %v3508
        %v3648 = vpop.f32.mrb[0].mxu0
        %v3649 = vadd.f32 0.0, %v3648
        %v3650 = vpop.f32.mrb[0].mxu0
        %3651 = vmatprep.mubr.f32.mxu0 0.0
        %3652 = vmatmul.mubr.f32.gmra.mrb[0].mxu0 %v3509
        %v3653 = vpop.f32.mrb[0].mxu0
        %v3654 = vadd.f32 0.0, %v3653
        %v3655 = vpop.f32.mrb[0].mxu0
        %3656 = vmatprep.mubr.f32.mxu0 0.0
        %3657 = vmatmul.mubr.f32.gmra.mrb[0].mxu0 %v3510
        %v3658 = vpop.f32.mrb[0].mxu0
        %v3659 = vadd.f32 0.0, %v3658
        %v3660 = vpop.f32.mrb[0].mxu0
        %3661 = vmatprep.mubr.f32.mxu0 0.0
        %3662 = vmatmul.mubr.f32.gmra.mrb[0].mxu0 %v3511
        %v3663 = vpop.f32.mrb[0].mxu0
        %v3664 = vadd.f32 0.0, %v3663
        %v3665 = vpop.f32.mrb[0].mxu0
        %3666 = vmatprep.mubr.f32.mxu0 0.0
        %3667 = vmatmul.mubr.f32.gmra.mrb[0].mxu0 %v3512
        %v3668 = vpop.f32.mrb[0].mxu0
        %v3669 = vadd.f32 0.0, %v3668
        %v3670 = vpop.f32.mrb[0].mxu0
        %3671 = vmatprep.mubr.f32.mxu0 0.0
        %3672 = vmatmul.mubr.f32.gmra.mrb[0].mxu0 %v3513
        %v3673 = vpop.f32.mrb[0].mxu0
        %v3674 = vadd.f32 0.0, %v3673
        %v3675 = vpop.f32.mrb[0].mxu0
        %3676 = vmatprep.mubr.f32.mxu0 0.0
        %3677 = vmatmul.mubr.f32.gmra.mrb[0].mxu0 %v3514
        %v3678 = vpop.f32.mrb[0].mxu0
        %v3679 = vadd.f32 0.0, %v3678
        %v3680 = vpop.f32.mrb[0].mxu0
        %3681 = vmatprep.mubr.f32.mxu0 0.0
        %3682 = vmatmul.mubr.f32.gmra.mrb[0].mxu0 %v3515
        %v3683 = vpop.f32.mrb[0].mxu0
        %v3684 = vadd.f32 0.0, %v3683
        %v3685 = vpop.f32.mrb[0].mxu0
        %3686 = vmatprep.mubr.f32.mxu0 0.0
        %3687 = vmatmul.mubr.f32.gmra.mrb[0].mxu0 %v3516
        %v3688 = vpop.f32.mrb[0].mxu0
        %v3689 = vadd.f32 0.0, %v3688
        %v3690 = vpop.f32.mrb[0].mxu0
        %3691 = vmatprep.mubr.f32.mxu0 0.0
        %3692 = vmatmul.mubr.f32.gmra.mrb[0].mxu0 %v3517
        %v3693 = vpop.f32.mrb[0].mxu0
        %v3694 = vadd.f32 0.0, %v3693
        %v3695 = vpop.f32.mrb[0].mxu0
        %3696 = vmatprep.mubr.f32.mxu0 0.0
        %3697 = vmatmul.mubr.f32.gmra.mrb[0].mxu0 %v3518
        %v3698 = vpop.f32.mrb[0].mxu0
        %v3699 = vadd.f32 0.0, %v3698
        %v3700 = vpop.f32.mrb[0].mxu0
        %3701 = vmatprep.mubr.f32.mxu0 0.0
        %3702 = vmatmul.mubr.f32.gmra.mrb[0].mxu0 %v3519
        %v3703 = vpop.f32.mrb[0].mxu0
        %v3704 = vadd.f32 0.0, %v3703
        %v3705 = vpop.f32.mrb[0].mxu0
        %3706 = vmatprep.mubr.f32.mxu0 0.0
        %3707 = vmatmul.mubr.f32.gmra.mrb[0].mxu0 %v3520
        %v3708 = vpop.f32.mrb[0].mxu0
        %v3709 = vadd.f32 0.0, %v3708
        %v3710 = vpop.f32.mrb[0].mxu0
        %3711 = vmatprep.mubr.f32.mxu0 0.0
        %3712 = vmatmul.mubr.f32.gmra.mrb[0].mxu0 %v3521
        %v3713 = vpop.f32.mrb[0].mxu0
        %v3714 = vadd.f32 0.0, %v3713
        %v3715 = vpop.f32.mrb[0].mxu0
        %3716 = vmatprep.mubr.f32.mxu0 0.0
        %3717 = vmatmul.mubr.f32.gmra.mrb[0].mxu0 %v3522
        %v3718 = vpop.f32.mrb[0].mxu0
        %v3719 = vadd.f32 0.0, %v3718
        %v3720 = vpop.f32.mrb[0].mxu0
        %3721 = vmatprep.mubr.f32.mxu0 0.0
        %3722 = vmatmul.mubr.f32.gmra.mrb[0].mxu0 %v3523
        %v3723 = vpop.f32.mrb[0].mxu0
        %v3724 = vadd.f32 0.0, %v3723
        %v3725 = vpop.f32.mrb[0].mxu0
        %3726 = vmatprep.mubr.f32.mxu0 0.0
        %3727 = vmatmul.mubr.f32.gmra.mrb[0].mxu0 %v3524
        %v3728 = vpop.f32.mrb[0].mxu0
        %v3729 = vadd.f32 0.0, %v3728
        %v3730 = vpop.f32.mrb[0].mxu0
        %3731 = vmatprep.mubr.f32.mxu0 0.0
        %3732 = vmatmul.mubr.f32.gmra.mrb[0].mxu0 %v3525
        %v3733 = vpop.f32.mrb[0].mxu0
        %v3734 = vadd.f32 0.0, %v3733
        %v3735 = vpop.f32.mrb[0].mxu0
        %3736 = vmatprep.mubr.f32.mxu0 0.0
        %3737 = vmatmul.mubr.f32.gmra.mrb[0].mxu0 %v3526
        %v3738 = vpop.f32.mrb[0].mxu0
        %v3739 = vadd.f32 0.0, %v3738
        %v3740 = vpop.f32.mrb[0].mxu0
        %3741 = vmatprep.mubr.f32.mxu0 0.0
        %3742 = vmatmul.mubr.f32.gmra.mrb[0].mxu0 %v3527
        %v3743 = vpop.f32.mrb[0].mxu0
        %v3744 = vadd.f32 0.0, %v3743
        %v3745 = vpop.f32.mrb[0].mxu0
        %3746 = vmatprep.mubr.f32.mxu0 0.0
        %3747 = vmatmul.mubr.f32.gmra.mrb[0].mxu0 %v3528
        %v3748 = vpop.f32.mrb[0].mxu0
        %v3749 = vadd.f32 0.0, %v3748
        %v3750 = vpop.f32.mrb[0].mxu0
        %3751 = vmatprep.mubr.f32.mxu0 0.0
        %3752 = vmatmul.mubr.f32.gmra.mrb[0].mxu0 %v3529
        %v3753 = vpop.f32.mrb[0].mxu0
        %v3754 = vadd.f32 0.0, %v3753
        %v3755 = vpop.f32.mrb[0].mxu0
        %3756 = vmatprep.mubr.f32.mxu0 0.0
        %3757 = vmatmul.mubr.f32.gmra.mrb[0].mxu0 %v3530
        %v3758 = vpop.f32.mrb[0].mxu0
        %v3759 = vadd.f32 0.0, %v3758
        %v3760 = vpop.f32.mrb[0].mxu0
        %3761 = vmatprep.mubr.f32.mxu0 0.0
        %3762 = vmatmul.mubr.f32.gmra.mrb[0].mxu0 %v3531
        %v3763 = vpop.f32.mrb[0].mxu0
        %v3764 = vadd.f32 0.0, %v3763
        %v3765 = vpop.f32.mrb[0].mxu0
        %3766 = vmatprep.mubr.f32.mxu0 0.0
        %3767 = vmatmul.mubr.f32.gmra.mrb[0].mxu0 %v3532
        %v3768 = vpop.f32.mrb[0].mxu0
        %v3769 = vadd.f32 0.0, %v3768
        %v3770 = vpop.f32.mrb[0].mxu0
        %3771 = vmatprep.mubr.f32.mxu0 0.0
        %3772 = vmatmul.mubr.f32.gmra.mrb[0].mxu0 %v3533
        %v3773 = vpop.f32.mrb[0].mxu0
        %v3774 = vadd.f32 0.0, %v3773
        %v3775 = vpop.f32.mrb[0].mxu0
        %3776 = vmatprep.mubr.f32.mxu0 0.0
        %3777 = vmatmul.mubr.f32.gmra.mrb[0].mxu0 %v3534
        %v3778 = vpop.f32.mrb[0].mxu0
        %v3779 = vadd.f32 0.0, %v3778
        %v3780 = vpop.f32.mrb[0].mxu0
        %3781 = vmatprep.mubr.f32.mxu0 0.0
        %3782 = vmatmul.mubr.f32.gmra.mrb[0].mxu0 %v3535
        %v3783 = vpop.f32.mrb[0].mxu0
        %v3784 = vadd.f32 0.0, %v3783
        %v3785 = vpop.f32.mrb[0].mxu0
        %3786 = vmatprep.mubr.f32.mxu0 0.0
        %3787 = vmatmul.mubr.f32.gmra.mrb[0].mxu0 %v3536
        %v3788 = vpop.f32.mrb[0].mxu0
        %v3789 = vadd.f32 0.0, %v3788
        %v3790 = vpop.f32.mrb[0].mxu0
        %3791 = vmatprep.mubr.f32.mxu0 0.0
        %3792 = vmatmul.mubr.f32.gmra.mrb[0].mxu0 %v3537
        %v3793 = vpop.f32.mrb[0].mxu0
        %v3794 = vadd.f32 0.0, %v3793
        %v3795 = vpop.f32.mrb[0].mxu0
        %3796 = vmatprep.mubr.f32.mxu0 0.0
        %3797 = vmatmul.mubr.f32.gmra.mrb[0].mxu0 %v3538
        %v3798 = vpop.f32.mrb[0].mxu0
        %v3799 = vadd.f32 0.0, %v3798
        %v3800 = vpop.f32.mrb[0].mxu0
        %3801 = vmatprep.mubr.f32.mxu0 0.0
        %3802 = vmatmul.mubr.f32.gmra.mrb[0].mxu0 %v3539
        %v3803 = vpop.f32.mrb[0].mxu0
        %v3804 = vadd.f32 0.0, %v3803
        %v3805 = vpop.f32.mrb[0].mxu0
        %3806 = vmatprep.mubr.f32.mxu0 0.0
        %3807 = vmatmul.mubr.f32.gmra.mrb[0].mxu0 %v3540
        %v3808 = vpop.f32.mrb[0].mxu0
        %v3809 = vadd.f32 0.0, %v3808
        %v3810 = vpop.f32.mrb[0].mxu0
        %3811 = vmatprep.mubr.f32.mxu0 0.0
        %3812 = vmatmul.mubr.f32.gmra.mrb[0].mxu0 %v3541
        %v3813 = vpop.f32.mrb[0].mxu0
        %v3814 = vadd.f32 0.0, %v3813
        %v3815 = vpop.f32.mrb[0].mxu0
        %3816 = vmatprep.mubr.f32.mxu0 0.0
        %3817 = vmatmul.mubr.f32.gmra.mrb[0].mxu0 %v3542
        %v3818 = vpop.f32.mrb[0].mxu0
        %v3819 = vadd.f32 0.0, %v3818
        %v3820 = vpop.f32.mrb[0].mxu0
        %3821 = vmatprep.mubr.f32.mxu0 0.0
        %3822 = vmatmul.mubr.f32.gmra.mrb[0].mxu0 %v3543
        %v3823 = vpop.f32.mrb[0].mxu0
        %v3824 = vadd.f32 0.0, %v3823
        %v3825 = vpop.f32.mrb[0].mxu0
        %3826 = vmatprep.mubr.f32.mxu0 0.0
        %3827 = vmatmul.mubr.f32.gmra.mrb[0].mxu0 %v3544
        %v3828 = vpop.f32.mrb[0].mxu0
        %v3829 = vadd.f32 0.0, %v3828
        %v3830 = vpop.f32.mrb[0].mxu0
        %3831 = vmatprep.mubr.f32.mxu0 0.0
        %3832 = vmatmul.mubr.f32.gmra.mrb[0].mxu0 %v3545
        %v3833 = vpop.f32.mrb[0].mxu0
        %v3834 = vadd.f32 0.0, %v3833
        %v3835 = vpop.f32.mrb[0].mxu0
        %3836 = vmatprep.mubr.f32.mxu0 0.0
        %3837 = vmatmul.mubr.f32.gmra.mrb[0].mxu0 %v3546
        %v3838 = vpop.f32.mrb[0].mxu0
        %v3839 = vadd.f32 0.0, %v3838
        %v3840 = vpop.f32.mrb[0].mxu0
        %3841 = vmatprep.mubr.f32.mxu0 0.0
        %3842 = vmatmul.mubr.f32.gmra.mrb[0].mxu0 %v3547
        %v3843 = vpop.f32.mrb[0].mxu0
        %v3844 = vadd.f32 0.0, %v3843
        %v3845 = vpop.f32.mrb[0].mxu0
        %3846 = vmatprep.mubr.f32.mxu0 0.0
        %3847 = vmatmul.mubr.f32.gmra.mrb[0].mxu0 %v3548
        %v3848 = vpop.f32.mrb[0].mxu0
        %v3849 = vadd.f32 0.0, %v3848
        %v3850 = vpop.f32.mrb[0].mxu0
        %3851 = vmatprep.mubr.f32.mxu0 0.0
        %3852 = vmatmul.mubr.f32.gmra.mrb[0].mxu0 %v3549
        %v3853 = vpop.f32.mrb[0].mxu0
        %v3854 = vadd.f32 0.0, %v3853
        %v3855 = vpop.f32.mrb[0].mxu0
        %3856 = vdwg.mxu0
        %v3857 = vadd.f32 %v3460, %v3634
        %v3858 = vadd.f32 %v3461, %v3639
        %v3859 = vadd.f32 %v3462, %v3644
        %v3860 = vadd.f32 %v3463, %v3649
        %v3861 = vadd.f32 %v3464, %v3654
        %v3862 = vadd.f32 %v3465, %v3659
        %v3863 = vadd.f32 %v3466, %v3664
        %v3864 = vadd.f32 %v3467, %v3669
        %v3865 = vadd.f32 %v3468, %v3674
        %v3866 = vadd.f32 %v3469, %v3679
        %v3867 = vadd.f32 %v3470, %v3684
        %v3868 = vadd.f32 %v3471, %v3689
        %v3869 = vadd.f32 %v3472, %v3694
        %v3870 = vadd.f32 %v3473, %v3699
        %v3871 = vadd.f32 %v3474, %v3704
        %v3872 = vadd.f32 %v3475, %v3709
        %v3873 = vadd.f32 %v3476, %v3714
        %v3874 = vadd.f32 %v3477, %v3719
        %v3875 = vadd.f32 %v3478, %v3724
        %v3876 = vadd.f32 %v3479, %v3729
        %v3877 = vadd.f32 %v3480, %v3734
        %v3878 = vadd.f32 %v3481, %v3739
        %v3879 = vadd.f32 %v3482, %v3744
        %v3880 = vadd.f32 %v3483, %v3749
        %v3881 = vadd.f32 %v3484, %v3754
        %v3882 = vadd.f32 %v3485, %v3759
        %v3883 = vadd.f32 %v3486, %v3764
        %v3884 = vadd.f32 %v3487, %v3769
        %v3885 = vadd.f32 %v3488, %v3774
        %v3886 = vadd.f32 %v3489, %v3779
        %v3887 = vadd.f32 %v3490, %v3784
        %v3888 = vadd.f32 %v3491, %v3789
        %v3889 = vadd.f32 %v3492, %v3794
        %v3890 = vadd.f32 %v3493, %v3799
        %v3891 = vadd.f32 %v3494, %v3804
        %v3892 = vadd.f32 %v3495, %v3809
        %v3893 = vadd.f32 %v3496, %v3814
        %v3894 = vadd.f32 %v3497, %v3819
        %v3895 = vadd.f32 %v3498, %v3824
        %v3896 = vadd.f32 %v3499, %v3829
        %v3897 = vadd.f32 %v3500, %v3834
        %v3898 = vadd.f32 %v3501, %v3839
        %v3899 = vadd.f32 %v3502, %v3844
        %v3900 = vadd.f32 %v3503, %v3849
        %v3901 = vadd.f32 %v3504, %v3854
        %v3902 = vld [vmem:[#allocation2 + $0x29] sm:$0xff]
        %v3903 = vld [vmem:[#allocation2 + $0x31] sm:$0xff]
        %v3904 = vld [vmem:[#allocation2 + $0x39] sm:$0xff]
        %v3905 = vld [vmem:[#allocation2 + $0x41] sm:$0xff]
        %v3906 = vld [vmem:[#allocation2 + $0x49] sm:$0xff]
        %v3907 = vld [vmem:[#allocation2 + $0x51] sm:$0xff]
        %v3908 = vld [vmem:[#allocation2 + $0x59] sm:$0xff]
        %v3909 = vld [vmem:[#allocation2 + $0x61] sm:$0xff]
        %v3910 = vld [vmem:[#allocation2 + $0x69] sm:$0xff]
        %v3911 = vld [vmem:[#allocation2 + $0x71] sm:$0xff]
        %v3912 = vld [vmem:[#allocation2 + $0x79] sm:$0xff]
        %v3913 = vld [vmem:[#allocation2 + $0x81] sm:$0xff]
        %v3914 = vld [vmem:[#allocation2 + $0x89] sm:$0xff]
        %v3915 = vld [vmem:[#allocation2 + $0x91] sm:$0xff]
        %v3916 = vld [vmem:[#allocation2 + $0x99] sm:$0xff]
        %v3917 = vld [vmem:[#allocation2 + $0xa1] sm:$0xff]
        %v3918 = vld [vmem:[#allocation2 + $0xa9] sm:$0xff]
        %v3919 = vld [vmem:[#allocation2 + $0xb1] sm:$0xff]
        %v3920 = vld [vmem:[#allocation2 + $0xb9] sm:$0xff]
        %v3921 = vld [vmem:[#allocation2 + $0xc1] sm:$0xff]
        %v3922 = vld [vmem:[#allocation2 + $0xc9] sm:$0xff]
        %v3923 = vld [vmem:[#allocation2 + $0xd1] sm:$0xff]
        %v3924 = vld [vmem:[#allocation2 + $0xd9] sm:$0xff]
        %v3925 = vld [vmem:[#allocation2 + $0xe1] sm:$0xff]
        %v3926 = vld [vmem:[#allocation2 + $0xe9] sm:$0xff]
        %v3927 = vld [vmem:[#allocation2 + $0xf1] sm:$0xff]
        %v3928 = vld [vmem:[#allocation2 + $0xf9] sm:$0xff]
        %v3929 = vld [vmem:[#allocation2 + $0x101] sm:$0xff]
        %v3930 = vld [vmem:[#allocation2 + $0x109] sm:$0xff]
        %v3931 = vld [vmem:[#allocation2 + $0x111] sm:$0xff]
        %v3932 = vld [vmem:[#allocation2 + $0x119] sm:$0xff]
        %v3933 = vld [vmem:[#allocation2 + $0x121] sm:$0xff]
        %v3934 = vld [vmem:[#allocation2 + $0x129] sm:$0xff]
        %v3935 = vld [vmem:[#allocation2 + $0x131] sm:$0xff]
        %v3936 = vld [vmem:[#allocation2 + $0x139] sm:$0xff]
        %v3937 = vld [vmem:[#allocation2 + $0x141] sm:$0xff]
        %v3938 = vld [vmem:[#allocation2 + $0x149] sm:$0xff]
        %v3939 = vld [vmem:[#allocation2 + $0x151] sm:$0xff]
        %v3940 = vld [vmem:[#allocation2 + $0x159] sm:$0xff]
        %v3941 = vld [vmem:[#allocation2 + $0x161] sm:$0xff]
        %v3942 = vld [vmem:[#allocation2 + $0x169] sm:$0xff]
        %v3943 = vld [vmem:[#allocation2 + $0x171] sm:$0xff]
        %v3944 = vld [vmem:[#allocation2 + $0x179] sm:$0xff]
        %v3945 = vld [vmem:[#allocation2 + $0x181] sm:$0xff]
        %v3946 = vld [vmem:[#allocation2 + $0x189] sm:$0xff]
        %s3947 = scalar_lea.vmem [#allocation6], 896
        %v3948 = vld [vmem:[%s3947] sm:$0xff]
        %v3949 = vld [vmem:[%s3947 + $0x8] sm:$0xff]
        %v3950 = vld [vmem:[%s3947 + $0x10] sm:$0xff]
        %v3951 = vld [vmem:[%s3947 + $0x18] sm:$0xff]
        %v3952 = vld [vmem:[%s3947 + $0x20] sm:$0xff]
        %v3953 = vld [vmem:[%s3947 + $0x28] sm:$0xff]
        %v3954 = vld [vmem:[%s3947 + $0x30] sm:$0xff]
        %v3955 = vld [vmem:[%s3947 + $0x38] sm:$0xff]
        %v3956 = vld [vmem:[%s3947 + $0x40] sm:$0xff]
        %v3957 = vld [vmem:[%s3947 + $0x48] sm:$0xff]
        %v3958 = vld [vmem:[%s3947 + $0x50] sm:$0xff]
        %v3959 = vld [vmem:[%s3947 + $0x58] sm:$0xff]
        %v3960 = vld [vmem:[%s3947 + $0x60] sm:$0xff]
        %v3961 = vld [vmem:[%s3947 + $0x68] sm:$0xff]
        %v3962 = vld [vmem:[%s3947 + $0x70] sm:$0xff]
        %v3963 = vld [vmem:[%s3947 + $0x78] sm:$0xff]
        %3964 = vmatprep.subr.mxu0 0.0
        %3965 = vmatpush1.msra.mxu0 %v3948
        %3966 = vmatprep.subr.mxu0 0.0
        %3967 = vmatpush1.msra.mxu0 %v3949
        %3968 = vmatprep.subr.mxu0 0.0
        %3969 = vmatpush1.msra.mxu0 %v3950
        %3970 = vmatprep.subr.mxu0 0.0
        %3971 = vmatpush1.msra.mxu0 %v3951
        %3972 = vmatprep.subr.mxu0 0.0
        %3973 = vmatpush1.msra.mxu0 %v3952
        %3974 = vmatprep.subr.mxu0 0.0
        %3975 = vmatpush1.msra.mxu0 %v3953
        %3976 = vmatprep.subr.mxu0 0.0
        %3977 = vmatpush1.msra.mxu0 %v3954
        %3978 = vmatprep.subr.mxu0 0.0
        %3979 = vmatpush1.msra.mxu0 %v3955
        %3980 = vmatprep.subr.mxu0 0.0
        %3981 = vmatpush1.msra.mxu0 %v3956
        %3982 = vmatprep.subr.mxu0 0.0
        %3983 = vmatpush1.msra.mxu0 %v3957
        %3984 = vmatprep.subr.mxu0 0.0
        %3985 = vmatpush1.msra.mxu0 %v3958
        %3986 = vmatprep.subr.mxu0 0.0
        %3987 = vmatpush1.msra.mxu0 %v3959
        %3988 = vmatprep.subr.mxu0 0.0
        %3989 = vmatpush1.msra.mxu0 %v3960
        %3990 = vmatprep.subr.mxu0 0.0
        %3991 = vmatpush1.msra.mxu0 %v3961
        %3992 = vmatprep.subr.mxu0 0.0
        %3993 = vmatpush1.msra.mxu0 %v3962
        %3994 = vmatprep.subr.mxu0 0.0
        %3995 = vmatpush1.msra.mxu0 %v3963
        %3996 = vmatprep.subr.mxu0 0.0
        %3997 = vmatpush1.msra.mxu0 0.0
        %3998 = vmatprep.subr.mxu0 0.0
        %3999 = vmatpush1.msra.mxu0 0.0
        %4000 = vmatprep.subr.mxu0 0.0
        %4001 = vmatpush1.msra.mxu0 0.0
        %4002 = vmatprep.subr.mxu0 0.0
        %4003 = vmatpush1.msra.mxu0 0.0
        %4004 = vmatprep.subr.mxu0 0.0
        %4005 = vmatpush1.msra.mxu0 0.0
        %4006 = vmatprep.subr.mxu0 0.0
        %4007 = vmatpush1.msra.mxu0 0.0
        %4008 = vmatprep.subr.mxu0 0.0
        %4009 = vmatpush1.msra.mxu0 0.0
        %4010 = vmatprep.subr.mxu0 0.0
        %4011 = vmatpush1.msra.mxu0 0.0
        %4012 = vmatprep.subr.mxu0 0.0
        %4013 = vmatpush1.msra.mxu0 0.0
        %4014 = vmatprep.subr.mxu0 0.0
        %4015 = vmatpush1.msra.mxu0 0.0
        %4016 = vmatprep.subr.mxu0 0.0
        %4017 = vmatpush1.msra.mxu0 0.0
        %4018 = vmatprep.subr.mxu0 0.0
        %4019 = vmatpush1.msra.mxu0 0.0
        %4020 = vmatprep.subr.mxu0 0.0
        %4021 = vmatpush1.msra.mxu0 0.0
        %4022 = vmatprep.subr.mxu0 0.0
        %4023 = vmatpush1.msra.mxu0 0.0
        %4024 = vmatprep.subr.mxu0 0.0
        %4025 = vmatpush1.msra.mxu0 0.0
        %4026 = vmatprep.subr.mxu0 0.0
        %4027 = vmatpush1.msra.mxu0 0.0
        %4028 = vmatprep.mubr.f32.mxu0 0.0
        %4029 = vmatmul.mubr.f32.gmra.mrb[0].mxu0 %v3902
        %v4030 = vpop.f32.mrb[0].mxu0
        %v4031 = vadd.f32 0.0, %v4030
        %v4032 = vpop.f32.mrb[0].mxu0
        %4033 = vmatprep.mubr.f32.mxu0 0.0
        %4034 = vmatmul.mubr.f32.gmra.mrb[0].mxu0 %v3903
        %v4035 = vpop.f32.mrb[0].mxu0
        %v4036 = vadd.f32 0.0, %v4035
        %v4037 = vpop.f32.mrb[0].mxu0
        %4038 = vmatprep.mubr.f32.mxu0 0.0
        %4039 = vmatmul.mubr.f32.gmra.mrb[0].mxu0 %v3904
        %v4040 = vpop.f32.mrb[0].mxu0
        %v4041 = vadd.f32 0.0, %v4040
        %v4042 = vpop.f32.mrb[0].mxu0
        %4043 = vmatprep.mubr.f32.mxu0 0.0
        %4044 = vmatmul.mubr.f32.gmra.mrb[0].mxu0 %v3905
        %v4045 = vpop.f32.mrb[0].mxu0
        %v4046 = vadd.f32 0.0, %v4045
        %v4047 = vpop.f32.mrb[0].mxu0
        %4048 = vmatprep.mubr.f32.mxu0 0.0
        %4049 = vmatmul.mubr.f32.gmra.mrb[0].mxu0 %v3906
        %v4050 = vpop.f32.mrb[0].mxu0
        %v4051 = vadd.f32 0.0, %v4050
        %v4052 = vpop.f32.mrb[0].mxu0
        %4053 = vmatprep.mubr.f32.mxu0 0.0
        %4054 = vmatmul.mubr.f32.gmra.mrb[0].mxu0 %v3907
        %v4055 = vpop.f32.mrb[0].mxu0
        %v4056 = vadd.f32 0.0, %v4055
        %v4057 = vpop.f32.mrb[0].mxu0
        %4058 = vmatprep.mubr.f32.mxu0 0.0
        %4059 = vmatmul.mubr.f32.gmra.mrb[0].mxu0 %v3908
        %v4060 = vpop.f32.mrb[0].mxu0
        %v4061 = vadd.f32 0.0, %v4060
        %v4062 = vpop.f32.mrb[0].mxu0
        %4063 = vmatprep.mubr.f32.mxu0 0.0
        %4064 = vmatmul.mubr.f32.gmra.mrb[0].mxu0 %v3909
        %v4065 = vpop.f32.mrb[0].mxu0
        %v4066 = vadd.f32 0.0, %v4065
        %v4067 = vpop.f32.mrb[0].mxu0
        %4068 = vmatprep.mubr.f32.mxu0 0.0
        %4069 = vmatmul.mubr.f32.gmra.mrb[0].mxu0 %v3910
        %v4070 = vpop.f32.mrb[0].mxu0
        %v4071 = vadd.f32 0.0, %v4070
        %v4072 = vpop.f32.mrb[0].mxu0
        %4073 = vmatprep.mubr.f32.mxu0 0.0
        %4074 = vmatmul.mubr.f32.gmra.mrb[0].mxu0 %v3911
        %v4075 = vpop.f32.mrb[0].mxu0
        %v4076 = vadd.f32 0.0, %v4075
        %v4077 = vpop.f32.mrb[0].mxu0
        %4078 = vmatprep.mubr.f32.mxu0 0.0
        %4079 = vmatmul.mubr.f32.gmra.mrb[0].mxu0 %v3912
        %v4080 = vpop.f32.mrb[0].mxu0
        %v4081 = vadd.f32 0.0, %v4080
        %v4082 = vpop.f32.mrb[0].mxu0
        %4083 = vmatprep.mubr.f32.mxu0 0.0
        %4084 = vmatmul.mubr.f32.gmra.mrb[0].mxu0 %v3913
        %v4085 = vpop.f32.mrb[0].mxu0
        %v4086 = vadd.f32 0.0, %v4085
        %v4087 = vpop.f32.mrb[0].mxu0
        %4088 = vmatprep.mubr.f32.mxu0 0.0
        %4089 = vmatmul.mubr.f32.gmra.mrb[0].mxu0 %v3914
        %v4090 = vpop.f32.mrb[0].mxu0
        %v4091 = vadd.f32 0.0, %v4090
        %v4092 = vpop.f32.mrb[0].mxu0
        %4093 = vmatprep.mubr.f32.mxu0 0.0
        %4094 = vmatmul.mubr.f32.gmra.mrb[0].mxu0 %v3915
        %v4095 = vpop.f32.mrb[0].mxu0
        %v4096 = vadd.f32 0.0, %v4095
        %v4097 = vpop.f32.mrb[0].mxu0
        %4098 = vmatprep.mubr.f32.mxu0 0.0
        %4099 = vmatmul.mubr.f32.gmra.mrb[0].mxu0 %v3916
        %v4100 = vpop.f32.mrb[0].mxu0
        %v4101 = vadd.f32 0.0, %v4100
        %v4102 = vpop.f32.mrb[0].mxu0
        %4103 = vmatprep.mubr.f32.mxu0 0.0
        %4104 = vmatmul.mubr.f32.gmra.mrb[0].mxu0 %v3917
        %v4105 = vpop.f32.mrb[0].mxu0
        %v4106 = vadd.f32 0.0, %v4105
        %v4107 = vpop.f32.mrb[0].mxu0
        %4108 = vmatprep.mubr.f32.mxu0 0.0
        %4109 = vmatmul.mubr.f32.gmra.mrb[0].mxu0 %v3918
        %v4110 = vpop.f32.mrb[0].mxu0
        %v4111 = vadd.f32 0.0, %v4110
        %v4112 = vpop.f32.mrb[0].mxu0
        %4113 = vmatprep.mubr.f32.mxu0 0.0
        %4114 = vmatmul.mubr.f32.gmra.mrb[0].mxu0 %v3919
        %v4115 = vpop.f32.mrb[0].mxu0
        %v4116 = vadd.f32 0.0, %v4115
        %v4117 = vpop.f32.mrb[0].mxu0
        %4118 = vmatprep.mubr.f32.mxu0 0.0
        %4119 = vmatmul.mubr.f32.gmra.mrb[0].mxu0 %v3920
        %v4120 = vpop.f32.mrb[0].mxu0
        %v4121 = vadd.f32 0.0, %v4120
        %v4122 = vpop.f32.mrb[0].mxu0
        %4123 = vmatprep.mubr.f32.mxu0 0.0
        %4124 = vmatmul.mubr.f32.gmra.mrb[0].mxu0 %v3921
        %v4125 = vpop.f32.mrb[0].mxu0
        %v4126 = vadd.f32 0.0, %v4125
        %v4127 = vpop.f32.mrb[0].mxu0
        %4128 = vmatprep.mubr.f32.mxu0 0.0
        %4129 = vmatmul.mubr.f32.gmra.mrb[0].mxu0 %v3922
        %v4130 = vpop.f32.mrb[0].mxu0
        %v4131 = vadd.f32 0.0, %v4130
        %v4132 = vpop.f32.mrb[0].mxu0
        %4133 = vmatprep.mubr.f32.mxu0 0.0
        %4134 = vmatmul.mubr.f32.gmra.mrb[0].mxu0 %v3923
        %v4135 = vpop.f32.mrb[0].mxu0
        %v4136 = vadd.f32 0.0, %v4135
        %v4137 = vpop.f32.mrb[0].mxu0
        %4138 = vmatprep.mubr.f32.mxu0 0.0
        %4139 = vmatmul.mubr.f32.gmra.mrb[0].mxu0 %v3924
        %v4140 = vpop.f32.mrb[0].mxu0
        %v4141 = vadd.f32 0.0, %v4140
        %v4142 = vpop.f32.mrb[0].mxu0
        %4143 = vmatprep.mubr.f32.mxu0 0.0
        %4144 = vmatmul.mubr.f32.gmra.mrb[0].mxu0 %v3925
        %v4145 = vpop.f32.mrb[0].mxu0
        %v4146 = vadd.f32 0.0, %v4145
        %v4147 = vpop.f32.mrb[0].mxu0
        %4148 = vmatprep.mubr.f32.mxu0 0.0
        %4149 = vmatmul.mubr.f32.gmra.mrb[0].mxu0 %v3926
        %v4150 = vpop.f32.mrb[0].mxu0
        %v4151 = vadd.f32 0.0, %v4150
        %v4152 = vpop.f32.mrb[0].mxu0
        %4153 = vmatprep.mubr.f32.mxu0 0.0
        %4154 = vmatmul.mubr.f32.gmra.mrb[0].mxu0 %v3927
        %v4155 = vpop.f32.mrb[0].mxu0
        %v4156 = vadd.f32 0.0, %v4155
        %v4157 = vpop.f32.mrb[0].mxu0
        %4158 = vmatprep.mubr.f32.mxu0 0.0
        %4159 = vmatmul.mubr.f32.gmra.mrb[0].mxu0 %v3928
        %v4160 = vpop.f32.mrb[0].mxu0
        %v4161 = vadd.f32 0.0, %v4160
        %v4162 = vpop.f32.mrb[0].mxu0
        %4163 = vmatprep.mubr.f32.mxu0 0.0
        %4164 = vmatmul.mubr.f32.gmra.mrb[0].mxu0 %v3929
        %v4165 = vpop.f32.mrb[0].mxu0
        %v4166 = vadd.f32 0.0, %v4165
        %v4167 = vpop.f32.mrb[0].mxu0
        %4168 = vmatprep.mubr.f32.mxu0 0.0
        %4169 = vmatmul.mubr.f32.gmra.mrb[0].mxu0 %v3930
        %v4170 = vpop.f32.mrb[0].mxu0
        %v4171 = vadd.f32 0.0, %v4170
        %v4172 = vpop.f32.mrb[0].mxu0
        %4173 = vmatprep.mubr.f32.mxu0 0.0
        %4174 = vmatmul.mubr.f32.gmra.mrb[0].mxu0 %v3931
        %v4175 = vpop.f32.mrb[0].mxu0
        %v4176 = vadd.f32 0.0, %v4175
        %v4177 = vpop.f32.mrb[0].mxu0
        %4178 = vmatprep.mubr.f32.mxu0 0.0
        %4179 = vmatmul.mubr.f32.gmra.mrb[0].mxu0 %v3932
        %v4180 = vpop.f32.mrb[0].mxu0
        %v4181 = vadd.f32 0.0, %v4180
        %v4182 = vpop.f32.mrb[0].mxu0
        %4183 = vmatprep.mubr.f32.mxu0 0.0
        %4184 = vmatmul.mubr.f32.gmra.mrb[0].mxu0 %v3933
        %v4185 = vpop.f32.mrb[0].mxu0
        %v4186 = vadd.f32 0.0, %v4185
        %v4187 = vpop.f32.mrb[0].mxu0
        %4188 = vmatprep.mubr.f32.mxu0 0.0
        %4189 = vmatmul.mubr.f32.gmra.mrb[0].mxu0 %v3934
        %v4190 = vpop.f32.mrb[0].mxu0
        %v4191 = vadd.f32 0.0, %v4190
        %v4192 = vpop.f32.mrb[0].mxu0
        %4193 = vmatprep.mubr.f32.mxu0 0.0
        %4194 = vmatmul.mubr.f32.gmra.mrb[0].mxu0 %v3935
        %v4195 = vpop.f32.mrb[0].mxu0
        %v4196 = vadd.f32 0.0, %v4195
        %v4197 = vpop.f32.mrb[0].mxu0
        %4198 = vmatprep.mubr.f32.mxu0 0.0
        %4199 = vmatmul.mubr.f32.gmra.mrb[0].mxu0 %v3936
        %v4200 = vpop.f32.mrb[0].mxu0
        %v4201 = vadd.f32 0.0, %v4200
        %v4202 = vpop.f32.mrb[0].mxu0
        %4203 = vmatprep.mubr.f32.mxu0 0.0
        %4204 = vmatmul.mubr.f32.gmra.mrb[0].mxu0 %v3937
        %v4205 = vpop.f32.mrb[0].mxu0
        %v4206 = vadd.f32 0.0, %v4205
        %v4207 = vpop.f32.mrb[0].mxu0
        %4208 = vmatprep.mubr.f32.mxu0 0.0
        %4209 = vmatmul.mubr.f32.gmra.mrb[0].mxu0 %v3938
        %v4210 = vpop.f32.mrb[0].mxu0
        %v4211 = vadd.f32 0.0, %v4210
        %v4212 = vpop.f32.mrb[0].mxu0
        %4213 = vmatprep.mubr.f32.mxu0 0.0
        %4214 = vmatmul.mubr.f32.gmra.mrb[0].mxu0 %v3939
        %v4215 = vpop.f32.mrb[0].mxu0
        %v4216 = vadd.f32 0.0, %v4215
        %v4217 = vpop.f32.mrb[0].mxu0
        %4218 = vmatprep.mubr.f32.mxu0 0.0
        %4219 = vmatmul.mubr.f32.gmra.mrb[0].mxu0 %v3940
        %v4220 = vpop.f32.mrb[0].mxu0
        %v4221 = vadd.f32 0.0, %v4220
        %v4222 = vpop.f32.mrb[0].mxu0
        %4223 = vmatprep.mubr.f32.mxu0 0.0
        %4224 = vmatmul.mubr.f32.gmra.mrb[0].mxu0 %v3941
        %v4225 = vpop.f32.mrb[0].mxu0
        %v4226 = vadd.f32 0.0, %v4225
        %v4227 = vpop.f32.mrb[0].mxu0
        %4228 = vmatprep.mubr.f32.mxu0 0.0
        %4229 = vmatmul.mubr.f32.gmra.mrb[0].mxu0 %v3942
        %v4230 = vpop.f32.mrb[0].mxu0
        %v4231 = vadd.f32 0.0, %v4230
        %v4232 = vpop.f32.mrb[0].mxu0
        %4233 = vmatprep.mubr.f32.mxu0 0.0
        %4234 = vmatmul.mubr.f32.gmra.mrb[0].mxu0 %v3943
        %v4235 = vpop.f32.mrb[0].mxu0
        %v4236 = vadd.f32 0.0, %v4235
        %v4237 = vpop.f32.mrb[0].mxu0
        %4238 = vmatprep.mubr.f32.mxu0 0.0
        %4239 = vmatmul.mubr.f32.gmra.mrb[0].mxu0 %v3944
        %v4240 = vpop.f32.mrb[0].mxu0
        %v4241 = vadd.f32 0.0, %v4240
        %v4242 = vpop.f32.mrb[0].mxu0
        %4243 = vmatprep.mubr.f32.mxu0 0.0
        %4244 = vmatmul.mubr.f32.gmra.mrb[0].mxu0 %v3945
        %v4245 = vpop.f32.mrb[0].mxu0
        %v4246 = vadd.f32 0.0, %v4245
        %v4247 = vpop.f32.mrb[0].mxu0
        %4248 = vmatprep.mubr.f32.mxu0 0.0
        %4249 = vmatmul.mubr.f32.gmra.mrb[0].mxu0 %v3946
        %v4250 = vpop.f32.mrb[0].mxu0
        %v4251 = vadd.f32 0.0, %v4250
        %v4252 = vpop.f32.mrb[0].mxu0
        %4253 = vdwg.mxu0
        %v4254 = vadd.f32 %v3857, %v4031
        %v4255 = vadd.f32 %v3858, %v4036
        %v4256 = vadd.f32 %v3859, %v4041
        %v4257 = vadd.f32 %v3860, %v4046
        %v4258 = vadd.f32 %v3861, %v4051
        %v4259 = vadd.f32 %v3862, %v4056
        %v4260 = vadd.f32 %v3863, %v4061
        %v4261 = vadd.f32 %v3864, %v4066
        %v4262 = vadd.f32 %v3865, %v4071
        %v4263 = vadd.f32 %v3866, %v4076
        %v4264 = vadd.f32 %v3867, %v4081
        %v4265 = vadd.f32 %v3868, %v4086
        %v4266 = vadd.f32 %v3869, %v4091
        %v4267 = vadd.f32 %v3870, %v4096
        %v4268 = vadd.f32 %v3871, %v4101
        %v4269 = vadd.f32 %v3872, %v4106
        %v4270 = vadd.f32 %v3873, %v4111
        %v4271 = vadd.f32 %v3874, %v4116
        %v4272 = vadd.f32 %v3875, %v4121
        %v4273 = vadd.f32 %v3876, %v4126
        %v4274 = vadd.f32 %v3877, %v4131
        %v4275 = vadd.f32 %v3878, %v4136
        %v4276 = vadd.f32 %v3879, %v4141
        %v4277 = vadd.f32 %v3880, %v4146
        %v4278 = vadd.f32 %v3881, %v4151
        %v4279 = vadd.f32 %v3882, %v4156
        %v4280 = vadd.f32 %v3883, %v4161
        %v4281 = vadd.f32 %v3884, %v4166
        %v4282 = vadd.f32 %v3885, %v4171
        %v4283 = vadd.f32 %v3886, %v4176
        %v4284 = vadd.f32 %v3887, %v4181
        %v4285 = vadd.f32 %v3888, %v4186
        %v4286 = vadd.f32 %v3889, %v4191
        %v4287 = vadd.f32 %v3890, %v4196
        %v4288 = vadd.f32 %v3891, %v4201
        %v4289 = vadd.f32 %v3892, %v4206
        %v4290 = vadd.f32 %v3893, %v4211
        %v4291 = vadd.f32 %v3894, %v4216
        %v4292 = vadd.f32 %v3895, %v4221
        %v4293 = vadd.f32 %v3896, %v4226
        %v4294 = vadd.f32 %v3897, %v4231
        %v4295 = vadd.f32 %v3898, %v4236
        %v4296 = vadd.f32 %v3899, %v4241
        %v4297 = vadd.f32 %v3900, %v4246
        %v4298 = vadd.f32 %v3901, %v4251
        %v4299 = vld [vmem:[#allocation2 + $0x2a] sm:$0xff]
        %v4300 = vld [vmem:[#allocation2 + $0x32] sm:$0xff]
        %v4301 = vld [vmem:[#allocation2 + $0x3a] sm:$0xff]
        %v4302 = vld [vmem:[#allocation2 + $0x42] sm:$0xff]
        %v4303 = vld [vmem:[#allocation2 + $0x4a] sm:$0xff]
        %v4304 = vld [vmem:[#allocation2 + $0x52] sm:$0xff]
        %v4305 = vld [vmem:[#allocation2 + $0x5a] sm:$0xff]
        %v4306 = vld [vmem:[#allocation2 + $0x62] sm:$0xff]
        %v4307 = vld [vmem:[#allocation2 + $0x6a] sm:$0xff]
        %v4308 = vld [vmem:[#allocation2 + $0x72] sm:$0xff]
        %v4309 = vld [vmem:[#allocation2 + $0x7a] sm:$0xff]
        %v4310 = vld [vmem:[#allocation2 + $0x82] sm:$0xff]
        %v4311 = vld [vmem:[#allocation2 + $0x8a] sm:$0xff]
        %v4312 = vld [vmem:[#allocation2 + $0x92] sm:$0xff]
        %v4313 = vld [vmem:[#allocation2 + $0x9a] sm:$0xff]
        %v4314 = vld [vmem:[#allocation2 + $0xa2] sm:$0xff]
        %v4315 = vld [vmem:[#allocation2 + $0xaa] sm:$0xff]
        %v4316 = vld [vmem:[#allocation2 + $0xb2] sm:$0xff]
        %v4317 = vld [vmem:[#allocation2 + $0xba] sm:$0xff]
        %v4318 = vld [vmem:[#allocation2 + $0xc2] sm:$0xff]
        %v4319 = vld [vmem:[#allocation2 + $0xca] sm:$0xff]
        %v4320 = vld [vmem:[#allocation2 + $0xd2] sm:$0xff]
        %v4321 = vld [vmem:[#allocation2 + $0xda] sm:$0xff]
        %v4322 = vld [vmem:[#allocation2 + $0xe2] sm:$0xff]
        %v4323 = vld [vmem:[#allocation2 + $0xea] sm:$0xff]
        %v4324 = vld [vmem:[#allocation2 + $0xf2] sm:$0xff]
        %v4325 = vld [vmem:[#allocation2 + $0xfa] sm:$0xff]
        %v4326 = vld [vmem:[#allocation2 + $0x102] sm:$0xff]
        %v4327 = vld [vmem:[#allocation2 + $0x10a] sm:$0xff]
        %v4328 = vld [vmem:[#allocation2 + $0x112] sm:$0xff]
        %v4329 = vld [vmem:[#allocation2 + $0x11a] sm:$0xff]
        %v4330 = vld [vmem:[#allocation2 + $0x122] sm:$0xff]
        %v4331 = vld [vmem:[#allocation2 + $0x12a] sm:$0xff]
        %v4332 = vld [vmem:[#allocation2 + $0x132] sm:$0xff]
        %v4333 = vld [vmem:[#allocation2 + $0x13a] sm:$0xff]
        %v4334 = vld [vmem:[#allocation2 + $0x142] sm:$0xff]
        %v4335 = vld [vmem:[#allocation2 + $0x14a] sm:$0xff]
        %v4336 = vld [vmem:[#allocation2 + $0x152] sm:$0xff]
        %v4337 = vld [vmem:[#allocation2 + $0x15a] sm:$0xff]
        %v4338 = vld [vmem:[#allocation2 + $0x162] sm:$0xff]
        %v4339 = vld [vmem:[#allocation2 + $0x16a] sm:$0xff]
        %v4340 = vld [vmem:[#allocation2 + $0x172] sm:$0xff]
        %v4341 = vld [vmem:[#allocation2 + $0x17a] sm:$0xff]
        %v4342 = vld [vmem:[#allocation2 + $0x182] sm:$0xff]
        %v4343 = vld [vmem:[#allocation2 + $0x18a] sm:$0xff]
        %s4344 = scalar_lea.vmem [#allocation6], 1024
        %v4345 = vld [vmem:[%s4344] sm:$0xff]
        %v4346 = vld [vmem:[%s4344 + $0x8] sm:$0xff]
        %v4347 = vld [vmem:[%s4344 + $0x10] sm:$0xff]
        %v4348 = vld [vmem:[%s4344 + $0x18] sm:$0xff]
        %v4349 = vld [vmem:[%s4344 + $0x20] sm:$0xff]
        %v4350 = vld [vmem:[%s4344 + $0x28] sm:$0xff]
        %v4351 = vld [vmem:[%s4344 + $0x30] sm:$0xff]
        %v4352 = vld [vmem:[%s4344 + $0x38] sm:$0xff]
        %v4353 = vld [vmem:[%s4344 + $0x40] sm:$0xff]
        %v4354 = vld [vmem:[%s4344 + $0x48] sm:$0xff]
        %v4355 = vld [vmem:[%s4344 + $0x50] sm:$0xff]
        %v4356 = vld [vmem:[%s4344 + $0x58] sm:$0xff]
        %v4357 = vld [vmem:[%s4344 + $0x60] sm:$0xff]
        %v4358 = vld [vmem:[%s4344 + $0x68] sm:$0xff]
        %v4359 = vld [vmem:[%s4344 + $0x70] sm:$0xff]
        %v4360 = vld [vmem:[%s4344 + $0x78] sm:$0xff]
        %4361 = vmatprep.subr.mxu0 0.0
        %4362 = vmatpush1.msra.mxu0 %v4345
        %4363 = vmatprep.subr.mxu0 0.0
        %4364 = vmatpush1.msra.mxu0 %v4346
        %4365 = vmatprep.subr.mxu0 0.0
        %4366 = vmatpush1.msra.mxu0 %v4347
        %4367 = vmatprep.subr.mxu0 0.0
        %4368 = vmatpush1.msra.mxu0 %v4348
        %4369 = vmatprep.subr.mxu0 0.0
        %4370 = vmatpush1.msra.mxu0 %v4349
        %4371 = vmatprep.subr.mxu0 0.0
        %4372 = vmatpush1.msra.mxu0 %v4350
        %4373 = vmatprep.subr.mxu0 0.0
        %4374 = vmatpush1.msra.mxu0 %v4351
        %4375 = vmatprep.subr.mxu0 0.0
        %4376 = vmatpush1.msra.mxu0 %v4352
        %4377 = vmatprep.subr.mxu0 0.0
        %4378 = vmatpush1.msra.mxu0 %v4353
        %4379 = vmatprep.subr.mxu0 0.0
        %4380 = vmatpush1.msra.mxu0 %v4354
        %4381 = vmatprep.subr.mxu0 0.0
        %4382 = vmatpush1.msra.mxu0 %v4355
        %4383 = vmatprep.subr.mxu0 0.0
        %4384 = vmatpush1.msra.mxu0 %v4356
        %4385 = vmatprep.subr.mxu0 0.0
        %4386 = vmatpush1.msra.mxu0 %v4357
        %4387 = vmatprep.subr.mxu0 0.0
        %4388 = vmatpush1.msra.mxu0 %v4358
        %4389 = vmatprep.subr.mxu0 0.0
        %4390 = vmatpush1.msra.mxu0 %v4359
        %4391 = vmatprep.subr.mxu0 0.0
        %4392 = vmatpush1.msra.mxu0 %v4360
        %4393 = vmatprep.subr.mxu0 0.0
        %4394 = vmatpush1.msra.mxu0 0.0
        %4395 = vmatprep.subr.mxu0 0.0
        %4396 = vmatpush1.msra.mxu0 0.0
        %4397 = vmatprep.subr.mxu0 0.0
        %4398 = vmatpush1.msra.mxu0 0.0
        %4399 = vmatprep.subr.mxu0 0.0
        %4400 = vmatpush1.msra.mxu0 0.0
        %4401 = vmatprep.subr.mxu0 0.0
        %4402 = vmatpush1.msra.mxu0 0.0
        %4403 = vmatprep.subr.mxu0 0.0
        %4404 = vmatpush1.msra.mxu0 0.0
        %4405 = vmatprep.subr.mxu0 0.0
        %4406 = vmatpush1.msra.mxu0 0.0
        %4407 = vmatprep.subr.mxu0 0.0
        %4408 = vmatpush1.msra.mxu0 0.0
        %4409 = vmatprep.subr.mxu0 0.0
        %4410 = vmatpush1.msra.mxu0 0.0
        %4411 = vmatprep.subr.mxu0 0.0
        %4412 = vmatpush1.msra.mxu0 0.0
        %4413 = vmatprep.subr.mxu0 0.0
        %4414 = vmatpush1.msra.mxu0 0.0
        %4415 = vmatprep.subr.mxu0 0.0
        %4416 = vmatpush1.msra.mxu0 0.0
        %4417 = vmatprep.subr.mxu0 0.0
        %4418 = vmatpush1.msra.mxu0 0.0
        %4419 = vmatprep.subr.mxu0 0.0
        %4420 = vmatpush1.msra.mxu0 0.0
        %4421 = vmatprep.subr.mxu0 0.0
        %4422 = vmatpush1.msra.mxu0 0.0
        %4423 = vmatprep.subr.mxu0 0.0
        %4424 = vmatpush1.msra.mxu0 0.0
        %4425 = vmatprep.mubr.f32.mxu0 0.0
        %4426 = vmatmul.mubr.f32.gmra.mrb[0].mxu0 %v4299
        %v4427 = vpop.f32.mrb[0].mxu0
        %v4428 = vadd.f32 0.0, %v4427
        %v4429 = vpop.f32.mrb[0].mxu0
        %4430 = vmatprep.mubr.f32.mxu0 0.0
        %4431 = vmatmul.mubr.f32.gmra.mrb[0].mxu0 %v4300
        %v4432 = vpop.f32.mrb[0].mxu0
        %v4433 = vadd.f32 0.0, %v4432
        %v4434 = vpop.f32.mrb[0].mxu0
        %4435 = vmatprep.mubr.f32.mxu0 0.0
        %4436 = vmatmul.mubr.f32.gmra.mrb[0].mxu0 %v4301
        %v4437 = vpop.f32.mrb[0].mxu0
        %v4438 = vadd.f32 0.0, %v4437
        %v4439 = vpop.f32.mrb[0].mxu0
        %4440 = vmatprep.mubr.f32.mxu0 0.0
        %4441 = vmatmul.mubr.f32.gmra.mrb[0].mxu0 %v4302
        %v4442 = vpop.f32.mrb[0].mxu0
        %v4443 = vadd.f32 0.0, %v4442
        %v4444 = vpop.f32.mrb[0].mxu0
        %4445 = vmatprep.mubr.f32.mxu0 0.0
        %4446 = vmatmul.mubr.f32.gmra.mrb[0].mxu0 %v4303
        %v4447 = vpop.f32.mrb[0].mxu0
        %v4448 = vadd.f32 0.0, %v4447
        %v4449 = vpop.f32.mrb[0].mxu0
        %4450 = vmatprep.mubr.f32.mxu0 0.0
        %4451 = vmatmul.mubr.f32.gmra.mrb[0].mxu0 %v4304
        %v4452 = vpop.f32.mrb[0].mxu0
        %v4453 = vadd.f32 0.0, %v4452
        %v4454 = vpop.f32.mrb[0].mxu0
        %4455 = vmatprep.mubr.f32.mxu0 0.0
        %4456 = vmatmul.mubr.f32.gmra.mrb[0].mxu0 %v4305
        %v4457 = vpop.f32.mrb[0].mxu0
        %v4458 = vadd.f32 0.0, %v4457
        %v4459 = vpop.f32.mrb[0].mxu0
        %4460 = vmatprep.mubr.f32.mxu0 0.0
        %4461 = vmatmul.mubr.f32.gmra.mrb[0].mxu0 %v4306
        %v4462 = vpop.f32.mrb[0].mxu0
        %v4463 = vadd.f32 0.0, %v4462
        %v4464 = vpop.f32.mrb[0].mxu0
        %4465 = vmatprep.mubr.f32.mxu0 0.0
        %4466 = vmatmul.mubr.f32.gmra.mrb[0].mxu0 %v4307
        %v4467 = vpop.f32.mrb[0].mxu0
        %v4468 = vadd.f32 0.0, %v4467
        %v4469 = vpop.f32.mrb[0].mxu0
        %4470 = vmatprep.mubr.f32.mxu0 0.0
        %4471 = vmatmul.mubr.f32.gmra.mrb[0].mxu0 %v4308
        %v4472 = vpop.f32.mrb[0].mxu0
        %v4473 = vadd.f32 0.0, %v4472
        %v4474 = vpop.f32.mrb[0].mxu0
        %4475 = vmatprep.mubr.f32.mxu0 0.0
        %4476 = vmatmul.mubr.f32.gmra.mrb[0].mxu0 %v4309
        %v4477 = vpop.f32.mrb[0].mxu0
        %v4478 = vadd.f32 0.0, %v4477
        %v4479 = vpop.f32.mrb[0].mxu0
        %4480 = vmatprep.mubr.f32.mxu0 0.0
        %4481 = vmatmul.mubr.f32.gmra.mrb[0].mxu0 %v4310
        %v4482 = vpop.f32.mrb[0].mxu0
        %v4483 = vadd.f32 0.0, %v4482
        %v4484 = vpop.f32.mrb[0].mxu0
        %4485 = vmatprep.mubr.f32.mxu0 0.0
        %4486 = vmatmul.mubr.f32.gmra.mrb[0].mxu0 %v4311
        %v4487 = vpop.f32.mrb[0].mxu0
        %v4488 = vadd.f32 0.0, %v4487
        %v4489 = vpop.f32.mrb[0].mxu0
        %4490 = vmatprep.mubr.f32.mxu0 0.0
        %4491 = vmatmul.mubr.f32.gmra.mrb[0].mxu0 %v4312
        %v4492 = vpop.f32.mrb[0].mxu0
        %v4493 = vadd.f32 0.0, %v4492
        %v4494 = vpop.f32.mrb[0].mxu0
        %4495 = vmatprep.mubr.f32.mxu0 0.0
        %4496 = vmatmul.mubr.f32.gmra.mrb[0].mxu0 %v4313
        %v4497 = vpop.f32.mrb[0].mxu0
        %v4498 = vadd.f32 0.0, %v4497
        %v4499 = vpop.f32.mrb[0].mxu0
        %4500 = vmatprep.mubr.f32.mxu0 0.0
        %4501 = vmatmul.mubr.f32.gmra.mrb[0].mxu0 %v4314
        %v4502 = vpop.f32.mrb[0].mxu0
        %v4503 = vadd.f32 0.0, %v4502
        %v4504 = vpop.f32.mrb[0].mxu0
        %4505 = vmatprep.mubr.f32.mxu0 0.0
        %4506 = vmatmul.mubr.f32.gmra.mrb[0].mxu0 %v4315
        %v4507 = vpop.f32.mrb[0].mxu0
        %v4508 = vadd.f32 0.0, %v4507
        %v4509 = vpop.f32.mrb[0].mxu0
        %4510 = vmatprep.mubr.f32.mxu0 0.0
        %4511 = vmatmul.mubr.f32.gmra.mrb[0].mxu0 %v4316
        %v4512 = vpop.f32.mrb[0].mxu0
        %v4513 = vadd.f32 0.0, %v4512
        %v4514 = vpop.f32.mrb[0].mxu0
        %4515 = vmatprep.mubr.f32.mxu0 0.0
        %4516 = vmatmul.mubr.f32.gmra.mrb[0].mxu0 %v4317
        %v4517 = vpop.f32.mrb[0].mxu0
        %v4518 = vadd.f32 0.0, %v4517
        %v4519 = vpop.f32.mrb[0].mxu0
        %4520 = vmatprep.mubr.f32.mxu0 0.0
        %4521 = vmatmul.mubr.f32.gmra.mrb[0].mxu0 %v4318
        %v4522 = vpop.f32.mrb[0].mxu0
        %v4523 = vadd.f32 0.0, %v4522
        %v4524 = vpop.f32.mrb[0].mxu0
        %4525 = vmatprep.mubr.f32.mxu0 0.0
        %4526 = vmatmul.mubr.f32.gmra.mrb[0].mxu0 %v4319
        %v4527 = vpop.f32.mrb[0].mxu0
        %v4528 = vadd.f32 0.0, %v4527
        %v4529 = vpop.f32.mrb[0].mxu0
        %4530 = vmatprep.mubr.f32.mxu0 0.0
        %4531 = vmatmul.mubr.f32.gmra.mrb[0].mxu0 %v4320
        %v4532 = vpop.f32.mrb[0].mxu0
        %v4533 = vadd.f32 0.0, %v4532
        %v4534 = vpop.f32.mrb[0].mxu0
        %4535 = vmatprep.mubr.f32.mxu0 0.0
        %4536 = vmatmul.mubr.f32.gmra.mrb[0].mxu0 %v4321
        %v4537 = vpop.f32.mrb[0].mxu0
        %v4538 = vadd.f32 0.0, %v4537
        %v4539 = vpop.f32.mrb[0].mxu0
        %4540 = vmatprep.mubr.f32.mxu0 0.0
        %4541 = vmatmul.mubr.f32.gmra.mrb[0].mxu0 %v4322
        %v4542 = vpop.f32.mrb[0].mxu0
        %v4543 = vadd.f32 0.0, %v4542
        %v4544 = vpop.f32.mrb[0].mxu0
        %4545 = vmatprep.mubr.f32.mxu0 0.0
        %4546 = vmatmul.mubr.f32.gmra.mrb[0].mxu0 %v4323
        %v4547 = vpop.f32.mrb[0].mxu0
        %v4548 = vadd.f32 0.0, %v4547
        %v4549 = vpop.f32.mrb[0].mxu0
        %4550 = vmatprep.mubr.f32.mxu0 0.0
        %4551 = vmatmul.mubr.f32.gmra.mrb[0].mxu0 %v4324
        %v4552 = vpop.f32.mrb[0].mxu0
        %v4553 = vadd.f32 0.0, %v4552
        %v4554 = vpop.f32.mrb[0].mxu0
        %4555 = vmatprep.mubr.f32.mxu0 0.0
        %4556 = vmatmul.mubr.f32.gmra.mrb[0].mxu0 %v4325
        %v4557 = vpop.f32.mrb[0].mxu0
        %v4558 = vadd.f32 0.0, %v4557
        %v4559 = vpop.f32.mrb[0].mxu0
        %4560 = vmatprep.mubr.f32.mxu0 0.0
        %4561 = vmatmul.mubr.f32.gmra.mrb[0].mxu0 %v4326
        %v4562 = vpop.f32.mrb[0].mxu0
        %v4563 = vadd.f32 0.0, %v4562
        %v4564 = vpop.f32.mrb[0].mxu0
        %4565 = vmatprep.mubr.f32.mxu0 0.0
        %4566 = vmatmul.mubr.f32.gmra.mrb[0].mxu0 %v4327
        %v4567 = vpop.f32.mrb[0].mxu0
        %v4568 = vadd.f32 0.0, %v4567
        %v4569 = vpop.f32.mrb[0].mxu0
        %4570 = vmatprep.mubr.f32.mxu0 0.0
        %4571 = vmatmul.mubr.f32.gmra.mrb[0].mxu0 %v4328
        %v4572 = vpop.f32.mrb[0].mxu0
        %v4573 = vadd.f32 0.0, %v4572
        %v4574 = vpop.f32.mrb[0].mxu0
        %4575 = vmatprep.mubr.f32.mxu0 0.0
        %4576 = vmatmul.mubr.f32.gmra.mrb[0].mxu0 %v4329
        %v4577 = vpop.f32.mrb[0].mxu0
        %v4578 = vadd.f32 0.0, %v4577
        %v4579 = vpop.f32.mrb[0].mxu0
        %4580 = vmatprep.mubr.f32.mxu0 0.0
        %4581 = vmatmul.mubr.f32.gmra.mrb[0].mxu0 %v4330
        %v4582 = vpop.f32.mrb[0].mxu0
        %v4583 = vadd.f32 0.0, %v4582
        %v4584 = vpop.f32.mrb[0].mxu0
        %4585 = vmatprep.mubr.f32.mxu0 0.0
        %4586 = vmatmul.mubr.f32.gmra.mrb[0].mxu0 %v4331
        %v4587 = vpop.f32.mrb[0].mxu0
        %v4588 = vadd.f32 0.0, %v4587
        %v4589 = vpop.f32.mrb[0].mxu0
        %4590 = vmatprep.mubr.f32.mxu0 0.0
        %4591 = vmatmul.mubr.f32.gmra.mrb[0].mxu0 %v4332
        %v4592 = vpop.f32.mrb[0].mxu0
        %v4593 = vadd.f32 0.0, %v4592
        %v4594 = vpop.f32.mrb[0].mxu0
        %4595 = vmatprep.mubr.f32.mxu0 0.0
        %4596 = vmatmul.mubr.f32.gmra.mrb[0].mxu0 %v4333
        %v4597 = vpop.f32.mrb[0].mxu0
        %v4598 = vadd.f32 0.0, %v4597
        %v4599 = vpop.f32.mrb[0].mxu0
        %4600 = vmatprep.mubr.f32.mxu0 0.0
        %4601 = vmatmul.mubr.f32.gmra.mrb[0].mxu0 %v4334
        %v4602 = vpop.f32.mrb[0].mxu0
        %v4603 = vadd.f32 0.0, %v4602
        %v4604 = vpop.f32.mrb[0].mxu0
        %4605 = vmatprep.mubr.f32.mxu0 0.0
        %4606 = vmatmul.mubr.f32.gmra.mrb[0].mxu0 %v4335
        %v4607 = vpop.f32.mrb[0].mxu0
        %v4608 = vadd.f32 0.0, %v4607
        %v4609 = vpop.f32.mrb[0].mxu0
        %4610 = vmatprep.mubr.f32.mxu0 0.0
        %4611 = vmatmul.mubr.f32.gmra.mrb[0].mxu0 %v4336
        %v4612 = vpop.f32.mrb[0].mxu0
        %v4613 = vadd.f32 0.0, %v4612
        %v4614 = vpop.f32.mrb[0].mxu0
        %4615 = vmatprep.mubr.f32.mxu0 0.0
        %4616 = vmatmul.mubr.f32.gmra.mrb[0].mxu0 %v4337
        %v4617 = vpop.f32.mrb[0].mxu0
        %v4618 = vadd.f32 0.0, %v4617
        %v4619 = vpop.f32.mrb[0].mxu0
        %4620 = vmatprep.mubr.f32.mxu0 0.0
        %4621 = vmatmul.mubr.f32.gmra.mrb[0].mxu0 %v4338
        %v4622 = vpop.f32.mrb[0].mxu0
        %v4623 = vadd.f32 0.0, %v4622
        %v4624 = vpop.f32.mrb[0].mxu0
        %4625 = vmatprep.mubr.f32.mxu0 0.0
        %4626 = vmatmul.mubr.f32.gmra.mrb[0].mxu0 %v4339
        %v4627 = vpop.f32.mrb[0].mxu0
        %v4628 = vadd.f32 0.0, %v4627
        %v4629 = vpop.f32.mrb[0].mxu0
        %4630 = vmatprep.mubr.f32.mxu0 0.0
        %4631 = vmatmul.mubr.f32.gmra.mrb[0].mxu0 %v4340
        %v4632 = vpop.f32.mrb[0].mxu0
        %v4633 = vadd.f32 0.0, %v4632
        %v4634 = vpop.f32.mrb[0].mxu0
        %4635 = vmatprep.mubr.f32.mxu0 0.0
        %4636 = vmatmul.mubr.f32.gmra.mrb[0].mxu0 %v4341
        %v4637 = vpop.f32.mrb[0].mxu0
        %v4638 = vadd.f32 0.0, %v4637
        %v4639 = vpop.f32.mrb[0].mxu0
        %4640 = vmatprep.mubr.f32.mxu0 0.0
        %4641 = vmatmul.mubr.f32.gmra.mrb[0].mxu0 %v4342
        %v4642 = vpop.f32.mrb[0].mxu0
        %v4643 = vadd.f32 0.0, %v4642
        %v4644 = vpop.f32.mrb[0].mxu0
        %4645 = vmatprep.mubr.f32.mxu0 0.0
        %4646 = vmatmul.mubr.f32.gmra.mrb[0].mxu0 %v4343
        %v4647 = vpop.f32.mrb[0].mxu0
        %v4648 = vadd.f32 0.0, %v4647
        %v4649 = vpop.f32.mrb[0].mxu0
        %4650 = vdwg.mxu0
        %v4651 = vadd.f32 %v4254, %v4428
        %v4652 = vadd.f32 %v4255, %v4433
        %v4653 = vadd.f32 %v4256, %v4438
        %v4654 = vadd.f32 %v4257, %v4443
        %v4655 = vadd.f32 %v4258, %v4448
        %v4656 = vadd.f32 %v4259, %v4453
        %v4657 = vadd.f32 %v4260, %v4458
        %v4658 = vadd.f32 %v4261, %v4463
        %v4659 = vadd.f32 %v4262, %v4468
        %v4660 = vadd.f32 %v4263, %v4473
        %v4661 = vadd.f32 %v4264, %v4478
        %v4662 = vadd.f32 %v4265, %v4483
        %v4663 = vadd.f32 %v4266, %v4488
        %v4664 = vadd.f32 %v4267, %v4493
        %v4665 = vadd.f32 %v4268, %v4498
        %v4666 = vadd.f32 %v4269, %v4503
        %v4667 = vadd.f32 %v4270, %v4508
        %v4668 = vadd.f32 %v4271, %v4513
        %v4669 = vadd.f32 %v4272, %v4518
        %v4670 = vadd.f32 %v4273, %v4523
        %v4671 = vadd.f32 %v4274, %v4528
        %v4672 = vadd.f32 %v4275, %v4533
        %v4673 = vadd.f32 %v4276, %v4538
        %v4674 = vadd.f32 %v4277, %v4543
        %v4675 = vadd.f32 %v4278, %v4548
        %v4676 = vadd.f32 %v4279, %v4553
        %v4677 = vadd.f32 %v4280, %v4558
        %v4678 = vadd.f32 %v4281, %v4563
        %v4679 = vadd.f32 %v4282, %v4568
        %v4680 = vadd.f32 %v4283, %v4573
        %v4681 = vadd.f32 %v4284, %v4578
        %v4682 = vadd.f32 %v4285, %v4583
        %v4683 = vadd.f32 %v4286, %v4588
        %v4684 = vadd.f32 %v4287, %v4593
        %v4685 = vadd.f32 %v4288, %v4598
        %v4686 = vadd.f32 %v4289, %v4603
        %v4687 = vadd.f32 %v4290, %v4608
        %v4688 = vadd.f32 %v4291, %v4613
        %v4689 = vadd.f32 %v4292, %v4618
        %v4690 = vadd.f32 %v4293, %v4623
        %v4691 = vadd.f32 %v4294, %v4628
        %v4692 = vadd.f32 %v4295, %v4633
        %v4693 = vadd.f32 %v4296, %v4638
        %v4694 = vadd.f32 %v4297, %v4643
        %v4695 = vadd.f32 %v4298, %v4648
        %v4696 = vld [vmem:[%s3] sm:$0x1]
        %v4698 = vlaneseq
        %v4699 = vshrl.u32 %v4698, 7
        %v4700 = vsub.s32 0, %v4699
        %v4701 = vrot.slane %v4696, %v4700
        %v4703 = vadd.f32 %v4651, %v4701
        %v4704 = vadd.f32 %v4652, %v4701
        %v4705 = vadd.f32 %v4653, %v4701
        %v4706 = vadd.f32 %v4654, %v4701
        %v4707 = vadd.f32 %v4655, %v4701
        %v4708 = vadd.f32 %v4656, %v4701
        %v4709 = vadd.f32 %v4657, %v4701
        %v4710 = vadd.f32 %v4658, %v4701
        %v4711 = vadd.f32 %v4659, %v4701
        %v4712 = vadd.f32 %v4660, %v4701
        %v4713 = vadd.f32 %v4661, %v4701
        %v4714 = vadd.f32 %v4662, %v4701
        %v4715 = vadd.f32 %v4663, %v4701
        %v4716 = vadd.f32 %v4664, %v4701
        %v4717 = vadd.f32 %v4665, %v4701
        %v4718 = vadd.f32 %v4666, %v4701
        %v4719 = vadd.f32 %v4667, %v4701
        %v4720 = vadd.f32 %v4668, %v4701
        %v4721 = vadd.f32 %v4669, %v4701
        %v4722 = vadd.f32 %v4670, %v4701
        %v4723 = vadd.f32 %v4671, %v4701
        %v4724 = vadd.f32 %v4672, %v4701
        %v4725 = vadd.f32 %v4673, %v4701
        %v4726 = vadd.f32 %v4674, %v4701
        %v4727 = vadd.f32 %v4675, %v4701
        %v4728 = vadd.f32 %v4676, %v4701
        %v4729 = vadd.f32 %v4677, %v4701
        %v4730 = vadd.f32 %v4678, %v4701
        %v4731 = vadd.f32 %v4679, %v4701
        %v4732 = vadd.f32 %v4680, %v4701
        %v4733 = vadd.f32 %v4681, %v4701
        %v4734 = vadd.f32 %v4682, %v4701
        %v4735 = vadd.f32 %v4683, %v4701
        %v4736 = vadd.f32 %v4684, %v4701
        %v4737 = vadd.f32 %v4685, %v4701
        %v4738 = vadd.f32 %v4686, %v4701
        %v4739 = vadd.f32 %v4687, %v4701
        %v4740 = vadd.f32 %v4688, %v4701
        %v4741 = vadd.f32 %v4689, %v4701
        %v4742 = vadd.f32 %v4690, %v4701
        %v4743 = vadd.f32 %v4691, %v4701
        %v4744 = vadd.f32 %v4692, %v4701
        %v4745 = vadd.f32 %v4693, %v4701
        %v4746 = vadd.f32 %v4694, %v4701
        %v4747 = vadd.f32 %v4695, %v4701
        %4748 = vst [vmem:[%s230] sm:$0xff] %v4703
        %4749 = vst [vmem:[%s230 + $0x8] sm:$0xff] %v4704
        %4750 = vst [vmem:[%s230 + $0x10] sm:$0xff] %v4705
        %4751 = vst [vmem:[%s230 + $0x18] sm:$0xff] %v4706
        %4752 = vst [vmem:[%s230 + $0x20] sm:$0xff] %v4707
        %4753 = vst [vmem:[%s230 + $0x28] sm:$0xff] %v4708
        %4754 = vst [vmem:[%s230 + $0x30] sm:$0xff] %v4709
        %4755 = vst [vmem:[%s230 + $0x38] sm:$0xff] %v4710
        %4756 = vst [vmem:[%s230 + $0x40] sm:$0xff] %v4711
        %4757 = vst [vmem:[%s230 + $0x48] sm:$0xff] %v4712
        %4758 = vst [vmem:[%s230 + $0x50] sm:$0xff] %v4713
        %4759 = vst [vmem:[%s230 + $0x58] sm:$0xff] %v4714
        %4760 = vst [vmem:[%s230 + $0x60] sm:$0xff] %v4715
        %4761 = vst [vmem:[%s230 + $0x68] sm:$0xff] %v4716
        %4762 = vst [vmem:[%s230 + $0x70] sm:$0xff] %v4717
        %4763 = vst [vmem:[%s230 + $0x78] sm:$0xff] %v4718
        %4764 = vst [vmem:[%s230 + $0x80] sm:$0xff] %v4719
        %4765 = vst [vmem:[%s230 + $0x88] sm:$0xff] %v4720
        %4766 = vst [vmem:[%s230 + $0x90] sm:$0xff] %v4721
        %4767 = vst [vmem:[%s230 + $0x98] sm:$0xff] %v4722
        %4768 = vst [vmem:[%s230 + $0xa0] sm:$0xff] %v4723
        %4769 = vst [vmem:[%s230 + $0xa8] sm:$0xff] %v4724
        %4770 = vst [vmem:[%s230 + $0xb0] sm:$0xff] %v4725
        %4771 = vst [vmem:[%s230 + $0xb8] sm:$0xff] %v4726
        %4772 = vst [vmem:[%s230 + $0xc0] sm:$0xff] %v4727
        %4773 = vst [vmem:[%s230 + $0xc8] sm:$0xff] %v4728
        %4774 = vst [vmem:[%s230 + $0xd0] sm:$0xff] %v4729
        %4775 = vst [vmem:[%s230 + $0xd8] sm:$0xff] %v4730
        %4776 = vst [vmem:[%s230 + $0xe0] sm:$0xff] %v4731
        %4777 = vst [vmem:[%s230 + $0xe8] sm:$0xff] %v4732
        %4778 = vst [vmem:[%s230 + $0xf0] sm:$0xff] %v4733
        %4779 = vst [vmem:[%s230 + $0xf8] sm:$0xff] %v4734
        %4780 = vst [vmem:[%s230 + $0x100] sm:$0xff] %v4735
        %4781 = vst [vmem:[%s230 + $0x108] sm:$0xff] %v4736
        %4782 = vst [vmem:[%s230 + $0x110] sm:$0xff] %v4737
        %4783 = vst [vmem:[%s230 + $0x118] sm:$0xff] %v4738
        %4784 = vst [vmem:[%s230 + $0x120] sm:$0xff] %v4739
        %4785 = vst [vmem:[%s230 + $0x128] sm:$0xff] %v4740
        %4786 = vst [vmem:[%s230 + $0x130] sm:$0xff] %v4741
        %4787 = vst [vmem:[%s230 + $0x138] sm:$0xff] %v4742
        %4788 = vst [vmem:[%s230 + $0x140] sm:$0xff] %v4743
        %4789 = vst [vmem:[%s230 + $0x148] sm:$0xff] %v4744
        %4790 = vst [vmem:[%s230 + $0x150] sm:$0xff] %v4745
        %4791 = vst [vmem:[%s230 + $0x158] sm:$0xff] %v4746
        %4792 = vst [vmem:[%s230 + $0x160] sm:$0xff] %v4747
        %s4793 = sand.u32 %s119, 1
        %s4794 = scalar_lea.sflag [#allocation5], %s4793
        %s4795 = sand.u32 %s119, 1
        %s4796 = smul.addr %s4795, 360
        %s4797 = scalar_lea.vmem [#allocation8], %s4796
        // Predicated region
        $region45: #{tpu_custom_call.1} parent=35 // pred_check
          %p4798 = pneg %p129
        $region46: #{tpu_custom_call.1} parent=35 // pred_check_branch
          %4800 = sbr.rel (%p4798) target = $region48
        $region47: #{tpu_custom_call.1} parent=35 // pred_region
          %s4802 = ssub.s32 5760, 5760
          %4803 = vsyncadd %s4794, %s4802
          %s4804 = smul.addr %s22, 45
          %s4805 = smul.addr %s4804, 128
          %s4806 = scalar_lea.hbm %s4, %s4805
          %s4807 = sshll.u32 %s4797, 4
          %s4808 = int_to_ptr.vmem [resolvable:$true] %s4807
          %4813 = dma.vmem_to_hbm [thread:$0]  %s4808, 5760, %s4806, %s4794, 128, 128, 8
        $region48: #{tpu_custom_call.1} parent=35 // pred_fallthru
          _
      $region36: #{tpu_custom_call.1} parent=5 // pred_fallthru
        _
      %p4814 = scmp.le.s32.totalorder 2, %s17
      // Predicated region
      $region49: #{tpu_custom_call.1} parent=5 // pred_check
        %p4815 = pneg %p4814
      $region50: #{tpu_custom_call.1} parent=5 // pred_check_branch
        %4817 = sbr.rel (%p4815) target = $region52
      $region51: #{tpu_custom_call.1} parent=5 // pred_region
        %s4818 = ssub.s32 %s17, 2
        // Predicated region
        $region53: #{tpu_custom_call.1} parent=51 // pred_check
          %p4819 = pneg %p135
        $region54: #{tpu_custom_call.1} parent=51 // pred_check_branch
          %4821 = sbr.rel (%p4819) target = $region56
        $region55: #{tpu_custom_call.1} parent=51 // pred_region
          %s4822 = sand.u32 %s120, 1
          %s4823 = scalar_lea.sflag [#allocation5], %s4822
          %s4824 = sand.u32 %s120, 1
          %s4825 = smul.addr %s4824, 360
          %s4826 = scalar_lea.vmem [#allocation8], %s4825
          %4827 = dma.done %s4823, 5760
        $region56: #{tpu_custom_call.1} parent=51 // pred_fallthru
          _
      $region52: #{tpu_custom_call.1} parent=5 // pred_fallthru
        _
    $region6: #{tpu_custom_call.1} parent=1 // loop_footer
      %s21 = sadd.s32 1, %s17
    $region7: #{tpu_custom_call.1} parent=1 // loop_footer_branch
      %16 = sbr.rel target = $region3
    $region8: #{tpu_custom_call.1} parent=1 // loop_exit
      _
    %4828 = vsyncpa [#allocation4], 1
    %s4829 = scalar_lea.sflag [#allocation4], 1
    %4830 = vsyncpa %s4829, 1
    %4831 = vsyncpa [#allocation7], 1
    %4832 = vsyncpa [#allocation5], 1
    %s4833 = scalar_lea.sflag [#allocation5], 1
    %4834 = vsyncpa %s4833, 1

</llo_original>
